<compile_context>
chip_gen: v7x
topology: tpu7x:2x2x1
jax: 0.10.0
libtpu: 0.0.40
codegen_flags: <defaults>
</compile_context>

<pallas_src>
import jax
import jax.numpy as jnp
from jax import lax
from jax.experimental import pallas as pl
from jax.experimental.pallas import tpu as pltpu


def _triplet_tail_kernel(x_ref, w_ref, b_ref, o_ref):
    # x_ref: (TILE_N, C, HW) stream dtype (f32 or bf16) -- backbone features in
    #                        native NCHW layout, spatial flattened on the lanes.
    # w_ref: (C, E_pad)      stream dtype -- fc weight (pre-scaled by 1/(H*W))
    # b_ref: (1, E_pad)      f32          -- fc bias (zero-padded)
    # o_ref: (TILE_N, E_pad) f32          -- l2-normalized embedding
    #
    # AdaptiveAvgPool2d(1): reduce the spatial (lane) axis with fp32
    # accumulation, without materializing an fp32 copy of the whole tile.
    # The 1/(H*W) scale is folded into w in the wrapper.
    pooled = jnp.sum(x_ref[...], axis=-1, dtype=jnp.float32)           # (TILE_N, C)
    # fc: Linear(C -> E) on the MXU with fp32 accumulation.  (bf16 streaming
    # downcasts the pooled LHS to bf16 before the MXU; the torch reference is
    # all-fp32 -- covered by the looser bf16 test tolerance.)
    y = jnp.dot(pooled.astype(w_ref.dtype), w_ref[...],
                preferred_element_type=jnp.float32) + b_ref[...]       # (TILE_N, E_pad)
    # l2_norm exactly as in the torch module:
    #   normp = sum(y**2, dim=1) + 1e-10 ; out = y / sqrt(normp)
    # (zero-padded E columns contribute nothing to normp)
    normp = jnp.sum(y * y, axis=1, keepdims=True) + 1e-10
    o_ref[...] = (y * lax.rsqrt(normp)).astype(o_ref.dtype)


def _vmem_budget_bytes():
    """Generation-aware VMEM budget (~70% of per-core physical VMEM)."""
    try:
        cap = int(pltpu.get_tpu_info().vmem_capacity_bytes)
    except Exception:
        cap = 64 << 20          # conservative fallback = v7x per-TC VMEM
    return max(int(cap * 0.70), 32 << 20)


def _pick_tile_n(n_cap, hw, c, e_pad, itemsize, budget_bytes):
    """Largest multiple-of-8 batch tile whose footprint fits the budget.

    Accounts for the x double-buffer, single-buffered W/bias, output
    double-buffer and the in-kernel fp32 temporaries (pooled, y).
    """
    fixed = c * e_pad * itemsize + e_pad * 4                  # W + bias (1 buffer each)
    per_row = (2 * hw * c * itemsize                          # x tile, 2 buffers
               + 2 * e_pad * 4                                # out tile, 2 buffers
               + c * 4                                        # pooled fp32 temp
               + 2 * e_pad * 4)                               # y / normalized fp32 temps
    avail = max(budget_bytes - fixed, 8 * per_row)
    tile = (avail // per_row) // 8 * 8
    if tile >= 128:                                           # MXU-friendly M dim
        tile = (tile // 128) * 128
    return int(max(8, min(tile, n_cap)))


def model_triplet_forward(feat_map_nchw, fc_w, fc_b, *, max_tile_n=512):
    """feat_map_nchw: (N, C, H, W) backbone output; fc_w: (C, E); fc_b: (E,).

    x / fc_w are streamed in their incoming dtype (use bf16 to halve HBM
    traffic); accumulation is fp32.  Returns fp32 (N, E) embeddings.
    """
    N, C, H, W = feat_map_nchw.shape
    HW = H * W
    E = fc_w.shape[1]
    in_dtype = feat_map_nchw.dtype
    itemsize = jnp.dtype(in_dtype).itemsize

    # Native NCHW layout consumed directly; merging H,W is a free reshape
    # (no transpose / extra HBM pass over the feature map).
    x = feat_map_nchw.reshape(N, C, HW)

    # Fold the 1/(H*W) pooling scale into the fc weight once, in fp32.
    w = (fc_w.astype(jnp.float32) * (1.0 / HW)).astype(in_dtype)       # (C, E)
    b = fc_b.astype(jnp.float32).reshape(1, E)

    # Pad the embedding dim to a lane-dense multiple of 128 (small tensors).
    E_pad = ((E + 127) // 128) * 128
    if E_pad != E:
        w = jnp.pad(w, ((0, 0), (0, E_pad - E)))
        b = jnp.pad(b, ((0, 0), (0, E_pad - E)))

    # Batch tile from the generation-aware VMEM budget.  No batch padding:
    # Pallas handles the partial last block; garbage rows are independent and
    # sliced off below.
    budget = _vmem_budget_bytes()
    n_cap = ((N + 7) // 8) * 8
    tile_n = min(_pick_tile_n(n_cap, HW, C, E_pad, itemsize, budget),
                 int(max_tile_n))
    tile_n = max(8, (tile_n // 8) * 8)
    grid = (pl.cdiv(N, tile_n),)

    # Honest scoped-VMEM estimate for the chosen tile (mirrors _pick_tile_n).
    est_vmem = (2 * tile_n * HW * C * itemsize      # x double-buffer
                + C * E_pad * itemsize              # W (single buffer)
                + E_pad * 4                         # bias (single buffer)
                + 2 * tile_n * E_pad * 4            # output double-buffer
                + tile_n * C * 4                    # pooled fp32 temp
                + 2 * tile_n * E_pad * 4)           # y fp32 temporaries
    vmem_limit = int(min(max(int(est_vmem * 1.5), 32 << 20), budget))

    def _in_specs(single_buffer_weights):
        x_spec = pl.BlockSpec((tile_n, C, HW), lambda i: (i, 0, 0))
        if single_buffer_weights:
            w_spec = pl.BlockSpec((C, E_pad), lambda i: (0, 0),
                                  pipeline_mode=pl.Buffered(1))
            b_spec = pl.BlockSpec((1, E_pad), lambda i: (0, 0),
                                  pipeline_mode=pl.Buffered(1))
        else:
            w_spec = pl.BlockSpec((C, E_pad), lambda i: (0, 0))
            b_spec = pl.BlockSpec((1, E_pad), lambda i: (0, 0))
        return [x_spec, w_spec, b_spec]

    def _run(single_buffer_weights):
        return pl.pallas_call(
            _triplet_tail_kernel,
            out_shape=jax.ShapeDtypeStruct((N, E_pad), jnp.float32),
            grid_spec=pltpu.PrefetchScalarGridSpec(
                num_scalar_prefetch=0,
                grid=grid,
                in_specs=_in_specs(single_buffer_weights),
                out_specs=pl.BlockSpec((tile_n, E_pad), lambda i: (i, 0)),
            ),
            compiler_params=pltpu.CompilerParams(
                dimension_semantics=("parallel",),   # shard batch tiles across TCs
                vmem_limit_bytes=vmem_limit,
            ),
        )(x, w, b)

    try:
        out = _run(True)        # single-buffer the resident weight / bias
    except Exception:
        out = _run(False)       # fall back if Buffered(1) is unsupported here

    return out[:N, :E]


def reference_forward(feat_map_nchw, fc_w, fc_b):
    N, C, H, W = feat_map_nchw.shape
    x = feat_map_nchw.astype(jnp.float32).reshape(N, C, H * W)
    feats = jnp.mean(x, axis=-1)
    y = feats @ fc_w.astype(jnp.float32) + fc_b.astype(jnp.float32)
    normp = jnp.sum(y * y, axis=1, keepdims=True) + 1e-10
    return y / jnp.sqrt(normp)


if __name__ == "__main__":
    # Small deterministic shapes: batch N=2, backbone channels C=256
    # (stand-in for resnet50's 2048), spatial 8x8, embedding_dimension E=256.
    N, C, H, W, E = 2, 256, 8, 8, 256
    key = jax.random.PRNGKey(0)
    k_x, k_w, k_b = jax.random.split(key, 3)

    feat_map = jax.random.normal(k_x, (N, C, H, W), dtype=jnp.float32)
    fc_w = jax.random.normal(k_w, (C, E), dtype=jnp.float32) * 0.02
    fc_b = jax.random.normal(k_b, (E,), dtype=jnp.float32) * 0.01

    # fp32 path: tight check vs reference.
    out = jax.block_until_ready(model_triplet_forward(feat_map, fc_w, fc_b))
    ref = reference_forward(feat_map, fc_w, fc_b)
    assert out.shape == (N, E)
    assert jnp.allclose(out, ref, atol=1e-5, rtol=1e-5), "mismatch vs reference"
    assert jnp.allclose(jnp.sum(out * out, axis=1), 1.0, atol=1e-4)

    # Multi-tile grid with a partial last block (N not a multiple of the tile,
    # no batch padding materialized in HBM).
    N2 = 20
    feat_map2 = jax.random.normal(k_x, (N2, C, H, W), dtype=jnp.float32)
    out2 = jax.block_until_ready(
        model_triplet_forward(feat_map2, fc_w, fc_b, max_tile_n=8))
    ref2 = reference_forward(feat_map2, fc_w, fc_b)
    assert out2.shape == (N2, E)
    assert jnp.allclose(out2, ref2, atol=1e-5, rtol=1e-5), "tiled mismatch"

    # bf16 streaming path (production default: halves x HBM traffic; fp32
    # accumulation stays in-kernel).
    out_bf16 = jax.block_until_ready(
        model_triplet_forward(feat_map.astype(jnp.bfloat16),
                              fc_w.astype(jnp.bfloat16), fc_b))
    assert jnp.allclose(out_bf16, ref, atol=5e-2, rtol=5e-2), "bf16 mismatch"

    print("KERNEL_OK")
</pallas_src>

<mosaic_0001>
module attributes {stable_mosaic.version = 11 : i64} {
  func.func @_triplet_tail_kernel(%arg0: i32, %arg1: memref<8x256x64xf32, #tpu.memory_space<vmem>>, %arg2: memref<256x256xf32, #tpu.memory_space<vmem>>, %arg3: memref<1x256xf32, #tpu.memory_space<vmem>>, %arg4: memref<8x256xf32, #tpu.memory_space<vmem>>) attributes {dimension_semantics = [#tpu.dimension_semantics<parallel>], iteration_bounds = array<i64: 1>, scalar_prefetch = 0 : i64, scratch_operands = 0 : i64, tpu.core_type = #tpu.core_type<tc>, window_params = [{transform_indices = @transform_0, window_bounds = array<i64: 8, 256, 64>}, {pipeline_mode = #tpu.pipeline_mode<synchronous>, transform_indices = @transform_1, window_bounds = array<i64: 256, 256>}, {pipeline_mode = #tpu.pipeline_mode<synchronous>, transform_indices = @transform_2, window_bounds = array<i64: 1, 256>}, {transform_indices = @transform_3, window_bounds = array<i64: 8, 256>}]} {
    %c0 = arith.constant 0 : index
    %c0_0 = arith.constant 0 : index
    %c0_1 = arith.constant 0 : index
    %0 = vector.load %arg1[%c0, %c0_0, %c0_1] : memref<8x256x64xf32, #tpu.memory_space<vmem>>, vector<8x256x64xf32>
    %cst = arith.constant dense<0.000000e+00> : vector<8x256xf32>
    %1 = vector.multi_reduction <add>, %0, %cst [2] : vector<8x256x64xf32> to vector<8x256xf32>
    %c0_2 = arith.constant 0 : index
    %c0_3 = arith.constant 0 : index
    %2 = vector.load %arg2[%c0_2, %c0_3] : memref<256x256xf32, #tpu.memory_space<vmem>>, vector<256x256xf32>
    %cst_4 = arith.constant dense<0.000000e+00> : vector<8x256xf32>
    %3 = tpu.matmul %1, %2, %cst_4 {dimension_numbers = #tpu.dot_dimension_numbers<[1], [0], [0], [1], [0, 0, 1, 1], [], []>} : vector<8x256xf32>, vector<256x256xf32>, vector<8x256xf32> -> vector<8x256xf32>
    %c0_5 = arith.constant 0 : index
    %c0_6 = arith.constant 0 : index
    %4 = vector.load %arg3[%c0_5, %c0_6] : memref<1x256xf32, #tpu.memory_space<vmem>>, vector<1x256xf32>
    %5 = vector.broadcast %4 : vector<1x256xf32> to vector<8x256xf32>
    %6 = arith.addf %3, %5 : vector<8x256xf32>
    %7 = arith.mulf %6, %6 : vector<8x256xf32>
    %cst_7 = arith.constant dense<0.000000e+00> : vector<8xf32>
    %8 = vector.multi_reduction <add>, %7, %cst_7 [1] : vector<8x256xf32> to vector<8xf32>
    %9 = vector.shape_cast %8 : vector<8xf32> to vector<8x1xf32>
    %cst_8 = arith.constant 1.000000e-10 : f32
    %10 = vector.broadcast %cst_8 : f32 to vector<8x1xf32>
    %11 = arith.addf %9, %10 : vector<8x1xf32>
    %12 = math.rsqrt %11 : vector<8x1xf32>
    %13 = vector.broadcast %12 : vector<8x1xf32> to vector<8x256xf32>
    %14 = arith.mulf %6, %13 : vector<8x256xf32>
    %c0_9 = arith.constant 0 : index
    %c0_10 = arith.constant 0 : index
    %15 = vector.load %arg4[%c0_9, %c0_10] : memref<8x256xf32, #tpu.memory_space<vmem>>, vector<8x256xf32>
    tpu.vector_store %arg4[%c0_9, %c0_10], %14 {strides = array<i32>} : memref<8x256xf32, #tpu.memory_space<vmem>>, vector<8x256xf32>,
    return
  }
  func.func @transform_0(%arg0: i32) -> (i32, i32, i32) {
    %c0_i32 = arith.constant 0 : i32
    %c0_i32_0 = arith.constant 0 : i32
    %c0_i32_1 = arith.constant 0 : i32
    return %arg0, %c0_i32, %c0_i32_0 : i32, i32, i32
  }
  func.func @transform_1(%arg0: i32) -> (i32, i32) {
    %c0_i32 = arith.constant 0 : i32
    %c0_i32_0 = arith.constant 0 : i32
    %c0_i32_1 = arith.constant 0 : i32
    return %c0_i32, %c0_i32_0 : i32, i32
  }
  func.func @transform_2(%arg0: i32) -> (i32, i32) {
    %c0_i32 = arith.constant 0 : i32
    %c0_i32_0 = arith.constant 0 : i32
    %c0_i32_1 = arith.constant 0 : i32
    return %c0_i32, %c0_i32_0 : i32, i32
  }
  func.func @transform_3(%arg0: i32) -> (i32, i32) {
    %c0_i32 = arith.constant 0 : i32
    %c0_i32_0 = arith.constant 0 : i32
    return %arg0, %c0_i32 : i32, i32
  }
}

module attributes {stable_mosaic.version = 11 : i64} {
  func.func @_triplet_tail_kernel(%arg0: i32, %arg1: memref<8x256x64xf32, #tpu.memory_space<vmem>>, %arg2: memref<256x256xf32, #tpu.memory_space<vmem>>, %arg3: memref<1x256xf32, #tpu.memory_space<vmem>>, %arg4: memref<8x256xf32, #tpu.memory_space<vmem>>) attributes {dimension_semantics = [#tpu.dimension_semantics<parallel>], iteration_bounds = array<i64: 1>, scalar_prefetch = 0 : i64, scratch_operands = 0 : i64, tpu.core_type = #tpu.core_type<tc>, window_params = [{transform_indices = @transform_0, window_bounds = array<i64: 8, 256, 64>}, {pipeline_mode = #tpu.pipeline_mode<synchronous>, transform_indices = @transform_1, window_bounds = array<i64: 256, 256>}, {pipeline_mode = #tpu.pipeline_mode<synchronous>, transform_indices = @transform_2, window_bounds = array<i64: 1, 256>}, {transform_indices = @transform_3, window_bounds = array<i64: 8, 256>}]} {
    %c0 = arith.constant 0 : index
    %c0_0 = arith.constant 0 : index
    %c0_1 = arith.constant 0 : index
    %0 = vector.load %arg1[%c0, %c0_0, %c0_1] : memref<8x256x64xf32, #tpu.memory_space<vmem>>, vector<8x256x64xf32>
    %cst = arith.constant dense<0.000000e+00> : vector<8x256xf32>
    %1 = vector.multi_reduction <add>, %0, %cst [2] : vector<8x256x64xf32> to vector<8x256xf32>
    %c0_2 = arith.constant 0 : index
    %c0_3 = arith.constant 0 : index
    %2 = vector.load %arg2[%c0_2, %c0_3] : memref<256x256xf32, #tpu.memory_space<vmem>>, vector<256x256xf32>
    %cst_4 = arith.constant dense<0.000000e+00> : vector<8x256xf32>
    %3 = tpu.matmul %1, %2, %cst_4 {dimension_numbers = #tpu.dot_dimension_numbers<[1], [0], [0], [1], [0, 0, 1, 1], [], []>} : vector<8x256xf32>, vector<256x256xf32>, vector<8x256xf32> -> vector<8x256xf32>
    %c0_5 = arith.constant 0 : index
    %c0_6 = arith.constant 0 : index
    %4 = vector.load %arg3[%c0_5, %c0_6] : memref<1x256xf32, #tpu.memory_space<vmem>>, vector<1x256xf32>
    %5 = vector.broadcast %4 : vector<1x256xf32> to vector<8x256xf32>
    %6 = arith.addf %3, %5 : vector<8x256xf32>
    %7 = arith.mulf %6, %6 : vector<8x256xf32>
    %cst_7 = arith.constant dense<0.000000e+00> : vector<8xf32>
    %8 = vector.multi_reduction <add>, %7, %cst_7 [1] : vector<8x256xf32> to vector<8xf32>
    %9 = vector.shape_cast %8 : vector<8xf32> to vector<8x1xf32>
    %cst_8 = arith.constant 1.000000e-10 : f32
    %10 = vector.broadcast %cst_8 : f32 to vector<8x1xf32>
    %11 = arith.addf %9, %10 : vector<8x1xf32>
    %12 = math.rsqrt %11 : vector<8x1xf32>
    %13 = vector.broadcast %12 : vector<8x1xf32> to vector<8x256xf32>
    %14 = arith.mulf %6, %13 : vector<8x256xf32>
    %c0_9 = arith.constant 0 : index
    %c0_10 = arith.constant 0 : index
    %15 = vector.load %arg4[%c0_9, %c0_10] : memref<8x256xf32, #tpu.memory_space<vmem>>, vector<8x256xf32>
    tpu.vector_store %arg4[%c0_9, %c0_10], %14 {strides = array<i32>} : memref<8x256xf32, #tpu.memory_space<vmem>>, vector<8x256xf32>,
    return
  }
  func.func @transform_0(%arg0: i32) -> (i32, i32, i32) {
    %c0_i32 = arith.constant 0 : i32
    %c0_i32_0 = arith.constant 0 : i32
    %c0_i32_1 = arith.constant 0 : i32
    return %arg0, %c0_i32, %c0_i32_0 : i32, i32, i32
  }
  func.func @transform_1(%arg0: i32) -> (i32, i32) {
    %c0_i32 = arith.constant 0 : i32
    %c0_i32_0 = arith.constant 0 : i32
    %c0_i32_1 = arith.constant 0 : i32
    return %c0_i32, %c0_i32_0 : i32, i32
  }
  func.func @transform_2(%arg0: i32) -> (i32, i32) {
    %c0_i32 = arith.constant 0 : i32
    %c0_i32_0 = arith.constant 0 : i32
    %c0_i32_1 = arith.constant 0 : i32
    return %c0_i32, %c0_i32_0 : i32, i32
  }
  func.func @transform_3(%arg0: i32) -> (i32, i32) {
    %c0_i32 = arith.constant 0 : i32
    %c0_i32_0 = arith.constant 0 : i32
    return %arg0, %c0_i32 : i32, i32
  }
}

</mosaic_0001>

<llo_original>
// kernel: tpu_custom_call.1
$region0: #{tpu_custom_call.1}
  #allocation0 [shape = 'u32[]', space=smem, size = 0x4, offset = 0x4, fixed_abs, tag = 'smem constant byte address 0x4 - core index']
  #allocation1 [shape = 'u32[144,128]{1,0:T(1,128)}', space=vmem, size = 0x12000, scoped, tag = 'internal scratch']
  %s0 = inlined_call_operand.vmem [shape: f32[2,256,64], index: 0, kind: input, shape index: {}]
  %s1 = inlined_call_operand.vmem [shape: f32[256,256], index: 1, kind: input, shape index: {}]
  %s2 = inlined_call_operand.vmem [shape: f32[1,256], index: 2, kind: input, shape index: {}]
  %s3 = inlined_call_operand.hbm [shape: f32[2,256], index: 3, kind: output, shape index: {}]
  %s4 = sld [smem:[#allocation0]]
  $region22: #{tpu_custom_call.1} parent=0
    _
  %s6 = ssub.s32 1, %s4
  %s7 = scalar_select 0, %s6, %s4
  $region1: #{tpu_custom_call.1} parent=0
    #allocation2 [shape = 'u8[8192]{0}', space=vmem, size = 0x2000, scoped, tag = 'output window, operand 0, single buffered']
    #allocation3 [shape = 's32[1]{0}', space=sflag, size = 0x4, scoped, tag = 'scoped memory for tpu_custom_call.1']
    %8 = vsyncpa [#allocation3], 0
    // Predicated region
    $region2: #{tpu_custom_call.1} parent=1 // pred_check
      _
    $region3: #{tpu_custom_call.1} parent=1 // pred_check_branch
      %10 = sbr.rel (0) target = $region5
    $region4: #{tpu_custom_call.1} parent=1 // pred_region
      _
    $region5: #{tpu_custom_call.1} parent=1 // pred_fallthru
      _
    // Predicated region
    $region6: #{tpu_custom_call.1} parent=1 // pred_check
      _
    $region7: #{tpu_custom_call.1} parent=1 // pred_check_branch
      %12 = sbr.rel (0) target = $region9
    $region8: #{tpu_custom_call.1} parent=1 // pred_region
      _
    $region9: #{tpu_custom_call.1} parent=1 // pred_fallthru
      _
    // Predicated region
    $region10: #{tpu_custom_call.1} parent=1 // pred_check
      _
    $region11: #{tpu_custom_call.1} parent=1 // pred_check_branch
      %14 = sbr.rel (0) target = $region13
    $region12: #{tpu_custom_call.1} parent=1 // pred_region
      _
    $region13: #{tpu_custom_call.1} parent=1 // pred_fallthru
      _
    %v15 = vld [vmem:[%s0] sm:$0xff]
    %v16 = vld [vmem:[%s0 + $0x8] sm:$0xff]
    %v17 = vld [vmem:[%s0 + $0x10] sm:$0xff]
    %v18 = vld [vmem:[%s0 + $0x18] sm:$0xff]
    %v19 = vld [vmem:[%s0 + $0x20] sm:$0xff]
    %v20 = vld [vmem:[%s0 + $0x28] sm:$0xff]
    %v21 = vld [vmem:[%s0 + $0x30] sm:$0xff]
    %v22 = vld [vmem:[%s0 + $0x38] sm:$0xff]
    %v23 = vld [vmem:[%s0 + $0x40] sm:$0xff]
    %v24 = vld [vmem:[%s0 + $0x48] sm:$0xff]
    %v25 = vld [vmem:[%s0 + $0x50] sm:$0xff]
    %v26 = vld [vmem:[%s0 + $0x58] sm:$0xff]
    %v27 = vld [vmem:[%s0 + $0x60] sm:$0xff]
    %v28 = vld [vmem:[%s0 + $0x68] sm:$0xff]
    %v29 = vld [vmem:[%s0 + $0x70] sm:$0xff]
    %v30 = vld [vmem:[%s0 + $0x78] sm:$0xff]
    %v31 = vld [vmem:[%s0 + $0x80] sm:$0xff]
    %v32 = vld [vmem:[%s0 + $0x88] sm:$0xff]
    %v33 = vld [vmem:[%s0 + $0x90] sm:$0xff]
    %v34 = vld [vmem:[%s0 + $0x98] sm:$0xff]
    %v35 = vld [vmem:[%s0 + $0xa0] sm:$0xff]
    %v36 = vld [vmem:[%s0 + $0xa8] sm:$0xff]
    %v37 = vld [vmem:[%s0 + $0xb0] sm:$0xff]
    %v38 = vld [vmem:[%s0 + $0xb8] sm:$0xff]
    %v39 = vld [vmem:[%s0 + $0xc0] sm:$0xff]
    %v40 = vld [vmem:[%s0 + $0xc8] sm:$0xff]
    %v41 = vld [vmem:[%s0 + $0xd0] sm:$0xff]
    %v42 = vld [vmem:[%s0 + $0xd8] sm:$0xff]
    %v43 = vld [vmem:[%s0 + $0xe0] sm:$0xff]
    %v44 = vld [vmem:[%s0 + $0xe8] sm:$0xff]
    %v45 = vld [vmem:[%s0 + $0xf0] sm:$0xff]
    %v46 = vld [vmem:[%s0 + $0xf8] sm:$0xff]
    %v47 = vld [vmem:[%s0 + $0x100] sm:$0xff]
    %v48 = vld [vmem:[%s0 + $0x108] sm:$0xff]
    %v49 = vld [vmem:[%s0 + $0x110] sm:$0xff]
    %v50 = vld [vmem:[%s0 + $0x118] sm:$0xff]
    %v51 = vld [vmem:[%s0 + $0x120] sm:$0xff]
    %v52 = vld [vmem:[%s0 + $0x128] sm:$0xff]
    %v53 = vld [vmem:[%s0 + $0x130] sm:$0xff]
    %v54 = vld [vmem:[%s0 + $0x138] sm:$0xff]
    %v55 = vld [vmem:[%s0 + $0x140] sm:$0xff]
    %v56 = vld [vmem:[%s0 + $0x148] sm:$0xff]
    %v57 = vld [vmem:[%s0 + $0x150] sm:$0xff]
    %v58 = vld [vmem:[%s0 + $0x158] sm:$0xff]
    %v59 = vld [vmem:[%s0 + $0x160] sm:$0xff]
    %v60 = vld [vmem:[%s0 + $0x168] sm:$0xff]
    %v61 = vld [vmem:[%s0 + $0x170] sm:$0xff]
    %v62 = vld [vmem:[%s0 + $0x178] sm:$0xff]
    %v63 = vld [vmem:[%s0 + $0x180] sm:$0xff]
    %v64 = vld [vmem:[%s0 + $0x188] sm:$0xff]
    %v65 = vld [vmem:[%s0 + $0x190] sm:$0xff]
    %v66 = vld [vmem:[%s0 + $0x198] sm:$0xff]
    %v67 = vld [vmem:[%s0 + $0x1a0] sm:$0xff]
    %v68 = vld [vmem:[%s0 + $0x1a8] sm:$0xff]
    %v69 = vld [vmem:[%s0 + $0x1b0] sm:$0xff]
    %v70 = vld [vmem:[%s0 + $0x1b8] sm:$0xff]
    %v71 = vld [vmem:[%s0 + $0x1c0] sm:$0xff]
    %v72 = vld [vmem:[%s0 + $0x1c8] sm:$0xff]
    %v73 = vld [vmem:[%s0 + $0x1d0] sm:$0xff]
    %v74 = vld [vmem:[%s0 + $0x1d8] sm:$0xff]
    %v75 = vld [vmem:[%s0 + $0x1e0] sm:$0xff]
    %v76 = vld [vmem:[%s0 + $0x1e8] sm:$0xff]
    %v77 = vld [vmem:[%s0 + $0x1f0] sm:$0xff]
    %v78 = vld [vmem:[%s0 + $0x1f8] sm:$0xff]
    %v79 = vld [vmem:[%s0 + $0x200] sm:$0xff]
    %v80 = vld [vmem:[%s0 + $0x208] sm:$0xff]
    %v81 = vld [vmem:[%s0 + $0x210] sm:$0xff]
    %v82 = vld [vmem:[%s0 + $0x218] sm:$0xff]
    %v83 = vld [vmem:[%s0 + $0x220] sm:$0xff]
    %v84 = vld [vmem:[%s0 + $0x228] sm:$0xff]
    %v85 = vld [vmem:[%s0 + $0x230] sm:$0xff]
    %v86 = vld [vmem:[%s0 + $0x238] sm:$0xff]
    %v87 = vld [vmem:[%s0 + $0x240] sm:$0xff]
    %v88 = vld [vmem:[%s0 + $0x248] sm:$0xff]
    %v89 = vld [vmem:[%s0 + $0x250] sm:$0xff]
    %v90 = vld [vmem:[%s0 + $0x258] sm:$0xff]
    %v91 = vld [vmem:[%s0 + $0x260] sm:$0xff]
    %v92 = vld [vmem:[%s0 + $0x268] sm:$0xff]
    %v93 = vld [vmem:[%s0 + $0x270] sm:$0xff]
    %v94 = vld [vmem:[%s0 + $0x278] sm:$0xff]
    %v95 = vld [vmem:[%s0 + $0x280] sm:$0xff]
    %v96 = vld [vmem:[%s0 + $0x288] sm:$0xff]
    %v97 = vld [vmem:[%s0 + $0x290] sm:$0xff]
    %v98 = vld [vmem:[%s0 + $0x298] sm:$0xff]
    %v99 = vld [vmem:[%s0 + $0x2a0] sm:$0xff]
    %v100 = vld [vmem:[%s0 + $0x2a8] sm:$0xff]
    %v101 = vld [vmem:[%s0 + $0x2b0] sm:$0xff]
    %v102 = vld [vmem:[%s0 + $0x2b8] sm:$0xff]
    %v103 = vld [vmem:[%s0 + $0x2c0] sm:$0xff]
    %v104 = vld [vmem:[%s0 + $0x2c8] sm:$0xff]
    %v105 = vld [vmem:[%s0 + $0x2d0] sm:$0xff]
    %v106 = vld [vmem:[%s0 + $0x2d8] sm:$0xff]
    %v107 = vld [vmem:[%s0 + $0x2e0] sm:$0xff]
    %v108 = vld [vmem:[%s0 + $0x2e8] sm:$0xff]
    %v109 = vld [vmem:[%s0 + $0x2f0] sm:$0xff]
    %v110 = vld [vmem:[%s0 + $0x2f8] sm:$0xff]
    %v111 = vld [vmem:[%s0 + $0x300] sm:$0xff]
    %v112 = vld [vmem:[%s0 + $0x308] sm:$0xff]
    %v113 = vld [vmem:[%s0 + $0x310] sm:$0xff]
    %v114 = vld [vmem:[%s0 + $0x318] sm:$0xff]
    %v115 = vld [vmem:[%s0 + $0x320] sm:$0xff]
    %v116 = vld [vmem:[%s0 + $0x328] sm:$0xff]
    %v117 = vld [vmem:[%s0 + $0x330] sm:$0xff]
    %v118 = vld [vmem:[%s0 + $0x338] sm:$0xff]
    %v119 = vld [vmem:[%s0 + $0x340] sm:$0xff]
    %v120 = vld [vmem:[%s0 + $0x348] sm:$0xff]
    %v121 = vld [vmem:[%s0 + $0x350] sm:$0xff]
    %v122 = vld [vmem:[%s0 + $0x358] sm:$0xff]
    %v123 = vld [vmem:[%s0 + $0x360] sm:$0xff]
    %v124 = vld [vmem:[%s0 + $0x368] sm:$0xff]
    %v125 = vld [vmem:[%s0 + $0x370] sm:$0xff]
    %v126 = vld [vmem:[%s0 + $0x378] sm:$0xff]
    %v127 = vld [vmem:[%s0 + $0x380] sm:$0xff]
    %v128 = vld [vmem:[%s0 + $0x388] sm:$0xff]
    %v129 = vld [vmem:[%s0 + $0x390] sm:$0xff]
    %v130 = vld [vmem:[%s0 + $0x398] sm:$0xff]
    %v131 = vld [vmem:[%s0 + $0x3a0] sm:$0xff]
    %v132 = vld [vmem:[%s0 + $0x3a8] sm:$0xff]
    %v133 = vld [vmem:[%s0 + $0x3b0] sm:$0xff]
    %v134 = vld [vmem:[%s0 + $0x3b8] sm:$0xff]
    %v135 = vld [vmem:[%s0 + $0x3c0] sm:$0xff]
    %v136 = vld [vmem:[%s0 + $0x3c8] sm:$0xff]
    %v137 = vld [vmem:[%s0 + $0x3d0] sm:$0xff]
    %v138 = vld [vmem:[%s0 + $0x3d8] sm:$0xff]
    %v139 = vld [vmem:[%s0 + $0x3e0] sm:$0xff]
    %v140 = vld [vmem:[%s0 + $0x3e8] sm:$0xff]
    %v141 = vld [vmem:[%s0 + $0x3f0] sm:$0xff]
    %v142 = vld [vmem:[%s0 + $0x3f8] sm:$0xff]
    %v143 = vld [vmem:[%s0 + $0x400] sm:$0xff]
    %v144 = vld [vmem:[%s0 + $0x408] sm:$0xff]
    %v145 = vld [vmem:[%s0 + $0x410] sm:$0xff]
    %v146 = vld [vmem:[%s0 + $0x418] sm:$0xff]
    %v147 = vld [vmem:[%s0 + $0x420] sm:$0xff]
    %v148 = vld [vmem:[%s0 + $0x428] sm:$0xff]
    %v149 = vld [vmem:[%s0 + $0x430] sm:$0xff]
    %v150 = vld [vmem:[%s0 + $0x438] sm:$0xff]
    %v151 = vld [vmem:[%s0 + $0x440] sm:$0xff]
    %v152 = vld [vmem:[%s0 + $0x448] sm:$0xff]
    %v153 = vld [vmem:[%s0 + $0x450] sm:$0xff]
    %v154 = vld [vmem:[%s0 + $0x458] sm:$0xff]
    %v155 = vld [vmem:[%s0 + $0x460] sm:$0xff]
    %v156 = vld [vmem:[%s0 + $0x468] sm:$0xff]
    %v157 = vld [vmem:[%s0 + $0x470] sm:$0xff]
    %v158 = vld [vmem:[%s0 + $0x478] sm:$0xff]
    %v159 = vld [vmem:[%s0 + $0x480] sm:$0xff]
    %v160 = vld [vmem:[%s0 + $0x488] sm:$0xff]
    %v161 = vld [vmem:[%s0 + $0x490] sm:$0xff]
    %v162 = vld [vmem:[%s0 + $0x498] sm:$0xff]
    %v163 = vld [vmem:[%s0 + $0x4a0] sm:$0xff]
    %v164 = vld [vmem:[%s0 + $0x4a8] sm:$0xff]
    %v165 = vld [vmem:[%s0 + $0x4b0] sm:$0xff]
    %v166 = vld [vmem:[%s0 + $0x4b8] sm:$0xff]
    %v167 = vld [vmem:[%s0 + $0x4c0] sm:$0xff]
    %v168 = vld [vmem:[%s0 + $0x4c8] sm:$0xff]
    %v169 = vld [vmem:[%s0 + $0x4d0] sm:$0xff]
    %v170 = vld [vmem:[%s0 + $0x4d8] sm:$0xff]
    %v171 = vld [vmem:[%s0 + $0x4e0] sm:$0xff]
    %v172 = vld [vmem:[%s0 + $0x4e8] sm:$0xff]
    %v173 = vld [vmem:[%s0 + $0x4f0] sm:$0xff]
    %v174 = vld [vmem:[%s0 + $0x4f8] sm:$0xff]
    %v175 = vld [vmem:[%s0 + $0x500] sm:$0xff]
    %v176 = vld [vmem:[%s0 + $0x508] sm:$0xff]
    %v177 = vld [vmem:[%s0 + $0x510] sm:$0xff]
    %v178 = vld [vmem:[%s0 + $0x518] sm:$0xff]
    %v179 = vld [vmem:[%s0 + $0x520] sm:$0xff]
    %v180 = vld [vmem:[%s0 + $0x528] sm:$0xff]
    %v181 = vld [vmem:[%s0 + $0x530] sm:$0xff]
    %v182 = vld [vmem:[%s0 + $0x538] sm:$0xff]
    %v183 = vld [vmem:[%s0 + $0x540] sm:$0xff]
    %v184 = vld [vmem:[%s0 + $0x548] sm:$0xff]
    %v185 = vld [vmem:[%s0 + $0x550] sm:$0xff]
    %v186 = vld [vmem:[%s0 + $0x558] sm:$0xff]
    %v187 = vld [vmem:[%s0 + $0x560] sm:$0xff]
    %v188 = vld [vmem:[%s0 + $0x568] sm:$0xff]
    %v189 = vld [vmem:[%s0 + $0x570] sm:$0xff]
    %v190 = vld [vmem:[%s0 + $0x578] sm:$0xff]
    %v191 = vld [vmem:[%s0 + $0x580] sm:$0xff]
    %v192 = vld [vmem:[%s0 + $0x588] sm:$0xff]
    %v193 = vld [vmem:[%s0 + $0x590] sm:$0xff]
    %v194 = vld [vmem:[%s0 + $0x598] sm:$0xff]
    %v195 = vld [vmem:[%s0 + $0x5a0] sm:$0xff]
    %v196 = vld [vmem:[%s0 + $0x5a8] sm:$0xff]
    %v197 = vld [vmem:[%s0 + $0x5b0] sm:$0xff]
    %v198 = vld [vmem:[%s0 + $0x5b8] sm:$0xff]
    %v199 = vld [vmem:[%s0 + $0x5c0] sm:$0xff]
    %v200 = vld [vmem:[%s0 + $0x5c8] sm:$0xff]
    %v201 = vld [vmem:[%s0 + $0x5d0] sm:$0xff]
    %v202 = vld [vmem:[%s0 + $0x5d8] sm:$0xff]
    %v203 = vld [vmem:[%s0 + $0x5e0] sm:$0xff]
    %v204 = vld [vmem:[%s0 + $0x5e8] sm:$0xff]
    %v205 = vld [vmem:[%s0 + $0x5f0] sm:$0xff]
    %v206 = vld [vmem:[%s0 + $0x5f8] sm:$0xff]
    %v207 = vld [vmem:[%s0 + $0x600] sm:$0xff]
    %v208 = vld [vmem:[%s0 + $0x608] sm:$0xff]
    %v209 = vld [vmem:[%s0 + $0x610] sm:$0xff]
    %v210 = vld [vmem:[%s0 + $0x618] sm:$0xff]
    %v211 = vld [vmem:[%s0 + $0x620] sm:$0xff]
    %v212 = vld [vmem:[%s0 + $0x628] sm:$0xff]
    %v213 = vld [vmem:[%s0 + $0x630] sm:$0xff]
    %v214 = vld [vmem:[%s0 + $0x638] sm:$0xff]
    %v215 = vld [vmem:[%s0 + $0x640] sm:$0xff]
    %v216 = vld [vmem:[%s0 + $0x648] sm:$0xff]
    %v217 = vld [vmem:[%s0 + $0x650] sm:$0xff]
    %v218 = vld [vmem:[%s0 + $0x658] sm:$0xff]
    %v219 = vld [vmem:[%s0 + $0x660] sm:$0xff]
    %v220 = vld [vmem:[%s0 + $0x668] sm:$0xff]
    %v221 = vld [vmem:[%s0 + $0x670] sm:$0xff]
    %v222 = vld [vmem:[%s0 + $0x678] sm:$0xff]
    %v223 = vld [vmem:[%s0 + $0x680] sm:$0xff]
    %v224 = vld [vmem:[%s0 + $0x688] sm:$0xff]
    %v225 = vld [vmem:[%s0 + $0x690] sm:$0xff]
    %v226 = vld [vmem:[%s0 + $0x698] sm:$0xff]
    %v227 = vld [vmem:[%s0 + $0x6a0] sm:$0xff]
    %v228 = vld [vmem:[%s0 + $0x6a8] sm:$0xff]
    %v229 = vld [vmem:[%s0 + $0x6b0] sm:$0xff]
    %v230 = vld [vmem:[%s0 + $0x6b8] sm:$0xff]
    %v231 = vld [vmem:[%s0 + $0x6c0] sm:$0xff]
    %v232 = vld [vmem:[%s0 + $0x6c8] sm:$0xff]
    %v233 = vld [vmem:[%s0 + $0x6d0] sm:$0xff]
    %v234 = vld [vmem:[%s0 + $0x6d8] sm:$0xff]
    %v235 = vld [vmem:[%s0 + $0x6e0] sm:$0xff]
    %v236 = vld [vmem:[%s0 + $0x6e8] sm:$0xff]
    %v237 = vld [vmem:[%s0 + $0x6f0] sm:$0xff]
    %v238 = vld [vmem:[%s0 + $0x6f8] sm:$0xff]
    %v239 = vld [vmem:[%s0 + $0x700] sm:$0xff]
    %v240 = vld [vmem:[%s0 + $0x708] sm:$0xff]
    %v241 = vld [vmem:[%s0 + $0x710] sm:$0xff]
    %v242 = vld [vmem:[%s0 + $0x718] sm:$0xff]
    %v243 = vld [vmem:[%s0 + $0x720] sm:$0xff]
    %v244 = vld [vmem:[%s0 + $0x728] sm:$0xff]
    %v245 = vld [vmem:[%s0 + $0x730] sm:$0xff]
    %v246 = vld [vmem:[%s0 + $0x738] sm:$0xff]
    %v247 = vld [vmem:[%s0 + $0x740] sm:$0xff]
    %v248 = vld [vmem:[%s0 + $0x748] sm:$0xff]
    %v249 = vld [vmem:[%s0 + $0x750] sm:$0xff]
    %v250 = vld [vmem:[%s0 + $0x758] sm:$0xff]
    %v251 = vld [vmem:[%s0 + $0x760] sm:$0xff]
    %v252 = vld [vmem:[%s0 + $0x768] sm:$0xff]
    %v253 = vld [vmem:[%s0 + $0x770] sm:$0xff]
    %v254 = vld [vmem:[%s0 + $0x778] sm:$0xff]
    %v255 = vld [vmem:[%s0 + $0x780] sm:$0xff]
    %v256 = vld [vmem:[%s0 + $0x788] sm:$0xff]
    %v257 = vld [vmem:[%s0 + $0x790] sm:$0xff]
    %v258 = vld [vmem:[%s0 + $0x798] sm:$0xff]
    %v259 = vld [vmem:[%s0 + $0x7a0] sm:$0xff]
    %v260 = vld [vmem:[%s0 + $0x7a8] sm:$0xff]
    %v261 = vld [vmem:[%s0 + $0x7b0] sm:$0xff]
    %v262 = vld [vmem:[%s0 + $0x7b8] sm:$0xff]
    %v263 = vld [vmem:[%s0 + $0x7c0] sm:$0xff]
    %v264 = vld [vmem:[%s0 + $0x7c8] sm:$0xff]
    %v265 = vld [vmem:[%s0 + $0x7d0] sm:$0xff]
    %v266 = vld [vmem:[%s0 + $0x7d8] sm:$0xff]
    %v267 = vld [vmem:[%s0 + $0x7e0] sm:$0xff]
    %v268 = vld [vmem:[%s0 + $0x7e8] sm:$0xff]
    %v269 = vld [vmem:[%s0 + $0x7f0] sm:$0xff]
    %v270 = vld [vmem:[%s0 + $0x7f8] sm:$0xff]
    %vm271 = vcmask 523264
    %v272 = vsel %vm271, %v15, 0.0
    %273 = vadd.xlane.f32.xlu0 %v272
    %v274 = vpop.xlane.xlu0 %273
    %v275 = vsel %vm271, %v16, 0.0
    %276 = vadd.xlane.f32.xlu0 %v275
    %v277 = vpop.xlane.xlu0 %276
    %v278 = vsel %vm271, %v17, 0.0
    %279 = vadd.xlane.f32.xlu0 %v278
    %v280 = vpop.xlane.xlu0 %279
    %v281 = vsel %vm271, %v18, 0.0
    %282 = vadd.xlane.f32.xlu0 %v281
    %v283 = vpop.xlane.xlu0 %282
    %v284 = vsel %vm271, %v19, 0.0
    %285 = vadd.xlane.f32.xlu0 %v284
    %v286 = vpop.xlane.xlu0 %285
    %v287 = vsel %vm271, %v20, 0.0
    %288 = vadd.xlane.f32.xlu0 %v287
    %v289 = vpop.xlane.xlu0 %288
    %v290 = vsel %vm271, %v21, 0.0
    %291 = vadd.xlane.f32.xlu0 %v290
    %v292 = vpop.xlane.xlu0 %291
    %v293 = vsel %vm271, %v22, 0.0
    %294 = vadd.xlane.f32.xlu0 %v293
    %v295 = vpop.xlane.xlu0 %294
    %v296 = vsel %vm271, %v23, 0.0
    %297 = vadd.xlane.f32.xlu0 %v296
    %v298 = vpop.xlane.xlu0 %297
    %v299 = vsel %vm271, %v24, 0.0
    %300 = vadd.xlane.f32.xlu0 %v299
    %v301 = vpop.xlane.xlu0 %300
    %v302 = vsel %vm271, %v25, 0.0
    %303 = vadd.xlane.f32.xlu0 %v302
    %v304 = vpop.xlane.xlu0 %303
    %v305 = vsel %vm271, %v26, 0.0
    %306 = vadd.xlane.f32.xlu0 %v305
    %v307 = vpop.xlane.xlu0 %306
    %v308 = vsel %vm271, %v27, 0.0
    %309 = vadd.xlane.f32.xlu0 %v308
    %v310 = vpop.xlane.xlu0 %309
    %v311 = vsel %vm271, %v28, 0.0
    %312 = vadd.xlane.f32.xlu0 %v311
    %v313 = vpop.xlane.xlu0 %312
    %v314 = vsel %vm271, %v29, 0.0
    %315 = vadd.xlane.f32.xlu0 %v314
    %v316 = vpop.xlane.xlu0 %315
    %v317 = vsel %vm271, %v30, 0.0
    %318 = vadd.xlane.f32.xlu0 %v317
    %v319 = vpop.xlane.xlu0 %318
    %v320 = vsel %vm271, %v31, 0.0
    %321 = vadd.xlane.f32.xlu0 %v320
    %v322 = vpop.xlane.xlu0 %321
    %v323 = vsel %vm271, %v32, 0.0
    %324 = vadd.xlane.f32.xlu0 %v323
    %v325 = vpop.xlane.xlu0 %324
    %v326 = vsel %vm271, %v33, 0.0
    %327 = vadd.xlane.f32.xlu0 %v326
    %v328 = vpop.xlane.xlu0 %327
    %v329 = vsel %vm271, %v34, 0.0
    %330 = vadd.xlane.f32.xlu0 %v329
    %v331 = vpop.xlane.xlu0 %330
    %v332 = vsel %vm271, %v35, 0.0
    %333 = vadd.xlane.f32.xlu0 %v332
    %v334 = vpop.xlane.xlu0 %333
    %v335 = vsel %vm271, %v36, 0.0
    %336 = vadd.xlane.f32.xlu0 %v335
    %v337 = vpop.xlane.xlu0 %336
    %v338 = vsel %vm271, %v37, 0.0
    %339 = vadd.xlane.f32.xlu0 %v338
    %v340 = vpop.xlane.xlu0 %339
    %v341 = vsel %vm271, %v38, 0.0
    %342 = vadd.xlane.f32.xlu0 %v341
    %v343 = vpop.xlane.xlu0 %342
    %v344 = vsel %vm271, %v39, 0.0
    %345 = vadd.xlane.f32.xlu0 %v344
    %v346 = vpop.xlane.xlu0 %345
    %v347 = vsel %vm271, %v40, 0.0
    %348 = vadd.xlane.f32.xlu0 %v347
    %v349 = vpop.xlane.xlu0 %348
    %v350 = vsel %vm271, %v41, 0.0
    %351 = vadd.xlane.f32.xlu0 %v350
    %v352 = vpop.xlane.xlu0 %351
    %v353 = vsel %vm271, %v42, 0.0
    %354 = vadd.xlane.f32.xlu0 %v353
    %v355 = vpop.xlane.xlu0 %354
    %v356 = vsel %vm271, %v43, 0.0
    %357 = vadd.xlane.f32.xlu0 %v356
    %v358 = vpop.xlane.xlu0 %357
    %v359 = vsel %vm271, %v44, 0.0
    %360 = vadd.xlane.f32.xlu0 %v359
    %v361 = vpop.xlane.xlu0 %360
    %v362 = vsel %vm271, %v45, 0.0
    %363 = vadd.xlane.f32.xlu0 %v362
    %v364 = vpop.xlane.xlu0 %363
    %v365 = vsel %vm271, %v46, 0.0
    %366 = vadd.xlane.f32.xlu0 %v365
    %v367 = vpop.xlane.xlu0 %366
    %v368 = vsel %vm271, %v47, 0.0
    %369 = vadd.xlane.f32.xlu0 %v368
    %v370 = vpop.xlane.xlu0 %369
    %v371 = vsel %vm271, %v48, 0.0
    %372 = vadd.xlane.f32.xlu0 %v371
    %v373 = vpop.xlane.xlu0 %372
    %v374 = vsel %vm271, %v49, 0.0
    %375 = vadd.xlane.f32.xlu0 %v374
    %v376 = vpop.xlane.xlu0 %375
    %v377 = vsel %vm271, %v50, 0.0
    %378 = vadd.xlane.f32.xlu0 %v377
    %v379 = vpop.xlane.xlu0 %378
    %v380 = vsel %vm271, %v51, 0.0
    %381 = vadd.xlane.f32.xlu0 %v380
    %v382 = vpop.xlane.xlu0 %381
    %v383 = vsel %vm271, %v52, 0.0
    %384 = vadd.xlane.f32.xlu0 %v383
    %v385 = vpop.xlane.xlu0 %384
    %v386 = vsel %vm271, %v53, 0.0
    %387 = vadd.xlane.f32.xlu0 %v386
    %v388 = vpop.xlane.xlu0 %387
    %v389 = vsel %vm271, %v54, 0.0
    %390 = vadd.xlane.f32.xlu0 %v389
    %v391 = vpop.xlane.xlu0 %390
    %v392 = vsel %vm271, %v55, 0.0
    %393 = vadd.xlane.f32.xlu0 %v392
    %v394 = vpop.xlane.xlu0 %393
    %v395 = vsel %vm271, %v56, 0.0
    %396 = vadd.xlane.f32.xlu0 %v395
    %v397 = vpop.xlane.xlu0 %396
    %v398 = vsel %vm271, %v57, 0.0
    %399 = vadd.xlane.f32.xlu0 %v398
    %v400 = vpop.xlane.xlu0 %399
    %v401 = vsel %vm271, %v58, 0.0
    %402 = vadd.xlane.f32.xlu0 %v401
    %v403 = vpop.xlane.xlu0 %402
    %v404 = vsel %vm271, %v59, 0.0
    %405 = vadd.xlane.f32.xlu0 %v404
    %v406 = vpop.xlane.xlu0 %405
    %v407 = vsel %vm271, %v60, 0.0
    %408 = vadd.xlane.f32.xlu0 %v407
    %v409 = vpop.xlane.xlu0 %408
    %v410 = vsel %vm271, %v61, 0.0
    %411 = vadd.xlane.f32.xlu0 %v410
    %v412 = vpop.xlane.xlu0 %411
    %v413 = vsel %vm271, %v62, 0.0
    %414 = vadd.xlane.f32.xlu0 %v413
    %v415 = vpop.xlane.xlu0 %414
    %v416 = vsel %vm271, %v63, 0.0
    %417 = vadd.xlane.f32.xlu0 %v416
    %v418 = vpop.xlane.xlu0 %417
    %v419 = vsel %vm271, %v64, 0.0
    %420 = vadd.xlane.f32.xlu0 %v419
    %v421 = vpop.xlane.xlu0 %420
    %v422 = vsel %vm271, %v65, 0.0
    %423 = vadd.xlane.f32.xlu0 %v422
    %v424 = vpop.xlane.xlu0 %423
    %v425 = vsel %vm271, %v66, 0.0
    %426 = vadd.xlane.f32.xlu0 %v425
    %v427 = vpop.xlane.xlu0 %426
    %v428 = vsel %vm271, %v67, 0.0
    %429 = vadd.xlane.f32.xlu0 %v428
    %v430 = vpop.xlane.xlu0 %429
    %v431 = vsel %vm271, %v68, 0.0
    %432 = vadd.xlane.f32.xlu0 %v431
    %v433 = vpop.xlane.xlu0 %432
    %v434 = vsel %vm271, %v69, 0.0
    %435 = vadd.xlane.f32.xlu0 %v434
    %v436 = vpop.xlane.xlu0 %435
    %v437 = vsel %vm271, %v70, 0.0
    %438 = vadd.xlane.f32.xlu0 %v437
    %v439 = vpop.xlane.xlu0 %438
    %v440 = vsel %vm271, %v71, 0.0
    %441 = vadd.xlane.f32.xlu0 %v440
    %v442 = vpop.xlane.xlu0 %441
    %v443 = vsel %vm271, %v72, 0.0
    %444 = vadd.xlane.f32.xlu0 %v443
    %v445 = vpop.xlane.xlu0 %444
    %v446 = vsel %vm271, %v73, 0.0
    %447 = vadd.xlane.f32.xlu0 %v446
    %v448 = vpop.xlane.xlu0 %447
    %v449 = vsel %vm271, %v74, 0.0
    %450 = vadd.xlane.f32.xlu0 %v449
    %v451 = vpop.xlane.xlu0 %450
    %v452 = vsel %vm271, %v75, 0.0
    %453 = vadd.xlane.f32.xlu0 %v452
    %v454 = vpop.xlane.xlu0 %453
    %v455 = vsel %vm271, %v76, 0.0
    %456 = vadd.xlane.f32.xlu0 %v455
    %v457 = vpop.xlane.xlu0 %456
    %v458 = vsel %vm271, %v77, 0.0
    %459 = vadd.xlane.f32.xlu0 %v458
    %v460 = vpop.xlane.xlu0 %459
    %v461 = vsel %vm271, %v78, 0.0
    %462 = vadd.xlane.f32.xlu0 %v461
    %v463 = vpop.xlane.xlu0 %462
    %v464 = vsel %vm271, %v79, 0.0
    %465 = vadd.xlane.f32.xlu0 %v464
    %v466 = vpop.xlane.xlu0 %465
    %v467 = vsel %vm271, %v80, 0.0
    %468 = vadd.xlane.f32.xlu0 %v467
    %v469 = vpop.xlane.xlu0 %468
    %v470 = vsel %vm271, %v81, 0.0
    %471 = vadd.xlane.f32.xlu0 %v470
    %v472 = vpop.xlane.xlu0 %471
    %v473 = vsel %vm271, %v82, 0.0
    %474 = vadd.xlane.f32.xlu0 %v473
    %v475 = vpop.xlane.xlu0 %474
    %v476 = vsel %vm271, %v83, 0.0
    %477 = vadd.xlane.f32.xlu0 %v476
    %v478 = vpop.xlane.xlu0 %477
    %v479 = vsel %vm271, %v84, 0.0
    %480 = vadd.xlane.f32.xlu0 %v479
    %v481 = vpop.xlane.xlu0 %480
    %v482 = vsel %vm271, %v85, 0.0
    %483 = vadd.xlane.f32.xlu0 %v482
    %v484 = vpop.xlane.xlu0 %483
    %v485 = vsel %vm271, %v86, 0.0
    %486 = vadd.xlane.f32.xlu0 %v485
    %v487 = vpop.xlane.xlu0 %486
    %v488 = vsel %vm271, %v87, 0.0
    %489 = vadd.xlane.f32.xlu0 %v488
    %v490 = vpop.xlane.xlu0 %489
    %v491 = vsel %vm271, %v88, 0.0
    %492 = vadd.xlane.f32.xlu0 %v491
    %v493 = vpop.xlane.xlu0 %492
    %v494 = vsel %vm271, %v89, 0.0
    %495 = vadd.xlane.f32.xlu0 %v494
    %v496 = vpop.xlane.xlu0 %495
    %v497 = vsel %vm271, %v90, 0.0
    %498 = vadd.xlane.f32.xlu0 %v497
    %v499 = vpop.xlane.xlu0 %498
    %v500 = vsel %vm271, %v91, 0.0
    %501 = vadd.xlane.f32.xlu0 %v500
    %v502 = vpop.xlane.xlu0 %501
    %v503 = vsel %vm271, %v92, 0.0
    %504 = vadd.xlane.f32.xlu0 %v503
    %v505 = vpop.xlane.xlu0 %504
    %v506 = vsel %vm271, %v93, 0.0
    %507 = vadd.xlane.f32.xlu0 %v506
    %v508 = vpop.xlane.xlu0 %507
    %v509 = vsel %vm271, %v94, 0.0
    %510 = vadd.xlane.f32.xlu0 %v509
    %v511 = vpop.xlane.xlu0 %510
    %v512 = vsel %vm271, %v95, 0.0
    %513 = vadd.xlane.f32.xlu0 %v512
    %v514 = vpop.xlane.xlu0 %513
    %v515 = vsel %vm271, %v96, 0.0
    %516 = vadd.xlane.f32.xlu0 %v515
    %v517 = vpop.xlane.xlu0 %516
    %v518 = vsel %vm271, %v97, 0.0
    %519 = vadd.xlane.f32.xlu0 %v518
    %v520 = vpop.xlane.xlu0 %519
    %v521 = vsel %vm271, %v98, 0.0
    %522 = vadd.xlane.f32.xlu0 %v521
    %v523 = vpop.xlane.xlu0 %522
    %v524 = vsel %vm271, %v99, 0.0
    %525 = vadd.xlane.f32.xlu0 %v524
    %v526 = vpop.xlane.xlu0 %525
    %v527 = vsel %vm271, %v100, 0.0
    %528 = vadd.xlane.f32.xlu0 %v527
    %v529 = vpop.xlane.xlu0 %528
    %v530 = vsel %vm271, %v101, 0.0
    %531 = vadd.xlane.f32.xlu0 %v530
    %v532 = vpop.xlane.xlu0 %531
    %v533 = vsel %vm271, %v102, 0.0
    %534 = vadd.xlane.f32.xlu0 %v533
    %v535 = vpop.xlane.xlu0 %534
    %v536 = vsel %vm271, %v103, 0.0
    %537 = vadd.xlane.f32.xlu0 %v536
    %v538 = vpop.xlane.xlu0 %537
    %v539 = vsel %vm271, %v104, 0.0
    %540 = vadd.xlane.f32.xlu0 %v539
    %v541 = vpop.xlane.xlu0 %540
    %v542 = vsel %vm271, %v105, 0.0
    %543 = vadd.xlane.f32.xlu0 %v542
    %v544 = vpop.xlane.xlu0 %543
    %v545 = vsel %vm271, %v106, 0.0
    %546 = vadd.xlane.f32.xlu0 %v545
    %v547 = vpop.xlane.xlu0 %546
    %v548 = vsel %vm271, %v107, 0.0
    %549 = vadd.xlane.f32.xlu0 %v548
    %v550 = vpop.xlane.xlu0 %549
    %v551 = vsel %vm271, %v108, 0.0
    %552 = vadd.xlane.f32.xlu0 %v551
    %v553 = vpop.xlane.xlu0 %552
    %v554 = vsel %vm271, %v109, 0.0
    %555 = vadd.xlane.f32.xlu0 %v554
    %v556 = vpop.xlane.xlu0 %555
    %v557 = vsel %vm271, %v110, 0.0
    %558 = vadd.xlane.f32.xlu0 %v557
    %v559 = vpop.xlane.xlu0 %558
    %v560 = vsel %vm271, %v111, 0.0
    %561 = vadd.xlane.f32.xlu0 %v560
    %v562 = vpop.xlane.xlu0 %561
    %v563 = vsel %vm271, %v112, 0.0
    %564 = vadd.xlane.f32.xlu0 %v563
    %v565 = vpop.xlane.xlu0 %564
    %v566 = vsel %vm271, %v113, 0.0
    %567 = vadd.xlane.f32.xlu0 %v566
    %v568 = vpop.xlane.xlu0 %567
    %v569 = vsel %vm271, %v114, 0.0
    %570 = vadd.xlane.f32.xlu0 %v569
    %v571 = vpop.xlane.xlu0 %570
    %v572 = vsel %vm271, %v115, 0.0
    %573 = vadd.xlane.f32.xlu0 %v572
    %v574 = vpop.xlane.xlu0 %573
    %v575 = vsel %vm271, %v116, 0.0
    %576 = vadd.xlane.f32.xlu0 %v575
    %v577 = vpop.xlane.xlu0 %576
    %v578 = vsel %vm271, %v117, 0.0
    %579 = vadd.xlane.f32.xlu0 %v578
    %v580 = vpop.xlane.xlu0 %579
    %v581 = vsel %vm271, %v118, 0.0
    %582 = vadd.xlane.f32.xlu0 %v581
    %v583 = vpop.xlane.xlu0 %582
    %v584 = vsel %vm271, %v119, 0.0
    %585 = vadd.xlane.f32.xlu0 %v584
    %v586 = vpop.xlane.xlu0 %585
    %v587 = vsel %vm271, %v120, 0.0
    %588 = vadd.xlane.f32.xlu0 %v587
    %v589 = vpop.xlane.xlu0 %588
    %v590 = vsel %vm271, %v121, 0.0
    %591 = vadd.xlane.f32.xlu0 %v590
    %v592 = vpop.xlane.xlu0 %591
    %v593 = vsel %vm271, %v122, 0.0
    %594 = vadd.xlane.f32.xlu0 %v593
    %v595 = vpop.xlane.xlu0 %594
    %v596 = vsel %vm271, %v123, 0.0
    %597 = vadd.xlane.f32.xlu0 %v596
    %v598 = vpop.xlane.xlu0 %597
    %v599 = vsel %vm271, %v124, 0.0
    %600 = vadd.xlane.f32.xlu0 %v599
    %v601 = vpop.xlane.xlu0 %600
    %v602 = vsel %vm271, %v125, 0.0
    %603 = vadd.xlane.f32.xlu0 %v602
    %v604 = vpop.xlane.xlu0 %603
    %v605 = vsel %vm271, %v126, 0.0
    %606 = vadd.xlane.f32.xlu0 %v605
    %v607 = vpop.xlane.xlu0 %606
    %v608 = vsel %vm271, %v127, 0.0
    %609 = vadd.xlane.f32.xlu0 %v608
    %v610 = vpop.xlane.xlu0 %609
    %v611 = vsel %vm271, %v128, 0.0
    %612 = vadd.xlane.f32.xlu0 %v611
    %v613 = vpop.xlane.xlu0 %612
    %v614 = vsel %vm271, %v129, 0.0
    %615 = vadd.xlane.f32.xlu0 %v614
    %v616 = vpop.xlane.xlu0 %615
    %v617 = vsel %vm271, %v130, 0.0
    %618 = vadd.xlane.f32.xlu0 %v617
    %v619 = vpop.xlane.xlu0 %618
    %v620 = vsel %vm271, %v131, 0.0
    %621 = vadd.xlane.f32.xlu0 %v620
    %v622 = vpop.xlane.xlu0 %621
    %v623 = vsel %vm271, %v132, 0.0
    %624 = vadd.xlane.f32.xlu0 %v623
    %v625 = vpop.xlane.xlu0 %624
    %v626 = vsel %vm271, %v133, 0.0
    %627 = vadd.xlane.f32.xlu0 %v626
    %v628 = vpop.xlane.xlu0 %627
    %v629 = vsel %vm271, %v134, 0.0
    %630 = vadd.xlane.f32.xlu0 %v629
    %v631 = vpop.xlane.xlu0 %630
    %v632 = vsel %vm271, %v135, 0.0
    %633 = vadd.xlane.f32.xlu0 %v632
    %v634 = vpop.xlane.xlu0 %633
    %v635 = vsel %vm271, %v136, 0.0
    %636 = vadd.xlane.f32.xlu0 %v635
    %v637 = vpop.xlane.xlu0 %636
    %v638 = vsel %vm271, %v137, 0.0
    %639 = vadd.xlane.f32.xlu0 %v638
    %v640 = vpop.xlane.xlu0 %639
    %v641 = vsel %vm271, %v138, 0.0
    %642 = vadd.xlane.f32.xlu0 %v641
    %v643 = vpop.xlane.xlu0 %642
    %v644 = vsel %vm271, %v139, 0.0
    %645 = vadd.xlane.f32.xlu0 %v644
    %v646 = vpop.xlane.xlu0 %645
    %v647 = vsel %vm271, %v140, 0.0
    %648 = vadd.xlane.f32.xlu0 %v647
    %v649 = vpop.xlane.xlu0 %648
    %v650 = vsel %vm271, %v141, 0.0
    %651 = vadd.xlane.f32.xlu0 %v650
    %v652 = vpop.xlane.xlu0 %651
    %v653 = vsel %vm271, %v142, 0.0
    %654 = vadd.xlane.f32.xlu0 %v653
    %v655 = vpop.xlane.xlu0 %654
    %v656 = vsel %vm271, %v143, 0.0
    %657 = vadd.xlane.f32.xlu0 %v656
    %v658 = vpop.xlane.xlu0 %657
    %v659 = vsel %vm271, %v144, 0.0
    %660 = vadd.xlane.f32.xlu0 %v659
    %v661 = vpop.xlane.xlu0 %660
    %v662 = vsel %vm271, %v145, 0.0
    %663 = vadd.xlane.f32.xlu0 %v662
    %v664 = vpop.xlane.xlu0 %663
    %v665 = vsel %vm271, %v146, 0.0
    %666 = vadd.xlane.f32.xlu0 %v665
    %v667 = vpop.xlane.xlu0 %666
    %v668 = vsel %vm271, %v147, 0.0
    %669 = vadd.xlane.f32.xlu0 %v668
    %v670 = vpop.xlane.xlu0 %669
    %v671 = vsel %vm271, %v148, 0.0
    %672 = vadd.xlane.f32.xlu0 %v671
    %v673 = vpop.xlane.xlu0 %672
    %v674 = vsel %vm271, %v149, 0.0
    %675 = vadd.xlane.f32.xlu0 %v674
    %v676 = vpop.xlane.xlu0 %675
    %v677 = vsel %vm271, %v150, 0.0
    %678 = vadd.xlane.f32.xlu0 %v677
    %v679 = vpop.xlane.xlu0 %678
    %v680 = vsel %vm271, %v151, 0.0
    %681 = vadd.xlane.f32.xlu0 %v680
    %v682 = vpop.xlane.xlu0 %681
    %v683 = vsel %vm271, %v152, 0.0
    %684 = vadd.xlane.f32.xlu0 %v683
    %v685 = vpop.xlane.xlu0 %684
    %v686 = vsel %vm271, %v153, 0.0
    %687 = vadd.xlane.f32.xlu0 %v686
    %v688 = vpop.xlane.xlu0 %687
    %v689 = vsel %vm271, %v154, 0.0
    %690 = vadd.xlane.f32.xlu0 %v689
    %v691 = vpop.xlane.xlu0 %690
    %v692 = vsel %vm271, %v155, 0.0
    %693 = vadd.xlane.f32.xlu0 %v692
    %v694 = vpop.xlane.xlu0 %693
    %v695 = vsel %vm271, %v156, 0.0
    %696 = vadd.xlane.f32.xlu0 %v695
    %v697 = vpop.xlane.xlu0 %696
    %v698 = vsel %vm271, %v157, 0.0
    %699 = vadd.xlane.f32.xlu0 %v698
    %v700 = vpop.xlane.xlu0 %699
    %v701 = vsel %vm271, %v158, 0.0
    %702 = vadd.xlane.f32.xlu0 %v701
    %v703 = vpop.xlane.xlu0 %702
    %v704 = vsel %vm271, %v159, 0.0
    %705 = vadd.xlane.f32.xlu0 %v704
    %v706 = vpop.xlane.xlu0 %705
    %v707 = vsel %vm271, %v160, 0.0
    %708 = vadd.xlane.f32.xlu0 %v707
    %v709 = vpop.xlane.xlu0 %708
    %v710 = vsel %vm271, %v161, 0.0
    %711 = vadd.xlane.f32.xlu0 %v710
    %v712 = vpop.xlane.xlu0 %711
    %v713 = vsel %vm271, %v162, 0.0
    %714 = vadd.xlane.f32.xlu0 %v713
    %v715 = vpop.xlane.xlu0 %714
    %v716 = vsel %vm271, %v163, 0.0
    %717 = vadd.xlane.f32.xlu0 %v716
    %v718 = vpop.xlane.xlu0 %717
    %v719 = vsel %vm271, %v164, 0.0
    %720 = vadd.xlane.f32.xlu0 %v719
    %v721 = vpop.xlane.xlu0 %720
    %v722 = vsel %vm271, %v165, 0.0
    %723 = vadd.xlane.f32.xlu0 %v722
    %v724 = vpop.xlane.xlu0 %723
    %v725 = vsel %vm271, %v166, 0.0
    %726 = vadd.xlane.f32.xlu0 %v725
    %v727 = vpop.xlane.xlu0 %726
    %v728 = vsel %vm271, %v167, 0.0
    %729 = vadd.xlane.f32.xlu0 %v728
    %v730 = vpop.xlane.xlu0 %729
    %v731 = vsel %vm271, %v168, 0.0
    %732 = vadd.xlane.f32.xlu0 %v731
    %v733 = vpop.xlane.xlu0 %732
    %v734 = vsel %vm271, %v169, 0.0
    %735 = vadd.xlane.f32.xlu0 %v734
    %v736 = vpop.xlane.xlu0 %735
    %v737 = vsel %vm271, %v170, 0.0
    %738 = vadd.xlane.f32.xlu0 %v737
    %v739 = vpop.xlane.xlu0 %738
    %v740 = vsel %vm271, %v171, 0.0
    %741 = vadd.xlane.f32.xlu0 %v740
    %v742 = vpop.xlane.xlu0 %741
    %v743 = vsel %vm271, %v172, 0.0
    %744 = vadd.xlane.f32.xlu0 %v743
    %v745 = vpop.xlane.xlu0 %744
    %v746 = vsel %vm271, %v173, 0.0
    %747 = vadd.xlane.f32.xlu0 %v746
    %v748 = vpop.xlane.xlu0 %747
    %v749 = vsel %vm271, %v174, 0.0
    %750 = vadd.xlane.f32.xlu0 %v749
    %v751 = vpop.xlane.xlu0 %750
    %v752 = vsel %vm271, %v175, 0.0
    %753 = vadd.xlane.f32.xlu0 %v752
    %v754 = vpop.xlane.xlu0 %753
    %v755 = vsel %vm271, %v176, 0.0
    %756 = vadd.xlane.f32.xlu0 %v755
    %v757 = vpop.xlane.xlu0 %756
    %v758 = vsel %vm271, %v177, 0.0
    %759 = vadd.xlane.f32.xlu0 %v758
    %v760 = vpop.xlane.xlu0 %759
    %v761 = vsel %vm271, %v178, 0.0
    %762 = vadd.xlane.f32.xlu0 %v761
    %v763 = vpop.xlane.xlu0 %762
    %v764 = vsel %vm271, %v179, 0.0
    %765 = vadd.xlane.f32.xlu0 %v764
    %v766 = vpop.xlane.xlu0 %765
    %v767 = vsel %vm271, %v180, 0.0
    %768 = vadd.xlane.f32.xlu0 %v767
    %v769 = vpop.xlane.xlu0 %768
    %v770 = vsel %vm271, %v181, 0.0
    %771 = vadd.xlane.f32.xlu0 %v770
    %v772 = vpop.xlane.xlu0 %771
    %v773 = vsel %vm271, %v182, 0.0
    %774 = vadd.xlane.f32.xlu0 %v773
    %v775 = vpop.xlane.xlu0 %774
    %v776 = vsel %vm271, %v183, 0.0
    %777 = vadd.xlane.f32.xlu0 %v776
    %v778 = vpop.xlane.xlu0 %777
    %v779 = vsel %vm271, %v184, 0.0
    %780 = vadd.xlane.f32.xlu0 %v779
    %v781 = vpop.xlane.xlu0 %780
    %v782 = vsel %vm271, %v185, 0.0
    %783 = vadd.xlane.f32.xlu0 %v782
    %v784 = vpop.xlane.xlu0 %783
    %v785 = vsel %vm271, %v186, 0.0
    %786 = vadd.xlane.f32.xlu0 %v785
    %v787 = vpop.xlane.xlu0 %786
    %v788 = vsel %vm271, %v187, 0.0
    %789 = vadd.xlane.f32.xlu0 %v788
    %v790 = vpop.xlane.xlu0 %789
    %v791 = vsel %vm271, %v188, 0.0
    %792 = vadd.xlane.f32.xlu0 %v791
    %v793 = vpop.xlane.xlu0 %792
    %v794 = vsel %vm271, %v189, 0.0
    %795 = vadd.xlane.f32.xlu0 %v794
    %v796 = vpop.xlane.xlu0 %795
    %v797 = vsel %vm271, %v190, 0.0
    %798 = vadd.xlane.f32.xlu0 %v797
    %v799 = vpop.xlane.xlu0 %798
    %v800 = vsel %vm271, %v191, 0.0
    %801 = vadd.xlane.f32.xlu0 %v800
    %v802 = vpop.xlane.xlu0 %801
    %v803 = vsel %vm271, %v192, 0.0
    %804 = vadd.xlane.f32.xlu0 %v803
    %v805 = vpop.xlane.xlu0 %804
    %v806 = vsel %vm271, %v193, 0.0
    %807 = vadd.xlane.f32.xlu0 %v806
    %v808 = vpop.xlane.xlu0 %807
    %v809 = vsel %vm271, %v194, 0.0
    %810 = vadd.xlane.f32.xlu0 %v809
    %v811 = vpop.xlane.xlu0 %810
    %v812 = vsel %vm271, %v195, 0.0
    %813 = vadd.xlane.f32.xlu0 %v812
    %v814 = vpop.xlane.xlu0 %813
    %v815 = vsel %vm271, %v196, 0.0
    %816 = vadd.xlane.f32.xlu0 %v815
    %v817 = vpop.xlane.xlu0 %816
    %v818 = vsel %vm271, %v197, 0.0
    %819 = vadd.xlane.f32.xlu0 %v818
    %v820 = vpop.xlane.xlu0 %819
    %v821 = vsel %vm271, %v198, 0.0
    %822 = vadd.xlane.f32.xlu0 %v821
    %v823 = vpop.xlane.xlu0 %822
    %v824 = vsel %vm271, %v199, 0.0
    %825 = vadd.xlane.f32.xlu0 %v824
    %v826 = vpop.xlane.xlu0 %825
    %v827 = vsel %vm271, %v200, 0.0
    %828 = vadd.xlane.f32.xlu0 %v827
    %v829 = vpop.xlane.xlu0 %828
    %v830 = vsel %vm271, %v201, 0.0
    %831 = vadd.xlane.f32.xlu0 %v830
    %v832 = vpop.xlane.xlu0 %831
    %v833 = vsel %vm271, %v202, 0.0
    %834 = vadd.xlane.f32.xlu0 %v833
    %v835 = vpop.xlane.xlu0 %834
    %v836 = vsel %vm271, %v203, 0.0
    %837 = vadd.xlane.f32.xlu0 %v836
    %v838 = vpop.xlane.xlu0 %837
    %v839 = vsel %vm271, %v204, 0.0
    %840 = vadd.xlane.f32.xlu0 %v839
    %v841 = vpop.xlane.xlu0 %840
    %v842 = vsel %vm271, %v205, 0.0
    %843 = vadd.xlane.f32.xlu0 %v842
    %v844 = vpop.xlane.xlu0 %843
    %v845 = vsel %vm271, %v206, 0.0
    %846 = vadd.xlane.f32.xlu0 %v845
    %v847 = vpop.xlane.xlu0 %846
    %v848 = vsel %vm271, %v207, 0.0
    %849 = vadd.xlane.f32.xlu0 %v848
    %v850 = vpop.xlane.xlu0 %849
    %v851 = vsel %vm271, %v208, 0.0
    %852 = vadd.xlane.f32.xlu0 %v851
    %v853 = vpop.xlane.xlu0 %852
    %v854 = vsel %vm271, %v209, 0.0
    %855 = vadd.xlane.f32.xlu0 %v854
    %v856 = vpop.xlane.xlu0 %855
    %v857 = vsel %vm271, %v210, 0.0
    %858 = vadd.xlane.f32.xlu0 %v857
    %v859 = vpop.xlane.xlu0 %858
    %v860 = vsel %vm271, %v211, 0.0
    %861 = vadd.xlane.f32.xlu0 %v860
    %v862 = vpop.xlane.xlu0 %861
    %v863 = vsel %vm271, %v212, 0.0
    %864 = vadd.xlane.f32.xlu0 %v863
    %v865 = vpop.xlane.xlu0 %864
    %v866 = vsel %vm271, %v213, 0.0
    %867 = vadd.xlane.f32.xlu0 %v866
    %v868 = vpop.xlane.xlu0 %867
    %v869 = vsel %vm271, %v214, 0.0
    %870 = vadd.xlane.f32.xlu0 %v869
    %v871 = vpop.xlane.xlu0 %870
    %v872 = vsel %vm271, %v215, 0.0
    %873 = vadd.xlane.f32.xlu0 %v872
    %v874 = vpop.xlane.xlu0 %873
    %v875 = vsel %vm271, %v216, 0.0
    %876 = vadd.xlane.f32.xlu0 %v875
    %v877 = vpop.xlane.xlu0 %876
    %v878 = vsel %vm271, %v217, 0.0
    %879 = vadd.xlane.f32.xlu0 %v878
    %v880 = vpop.xlane.xlu0 %879
    %v881 = vsel %vm271, %v218, 0.0
    %882 = vadd.xlane.f32.xlu0 %v881
    %v883 = vpop.xlane.xlu0 %882
    %v884 = vsel %vm271, %v219, 0.0
    %885 = vadd.xlane.f32.xlu0 %v884
    %v886 = vpop.xlane.xlu0 %885
    %v887 = vsel %vm271, %v220, 0.0
    %888 = vadd.xlane.f32.xlu0 %v887
    %v889 = vpop.xlane.xlu0 %888
    %v890 = vsel %vm271, %v221, 0.0
    %891 = vadd.xlane.f32.xlu0 %v890
    %v892 = vpop.xlane.xlu0 %891
    %v893 = vsel %vm271, %v222, 0.0
    %894 = vadd.xlane.f32.xlu0 %v893
    %v895 = vpop.xlane.xlu0 %894
    %v896 = vsel %vm271, %v223, 0.0
    %897 = vadd.xlane.f32.xlu0 %v896
    %v898 = vpop.xlane.xlu0 %897
    %v899 = vsel %vm271, %v224, 0.0
    %900 = vadd.xlane.f32.xlu0 %v899
    %v901 = vpop.xlane.xlu0 %900
    %v902 = vsel %vm271, %v225, 0.0
    %903 = vadd.xlane.f32.xlu0 %v902
    %v904 = vpop.xlane.xlu0 %903
    %v905 = vsel %vm271, %v226, 0.0
    %906 = vadd.xlane.f32.xlu0 %v905
    %v907 = vpop.xlane.xlu0 %906
    %v908 = vsel %vm271, %v227, 0.0
    %909 = vadd.xlane.f32.xlu0 %v908
    %v910 = vpop.xlane.xlu0 %909
    %v911 = vsel %vm271, %v228, 0.0
    %912 = vadd.xlane.f32.xlu0 %v911
    %v913 = vpop.xlane.xlu0 %912
    %v914 = vsel %vm271, %v229, 0.0
    %915 = vadd.xlane.f32.xlu0 %v914
    %v916 = vpop.xlane.xlu0 %915
    %v917 = vsel %vm271, %v230, 0.0
    %918 = vadd.xlane.f32.xlu0 %v917
    %v919 = vpop.xlane.xlu0 %918
    %v920 = vsel %vm271, %v231, 0.0
    %921 = vadd.xlane.f32.xlu0 %v920
    %v922 = vpop.xlane.xlu0 %921
    %v923 = vsel %vm271, %v232, 0.0
    %924 = vadd.xlane.f32.xlu0 %v923
    %v925 = vpop.xlane.xlu0 %924
    %v926 = vsel %vm271, %v233, 0.0
    %927 = vadd.xlane.f32.xlu0 %v926
    %v928 = vpop.xlane.xlu0 %927
    %v929 = vsel %vm271, %v234, 0.0
    %930 = vadd.xlane.f32.xlu0 %v929
    %v931 = vpop.xlane.xlu0 %930
    %v932 = vsel %vm271, %v235, 0.0
    %933 = vadd.xlane.f32.xlu0 %v932
    %v934 = vpop.xlane.xlu0 %933
    %v935 = vsel %vm271, %v236, 0.0
    %936 = vadd.xlane.f32.xlu0 %v935
    %v937 = vpop.xlane.xlu0 %936
    %v938 = vsel %vm271, %v237, 0.0
    %939 = vadd.xlane.f32.xlu0 %v938
    %v940 = vpop.xlane.xlu0 %939
    %v941 = vsel %vm271, %v238, 0.0
    %942 = vadd.xlane.f32.xlu0 %v941
    %v943 = vpop.xlane.xlu0 %942
    %v944 = vsel %vm271, %v239, 0.0
    %945 = vadd.xlane.f32.xlu0 %v944
    %v946 = vpop.xlane.xlu0 %945
    %v947 = vsel %vm271, %v240, 0.0
    %948 = vadd.xlane.f32.xlu0 %v947
    %v949 = vpop.xlane.xlu0 %948
    %v950 = vsel %vm271, %v241, 0.0
    %951 = vadd.xlane.f32.xlu0 %v950
    %v952 = vpop.xlane.xlu0 %951
    %v953 = vsel %vm271, %v242, 0.0
    %954 = vadd.xlane.f32.xlu0 %v953
    %v955 = vpop.xlane.xlu0 %954
    %v956 = vsel %vm271, %v243, 0.0
    %957 = vadd.xlane.f32.xlu0 %v956
    %v958 = vpop.xlane.xlu0 %957
    %v959 = vsel %vm271, %v244, 0.0
    %960 = vadd.xlane.f32.xlu0 %v959
    %v961 = vpop.xlane.xlu0 %960
    %v962 = vsel %vm271, %v245, 0.0
    %963 = vadd.xlane.f32.xlu0 %v962
    %v964 = vpop.xlane.xlu0 %963
    %v965 = vsel %vm271, %v246, 0.0
    %966 = vadd.xlane.f32.xlu0 %v965
    %v967 = vpop.xlane.xlu0 %966
    %v968 = vsel %vm271, %v247, 0.0
    %969 = vadd.xlane.f32.xlu0 %v968
    %v970 = vpop.xlane.xlu0 %969
    %v971 = vsel %vm271, %v248, 0.0
    %972 = vadd.xlane.f32.xlu0 %v971
    %v973 = vpop.xlane.xlu0 %972
    %v974 = vsel %vm271, %v249, 0.0
    %975 = vadd.xlane.f32.xlu0 %v974
    %v976 = vpop.xlane.xlu0 %975
    %v977 = vsel %vm271, %v250, 0.0
    %978 = vadd.xlane.f32.xlu0 %v977
    %v979 = vpop.xlane.xlu0 %978
    %v980 = vsel %vm271, %v251, 0.0
    %981 = vadd.xlane.f32.xlu0 %v980
    %v982 = vpop.xlane.xlu0 %981
    %v983 = vsel %vm271, %v252, 0.0
    %984 = vadd.xlane.f32.xlu0 %v983
    %v985 = vpop.xlane.xlu0 %984
    %v986 = vsel %vm271, %v253, 0.0
    %987 = vadd.xlane.f32.xlu0 %v986
    %v988 = vpop.xlane.xlu0 %987
    %v989 = vsel %vm271, %v254, 0.0
    %990 = vadd.xlane.f32.xlu0 %v989
    %v991 = vpop.xlane.xlu0 %990
    %v992 = vsel %vm271, %v255, 0.0
    %993 = vadd.xlane.f32.xlu0 %v992
    %v994 = vpop.xlane.xlu0 %993
    %v995 = vsel %vm271, %v256, 0.0
    %996 = vadd.xlane.f32.xlu0 %v995
    %v997 = vpop.xlane.xlu0 %996
    %v998 = vsel %vm271, %v257, 0.0
    %999 = vadd.xlane.f32.xlu0 %v998
    %v1000 = vpop.xlane.xlu0 %999
    %v1001 = vsel %vm271, %v258, 0.0
    %1002 = vadd.xlane.f32.xlu0 %v1001
    %v1003 = vpop.xlane.xlu0 %1002
    %v1004 = vsel %vm271, %v259, 0.0
    %1005 = vadd.xlane.f32.xlu0 %v1004
    %v1006 = vpop.xlane.xlu0 %1005
    %v1007 = vsel %vm271, %v260, 0.0
    %1008 = vadd.xlane.f32.xlu0 %v1007
    %v1009 = vpop.xlane.xlu0 %1008
    %v1010 = vsel %vm271, %v261, 0.0
    %1011 = vadd.xlane.f32.xlu0 %v1010
    %v1012 = vpop.xlane.xlu0 %1011
    %v1013 = vsel %vm271, %v262, 0.0
    %1014 = vadd.xlane.f32.xlu0 %v1013
    %v1015 = vpop.xlane.xlu0 %1014
    %v1016 = vsel %vm271, %v263, 0.0
    %1017 = vadd.xlane.f32.xlu0 %v1016
    %v1018 = vpop.xlane.xlu0 %1017
    %v1019 = vsel %vm271, %v264, 0.0
    %1020 = vadd.xlane.f32.xlu0 %v1019
    %v1021 = vpop.xlane.xlu0 %1020
    %v1022 = vsel %vm271, %v265, 0.0
    %1023 = vadd.xlane.f32.xlu0 %v1022
    %v1024 = vpop.xlane.xlu0 %1023
    %v1025 = vsel %vm271, %v266, 0.0
    %1026 = vadd.xlane.f32.xlu0 %v1025
    %v1027 = vpop.xlane.xlu0 %1026
    %v1028 = vsel %vm271, %v267, 0.0
    %1029 = vadd.xlane.f32.xlu0 %v1028
    %v1030 = vpop.xlane.xlu0 %1029
    %v1031 = vsel %vm271, %v268, 0.0
    %1032 = vadd.xlane.f32.xlu0 %v1031
    %v1033 = vpop.xlane.xlu0 %1032
    %v1034 = vsel %vm271, %v269, 0.0
    %1035 = vadd.xlane.f32.xlu0 %v1034
    %v1036 = vpop.xlane.xlu0 %1035
    %v1037 = vsel %vm271, %v270, 0.0
    %1038 = vadd.xlane.f32.xlu0 %v1037
    %v1039 = vpop.xlane.xlu0 %1038
    %v1040 = vld [vmem:[%s1] sm:$0xff]
    %v1041 = vld [vmem:[%s1 + $0x8] sm:$0xff]
    %v1042 = vld [vmem:[%s1 + $0x10] sm:$0xff]
    %v1043 = vld [vmem:[%s1 + $0x18] sm:$0xff]
    %v1044 = vld [vmem:[%s1 + $0x20] sm:$0xff]
    %v1045 = vld [vmem:[%s1 + $0x28] sm:$0xff]
    %v1046 = vld [vmem:[%s1 + $0x30] sm:$0xff]
    %v1047 = vld [vmem:[%s1 + $0x38] sm:$0xff]
    %v1048 = vld [vmem:[%s1 + $0x40] sm:$0xff]
    %v1049 = vld [vmem:[%s1 + $0x48] sm:$0xff]
    %v1050 = vld [vmem:[%s1 + $0x50] sm:$0xff]
    %v1051 = vld [vmem:[%s1 + $0x58] sm:$0xff]
    %v1052 = vld [vmem:[%s1 + $0x60] sm:$0xff]
    %v1053 = vld [vmem:[%s1 + $0x68] sm:$0xff]
    %v1054 = vld [vmem:[%s1 + $0x70] sm:$0xff]
    %v1055 = vld [vmem:[%s1 + $0x78] sm:$0xff]
    %v1056 = vld [vmem:[%s1 + $0x80] sm:$0xff]
    %v1057 = vld [vmem:[%s1 + $0x88] sm:$0xff]
    %v1058 = vld [vmem:[%s1 + $0x90] sm:$0xff]
    %v1059 = vld [vmem:[%s1 + $0x98] sm:$0xff]
    %v1060 = vld [vmem:[%s1 + $0xa0] sm:$0xff]
    %v1061 = vld [vmem:[%s1 + $0xa8] sm:$0xff]
    %v1062 = vld [vmem:[%s1 + $0xb0] sm:$0xff]
    %v1063 = vld [vmem:[%s1 + $0xb8] sm:$0xff]
    %v1064 = vld [vmem:[%s1 + $0xc0] sm:$0xff]
    %v1065 = vld [vmem:[%s1 + $0xc8] sm:$0xff]
    %v1066 = vld [vmem:[%s1 + $0xd0] sm:$0xff]
    %v1067 = vld [vmem:[%s1 + $0xd8] sm:$0xff]
    %v1068 = vld [vmem:[%s1 + $0xe0] sm:$0xff]
    %v1069 = vld [vmem:[%s1 + $0xe8] sm:$0xff]
    %v1070 = vld [vmem:[%s1 + $0xf0] sm:$0xff]
    %v1071 = vld [vmem:[%s1 + $0xf8] sm:$0xff]
    %v1072 = vld [vmem:[%s1 + $0x100] sm:$0xff]
    %v1073 = vld [vmem:[%s1 + $0x108] sm:$0xff]
    %v1074 = vld [vmem:[%s1 + $0x110] sm:$0xff]
    %v1075 = vld [vmem:[%s1 + $0x118] sm:$0xff]
    %v1076 = vld [vmem:[%s1 + $0x120] sm:$0xff]
    %v1077 = vld [vmem:[%s1 + $0x128] sm:$0xff]
    %v1078 = vld [vmem:[%s1 + $0x130] sm:$0xff]
    %v1079 = vld [vmem:[%s1 + $0x138] sm:$0xff]
    %v1080 = vld [vmem:[%s1 + $0x140] sm:$0xff]
    %v1081 = vld [vmem:[%s1 + $0x148] sm:$0xff]
    %v1082 = vld [vmem:[%s1 + $0x150] sm:$0xff]
    %v1083 = vld [vmem:[%s1 + $0x158] sm:$0xff]
    %v1084 = vld [vmem:[%s1 + $0x160] sm:$0xff]
    %v1085 = vld [vmem:[%s1 + $0x168] sm:$0xff]
    %v1086 = vld [vmem:[%s1 + $0x170] sm:$0xff]
    %v1087 = vld [vmem:[%s1 + $0x178] sm:$0xff]
    %v1088 = vld [vmem:[%s1 + $0x180] sm:$0xff]
    %v1089 = vld [vmem:[%s1 + $0x188] sm:$0xff]
    %v1090 = vld [vmem:[%s1 + $0x190] sm:$0xff]
    %v1091 = vld [vmem:[%s1 + $0x198] sm:$0xff]
    %v1092 = vld [vmem:[%s1 + $0x1a0] sm:$0xff]
    %v1093 = vld [vmem:[%s1 + $0x1a8] sm:$0xff]
    %v1094 = vld [vmem:[%s1 + $0x1b0] sm:$0xff]
    %v1095 = vld [vmem:[%s1 + $0x1b8] sm:$0xff]
    %v1096 = vld [vmem:[%s1 + $0x1c0] sm:$0xff]
    %v1097 = vld [vmem:[%s1 + $0x1c8] sm:$0xff]
    %v1098 = vld [vmem:[%s1 + $0x1d0] sm:$0xff]
    %v1099 = vld [vmem:[%s1 + $0x1d8] sm:$0xff]
    %v1100 = vld [vmem:[%s1 + $0x1e0] sm:$0xff]
    %v1101 = vld [vmem:[%s1 + $0x1e8] sm:$0xff]
    %v1102 = vld [vmem:[%s1 + $0x1f0] sm:$0xff]
    %v1103 = vld [vmem:[%s1 + $0x1f8] sm:$0xff]
    %v1104 = vld [vmem:[%s2] sm:$0x3]
    %v1106 = vlaneseq
    %v1107 = vshrl.u32 %v1106, 7
    %v1108 = vsub.s32 0, %v1107
    %v1109 = vrot.slane %v1104, %v1108
    %v1110 = vlaneseq
    %v1111 = vshrl.u32 %v1110, 7
    %v1112 = vsub.s32 1, %v1111
    %v1113 = vrot.slane %v1104, %v1112
    %v1372 = vlaneseq
    %v1373 = vand.u32 %v1372, 127
    %v1374 = vlaneseq
    %v1375 = vshrl.u32 %v1374, 7
    %v1376 = vsub.s32 %v1373, %v1375
    %v1377 = vrot.slane %v274, %v1376
    %v1378 = vadd.s32 %v1373, 4294967288
    %v1379 = vlaneseq
    %v1380 = vshrl.u32 %v1379, 7
    %v1381 = vsub.s32 %v1378, %v1380
    %v1382 = vrot.slane %v277, %v1381
    %vm1383 = vcmask 130112
    %v1384 = vsel %vm1383, %v1382, %v1377
    %v1385 = vadd.s32 %v1373, 4294967280
    %v1386 = vlaneseq
    %v1387 = vshrl.u32 %v1386, 7
    %v1388 = vsub.s32 %v1385, %v1387
    %v1389 = vrot.slane %v280, %v1388
    %vm1390 = vcmask 195712
    %v1391 = vsel %vm1390, %v1389, %v1384
    %v1392 = vadd.s32 %v1373, 4294967272
    %v1393 = vlaneseq
    %v1394 = vshrl.u32 %v1393, 7
    %v1395 = vsub.s32 %v1392, %v1394
    %v1396 = vrot.slane %v283, %v1395
    %vm1397 = vcmask 261312
    %v1398 = vsel %vm1397, %v1396, %v1391
    %v1399 = vadd.s32 %v1373, 4294967264
    %v1400 = vlaneseq
    %v1401 = vshrl.u32 %v1400, 7
    %v1402 = vsub.s32 %v1399, %v1401
    %v1403 = vrot.slane %v286, %v1402
    %vm1404 = vcmask 326912
    %v1405 = vsel %vm1404, %v1403, %v1398
    %v1406 = vadd.s32 %v1373, 4294967256
    %v1407 = vlaneseq
    %v1408 = vshrl.u32 %v1407, 7
    %v1409 = vsub.s32 %v1406, %v1408
    %v1410 = vrot.slane %v289, %v1409
    %vm1411 = vcmask 392512
    %v1412 = vsel %vm1411, %v1410, %v1405
    %v1413 = vadd.s32 %v1373, 4294967248
    %v1414 = vlaneseq
    %v1415 = vshrl.u32 %v1414, 7
    %v1416 = vsub.s32 %v1413, %v1415
    %v1417 = vrot.slane %v292, %v1416
    %vm1418 = vcmask 458112
    %v1419 = vsel %vm1418, %v1417, %v1412
    %v1420 = vadd.s32 %v1373, 4294967240
    %v1421 = vlaneseq
    %v1422 = vshrl.u32 %v1421, 7
    %v1423 = vsub.s32 %v1420, %v1422
    %v1424 = vrot.slane %v295, %v1423
    %vm1425 = vcmask 523712
    %v1426 = vsel %vm1425, %v1424, %v1419
    %v1427 = vadd.s32 %v1373, 4294967232
    %v1428 = vlaneseq
    %v1429 = vshrl.u32 %v1428, 7
    %v1430 = vsub.s32 %v1427, %v1429
    %v1431 = vrot.slane %v298, %v1430
    %vm1432 = vcmask 589312
    %v1433 = vsel %vm1432, %v1431, %v1426
    %v1434 = vadd.s32 %v1373, 4294967224
    %v1435 = vlaneseq
    %v1436 = vshrl.u32 %v1435, 7
    %v1437 = vsub.s32 %v1434, %v1436
    %v1438 = vrot.slane %v301, %v1437
    %vm1439 = vcmask 654912
    %v1440 = vsel %vm1439, %v1438, %v1433
    %v1441 = vadd.s32 %v1373, 4294967216
    %v1442 = vlaneseq
    %v1443 = vshrl.u32 %v1442, 7
    %v1444 = vsub.s32 %v1441, %v1443
    %v1445 = vrot.slane %v304, %v1444
    %vm1446 = vcmask 720512
    %v1447 = vsel %vm1446, %v1445, %v1440
    %v1448 = vadd.s32 %v1373, 4294967208
    %v1449 = vlaneseq
    %v1450 = vshrl.u32 %v1449, 7
    %v1451 = vsub.s32 %v1448, %v1450
    %v1452 = vrot.slane %v307, %v1451
    %vm1453 = vcmask 786112
    %v1454 = vsel %vm1453, %v1452, %v1447
    %v1455 = vadd.s32 %v1373, 4294967200
    %v1456 = vlaneseq
    %v1457 = vshrl.u32 %v1456, 7
    %v1458 = vsub.s32 %v1455, %v1457
    %v1459 = vrot.slane %v310, %v1458
    %vm1460 = vcmask 851712
    %v1461 = vsel %vm1460, %v1459, %v1454
    %v1462 = vadd.s32 %v1373, 4294967192
    %v1463 = vlaneseq
    %v1464 = vshrl.u32 %v1463, 7
    %v1465 = vsub.s32 %v1462, %v1464
    %v1466 = vrot.slane %v313, %v1465
    %vm1467 = vcmask 917312
    %v1468 = vsel %vm1467, %v1466, %v1461
    %v1469 = vadd.s32 %v1373, 4294967184
    %v1470 = vlaneseq
    %v1471 = vshrl.u32 %v1470, 7
    %v1472 = vsub.s32 %v1469, %v1471
    %v1473 = vrot.slane %v316, %v1472
    %vm1474 = vcmask 982912
    %v1475 = vsel %vm1474, %v1473, %v1468
    %v1476 = vadd.s32 %v1373, 4294967176
    %v1477 = vlaneseq
    %v1478 = vshrl.u32 %v1477, 7
    %v1479 = vsub.s32 %v1476, %v1478
    %v1480 = vrot.slane %v319, %v1479
    %vm1481 = vcmask 1048512
    %v1482 = vsel %vm1481, %v1480, %v1475
    %v1483 = vlaneseq
    %v1484 = vshrl.u32 %v1483, 7
    %v1485 = vsub.s32 %v1373, %v1484
    %v1486 = vrot.slane %v322, %v1485
    %v1487 = vlaneseq
    %v1488 = vshrl.u32 %v1487, 7
    %v1489 = vsub.s32 %v1378, %v1488
    %v1490 = vrot.slane %v325, %v1489
    %v1491 = vsel %vm1383, %v1490, %v1486
    %v1492 = vlaneseq
    %v1493 = vshrl.u32 %v1492, 7
    %v1494 = vsub.s32 %v1385, %v1493
    %v1495 = vrot.slane %v328, %v1494
    %v1496 = vsel %vm1390, %v1495, %v1491
    %v1497 = vlaneseq
    %v1498 = vshrl.u32 %v1497, 7
    %v1499 = vsub.s32 %v1392, %v1498
    %v1500 = vrot.slane %v331, %v1499
    %v1501 = vsel %vm1397, %v1500, %v1496
    %v1502 = vlaneseq
    %v1503 = vshrl.u32 %v1502, 7
    %v1504 = vsub.s32 %v1399, %v1503
    %v1505 = vrot.slane %v334, %v1504
    %v1506 = vsel %vm1404, %v1505, %v1501
    %v1507 = vlaneseq
    %v1508 = vshrl.u32 %v1507, 7
    %v1509 = vsub.s32 %v1406, %v1508
    %v1510 = vrot.slane %v337, %v1509
    %v1511 = vsel %vm1411, %v1510, %v1506
    %v1512 = vlaneseq
    %v1513 = vshrl.u32 %v1512, 7
    %v1514 = vsub.s32 %v1413, %v1513
    %v1515 = vrot.slane %v340, %v1514
    %v1516 = vsel %vm1418, %v1515, %v1511
    %v1517 = vlaneseq
    %v1518 = vshrl.u32 %v1517, 7
    %v1519 = vsub.s32 %v1420, %v1518
    %v1520 = vrot.slane %v343, %v1519
    %v1521 = vsel %vm1425, %v1520, %v1516
    %v1522 = vlaneseq
    %v1523 = vshrl.u32 %v1522, 7
    %v1524 = vsub.s32 %v1427, %v1523
    %v1525 = vrot.slane %v346, %v1524
    %v1526 = vsel %vm1432, %v1525, %v1521
    %v1527 = vlaneseq
    %v1528 = vshrl.u32 %v1527, 7
    %v1529 = vsub.s32 %v1434, %v1528
    %v1530 = vrot.slane %v349, %v1529
    %v1531 = vsel %vm1439, %v1530, %v1526
    %v1532 = vlaneseq
    %v1533 = vshrl.u32 %v1532, 7
    %v1534 = vsub.s32 %v1441, %v1533
    %v1535 = vrot.slane %v352, %v1534
    %v1536 = vsel %vm1446, %v1535, %v1531
    %v1537 = vlaneseq
    %v1538 = vshrl.u32 %v1537, 7
    %v1539 = vsub.s32 %v1448, %v1538
    %v1540 = vrot.slane %v355, %v1539
    %v1541 = vsel %vm1453, %v1540, %v1536
    %v1542 = vlaneseq
    %v1543 = vshrl.u32 %v1542, 7
    %v1544 = vsub.s32 %v1455, %v1543
    %v1545 = vrot.slane %v358, %v1544
    %v1546 = vsel %vm1460, %v1545, %v1541
    %v1547 = vlaneseq
    %v1548 = vshrl.u32 %v1547, 7
    %v1549 = vsub.s32 %v1462, %v1548
    %v1550 = vrot.slane %v361, %v1549
    %v1551 = vsel %vm1467, %v1550, %v1546
    %v1552 = vlaneseq
    %v1553 = vshrl.u32 %v1552, 7
    %v1554 = vsub.s32 %v1469, %v1553
    %v1555 = vrot.slane %v364, %v1554
    %v1556 = vsel %vm1474, %v1555, %v1551
    %v1557 = vlaneseq
    %v1558 = vshrl.u32 %v1557, 7
    %v1559 = vsub.s32 %v1476, %v1558
    %v1560 = vrot.slane %v367, %v1559
    %v1561 = vsel %vm1481, %v1560, %v1556
    %v1562 = vlaneseq
    %v1563 = vshrl.u32 %v1562, 7
    %v1564 = vsub.s32 %v1373, %v1563
    %v1565 = vrot.slane %v370, %v1564
    %v1566 = vlaneseq
    %v1567 = vshrl.u32 %v1566, 7
    %v1568 = vsub.s32 %v1378, %v1567
    %v1569 = vrot.slane %v373, %v1568
    %v1570 = vsel %vm1383, %v1569, %v1565
    %v1571 = vlaneseq
    %v1572 = vshrl.u32 %v1571, 7
    %v1573 = vsub.s32 %v1385, %v1572
    %v1574 = vrot.slane %v376, %v1573
    %v1575 = vsel %vm1390, %v1574, %v1570
    %v1576 = vlaneseq
    %v1577 = vshrl.u32 %v1576, 7
    %v1578 = vsub.s32 %v1392, %v1577
    %v1579 = vrot.slane %v379, %v1578
    %v1580 = vsel %vm1397, %v1579, %v1575
    %v1581 = vlaneseq
    %v1582 = vshrl.u32 %v1581, 7
    %v1583 = vsub.s32 %v1399, %v1582
    %v1584 = vrot.slane %v382, %v1583
    %v1585 = vsel %vm1404, %v1584, %v1580
    %v1586 = vlaneseq
    %v1587 = vshrl.u32 %v1586, 7
    %v1588 = vsub.s32 %v1406, %v1587
    %v1589 = vrot.slane %v385, %v1588
    %v1590 = vsel %vm1411, %v1589, %v1585
    %v1591 = vlaneseq
    %v1592 = vshrl.u32 %v1591, 7
    %v1593 = vsub.s32 %v1413, %v1592
    %v1594 = vrot.slane %v388, %v1593
    %v1595 = vsel %vm1418, %v1594, %v1590
    %v1596 = vlaneseq
    %v1597 = vshrl.u32 %v1596, 7
    %v1598 = vsub.s32 %v1420, %v1597
    %v1599 = vrot.slane %v391, %v1598
    %v1600 = vsel %vm1425, %v1599, %v1595
    %v1601 = vlaneseq
    %v1602 = vshrl.u32 %v1601, 7
    %v1603 = vsub.s32 %v1427, %v1602
    %v1604 = vrot.slane %v394, %v1603
    %v1605 = vsel %vm1432, %v1604, %v1600
    %v1606 = vlaneseq
    %v1607 = vshrl.u32 %v1606, 7
    %v1608 = vsub.s32 %v1434, %v1607
    %v1609 = vrot.slane %v397, %v1608
    %v1610 = vsel %vm1439, %v1609, %v1605
    %v1611 = vlaneseq
    %v1612 = vshrl.u32 %v1611, 7
    %v1613 = vsub.s32 %v1441, %v1612
    %v1614 = vrot.slane %v400, %v1613
    %v1615 = vsel %vm1446, %v1614, %v1610
    %v1616 = vlaneseq
    %v1617 = vshrl.u32 %v1616, 7
    %v1618 = vsub.s32 %v1448, %v1617
    %v1619 = vrot.slane %v403, %v1618
    %v1620 = vsel %vm1453, %v1619, %v1615
    %v1621 = vlaneseq
    %v1622 = vshrl.u32 %v1621, 7
    %v1623 = vsub.s32 %v1455, %v1622
    %v1624 = vrot.slane %v406, %v1623
    %v1625 = vsel %vm1460, %v1624, %v1620
    %v1626 = vlaneseq
    %v1627 = vshrl.u32 %v1626, 7
    %v1628 = vsub.s32 %v1462, %v1627
    %v1629 = vrot.slane %v409, %v1628
    %v1630 = vsel %vm1467, %v1629, %v1625
    %v1631 = vlaneseq
    %v1632 = vshrl.u32 %v1631, 7
    %v1633 = vsub.s32 %v1469, %v1632
    %v1634 = vrot.slane %v412, %v1633
    %v1635 = vsel %vm1474, %v1634, %v1630
    %v1636 = vlaneseq
    %v1637 = vshrl.u32 %v1636, 7
    %v1638 = vsub.s32 %v1476, %v1637
    %v1639 = vrot.slane %v415, %v1638
    %v1640 = vsel %vm1481, %v1639, %v1635
    %v1641 = vlaneseq
    %v1642 = vshrl.u32 %v1641, 7
    %v1643 = vsub.s32 %v1373, %v1642
    %v1644 = vrot.slane %v418, %v1643
    %v1645 = vlaneseq
    %v1646 = vshrl.u32 %v1645, 7
    %v1647 = vsub.s32 %v1378, %v1646
    %v1648 = vrot.slane %v421, %v1647
    %v1649 = vsel %vm1383, %v1648, %v1644
    %v1650 = vlaneseq
    %v1651 = vshrl.u32 %v1650, 7
    %v1652 = vsub.s32 %v1385, %v1651
    %v1653 = vrot.slane %v424, %v1652
    %v1654 = vsel %vm1390, %v1653, %v1649
    %v1655 = vlaneseq
    %v1656 = vshrl.u32 %v1655, 7
    %v1657 = vsub.s32 %v1392, %v1656
    %v1658 = vrot.slane %v427, %v1657
    %v1659 = vsel %vm1397, %v1658, %v1654
    %v1660 = vlaneseq
    %v1661 = vshrl.u32 %v1660, 7
    %v1662 = vsub.s32 %v1399, %v1661
    %v1663 = vrot.slane %v430, %v1662
    %v1664 = vsel %vm1404, %v1663, %v1659
    %v1665 = vlaneseq
    %v1666 = vshrl.u32 %v1665, 7
    %v1667 = vsub.s32 %v1406, %v1666
    %v1668 = vrot.slane %v433, %v1667
    %v1669 = vsel %vm1411, %v1668, %v1664
    %v1670 = vlaneseq
    %v1671 = vshrl.u32 %v1670, 7
    %v1672 = vsub.s32 %v1413, %v1671
    %v1673 = vrot.slane %v436, %v1672
    %v1674 = vsel %vm1418, %v1673, %v1669
    %v1675 = vlaneseq
    %v1676 = vshrl.u32 %v1675, 7
    %v1677 = vsub.s32 %v1420, %v1676
    %v1678 = vrot.slane %v439, %v1677
    %v1679 = vsel %vm1425, %v1678, %v1674
    %v1680 = vlaneseq
    %v1681 = vshrl.u32 %v1680, 7
    %v1682 = vsub.s32 %v1427, %v1681
    %v1683 = vrot.slane %v442, %v1682
    %v1684 = vsel %vm1432, %v1683, %v1679
    %v1685 = vlaneseq
    %v1686 = vshrl.u32 %v1685, 7
    %v1687 = vsub.s32 %v1434, %v1686
    %v1688 = vrot.slane %v445, %v1687
    %v1689 = vsel %vm1439, %v1688, %v1684
    %v1690 = vlaneseq
    %v1691 = vshrl.u32 %v1690, 7
    %v1692 = vsub.s32 %v1441, %v1691
    %v1693 = vrot.slane %v448, %v1692
    %v1694 = vsel %vm1446, %v1693, %v1689
    %v1695 = vlaneseq
    %v1696 = vshrl.u32 %v1695, 7
    %v1697 = vsub.s32 %v1448, %v1696
    %v1698 = vrot.slane %v451, %v1697
    %v1699 = vsel %vm1453, %v1698, %v1694
    %v1700 = vlaneseq
    %v1701 = vshrl.u32 %v1700, 7
    %v1702 = vsub.s32 %v1455, %v1701
    %v1703 = vrot.slane %v454, %v1702
    %v1704 = vsel %vm1460, %v1703, %v1699
    %v1705 = vlaneseq
    %v1706 = vshrl.u32 %v1705, 7
    %v1707 = vsub.s32 %v1462, %v1706
    %v1708 = vrot.slane %v457, %v1707
    %v1709 = vsel %vm1467, %v1708, %v1704
    %v1710 = vlaneseq
    %v1711 = vshrl.u32 %v1710, 7
    %v1712 = vsub.s32 %v1469, %v1711
    %v1713 = vrot.slane %v460, %v1712
    %v1714 = vsel %vm1474, %v1713, %v1709
    %v1715 = vlaneseq
    %v1716 = vshrl.u32 %v1715, 7
    %v1717 = vsub.s32 %v1476, %v1716
    %v1718 = vrot.slane %v463, %v1717
    %v1719 = vsel %vm1481, %v1718, %v1714
    %v1720 = vlaneseq
    %v1721 = vshrl.u32 %v1720, 7
    %v1722 = vsub.s32 %v1373, %v1721
    %v1723 = vrot.slane %v466, %v1722
    %v1724 = vlaneseq
    %v1725 = vshrl.u32 %v1724, 7
    %v1726 = vsub.s32 %v1378, %v1725
    %v1727 = vrot.slane %v469, %v1726
    %v1728 = vsel %vm1383, %v1727, %v1723
    %v1729 = vlaneseq
    %v1730 = vshrl.u32 %v1729, 7
    %v1731 = vsub.s32 %v1385, %v1730
    %v1732 = vrot.slane %v472, %v1731
    %v1733 = vsel %vm1390, %v1732, %v1728
    %v1734 = vlaneseq
    %v1735 = vshrl.u32 %v1734, 7
    %v1736 = vsub.s32 %v1392, %v1735
    %v1737 = vrot.slane %v475, %v1736
    %v1738 = vsel %vm1397, %v1737, %v1733
    %v1739 = vlaneseq
    %v1740 = vshrl.u32 %v1739, 7
    %v1741 = vsub.s32 %v1399, %v1740
    %v1742 = vrot.slane %v478, %v1741
    %v1743 = vsel %vm1404, %v1742, %v1738
    %v1744 = vlaneseq
    %v1745 = vshrl.u32 %v1744, 7
    %v1746 = vsub.s32 %v1406, %v1745
    %v1747 = vrot.slane %v481, %v1746
    %v1748 = vsel %vm1411, %v1747, %v1743
    %v1749 = vlaneseq
    %v1750 = vshrl.u32 %v1749, 7
    %v1751 = vsub.s32 %v1413, %v1750
    %v1752 = vrot.slane %v484, %v1751
    %v1753 = vsel %vm1418, %v1752, %v1748
    %v1754 = vlaneseq
    %v1755 = vshrl.u32 %v1754, 7
    %v1756 = vsub.s32 %v1420, %v1755
    %v1757 = vrot.slane %v487, %v1756
    %v1758 = vsel %vm1425, %v1757, %v1753
    %v1759 = vlaneseq
    %v1760 = vshrl.u32 %v1759, 7
    %v1761 = vsub.s32 %v1427, %v1760
    %v1762 = vrot.slane %v490, %v1761
    %v1763 = vsel %vm1432, %v1762, %v1758
    %v1764 = vlaneseq
    %v1765 = vshrl.u32 %v1764, 7
    %v1766 = vsub.s32 %v1434, %v1765
    %v1767 = vrot.slane %v493, %v1766
    %v1768 = vsel %vm1439, %v1767, %v1763
    %v1769 = vlaneseq
    %v1770 = vshrl.u32 %v1769, 7
    %v1771 = vsub.s32 %v1441, %v1770
    %v1772 = vrot.slane %v496, %v1771
    %v1773 = vsel %vm1446, %v1772, %v1768
    %v1774 = vlaneseq
    %v1775 = vshrl.u32 %v1774, 7
    %v1776 = vsub.s32 %v1448, %v1775
    %v1777 = vrot.slane %v499, %v1776
    %v1778 = vsel %vm1453, %v1777, %v1773
    %v1779 = vlaneseq
    %v1780 = vshrl.u32 %v1779, 7
    %v1781 = vsub.s32 %v1455, %v1780
    %v1782 = vrot.slane %v502, %v1781
    %v1783 = vsel %vm1460, %v1782, %v1778
    %v1784 = vlaneseq
    %v1785 = vshrl.u32 %v1784, 7
    %v1786 = vsub.s32 %v1462, %v1785
    %v1787 = vrot.slane %v505, %v1786
    %v1788 = vsel %vm1467, %v1787, %v1783
    %v1789 = vlaneseq
    %v1790 = vshrl.u32 %v1789, 7
    %v1791 = vsub.s32 %v1469, %v1790
    %v1792 = vrot.slane %v508, %v1791
    %v1793 = vsel %vm1474, %v1792, %v1788
    %v1794 = vlaneseq
    %v1795 = vshrl.u32 %v1794, 7
    %v1796 = vsub.s32 %v1476, %v1795
    %v1797 = vrot.slane %v511, %v1796
    %v1798 = vsel %vm1481, %v1797, %v1793
    %v1799 = vlaneseq
    %v1800 = vshrl.u32 %v1799, 7
    %v1801 = vsub.s32 %v1373, %v1800
    %v1802 = vrot.slane %v514, %v1801
    %v1803 = vlaneseq
    %v1804 = vshrl.u32 %v1803, 7
    %v1805 = vsub.s32 %v1378, %v1804
    %v1806 = vrot.slane %v517, %v1805
    %v1807 = vsel %vm1383, %v1806, %v1802
    %v1808 = vlaneseq
    %v1809 = vshrl.u32 %v1808, 7
    %v1810 = vsub.s32 %v1385, %v1809
    %v1811 = vrot.slane %v520, %v1810
    %v1812 = vsel %vm1390, %v1811, %v1807
    %v1813 = vlaneseq
    %v1814 = vshrl.u32 %v1813, 7
    %v1815 = vsub.s32 %v1392, %v1814
    %v1816 = vrot.slane %v523, %v1815
    %v1817 = vsel %vm1397, %v1816, %v1812
    %v1818 = vlaneseq
    %v1819 = vshrl.u32 %v1818, 7
    %v1820 = vsub.s32 %v1399, %v1819
    %v1821 = vrot.slane %v526, %v1820
    %v1822 = vsel %vm1404, %v1821, %v1817
    %v1823 = vlaneseq
    %v1824 = vshrl.u32 %v1823, 7
    %v1825 = vsub.s32 %v1406, %v1824
    %v1826 = vrot.slane %v529, %v1825
    %v1827 = vsel %vm1411, %v1826, %v1822
    %v1828 = vlaneseq
    %v1829 = vshrl.u32 %v1828, 7
    %v1830 = vsub.s32 %v1413, %v1829
    %v1831 = vrot.slane %v532, %v1830
    %v1832 = vsel %vm1418, %v1831, %v1827
    %v1833 = vlaneseq
    %v1834 = vshrl.u32 %v1833, 7
    %v1835 = vsub.s32 %v1420, %v1834
    %v1836 = vrot.slane %v535, %v1835
    %v1837 = vsel %vm1425, %v1836, %v1832
    %v1838 = vlaneseq
    %v1839 = vshrl.u32 %v1838, 7
    %v1840 = vsub.s32 %v1427, %v1839
    %v1841 = vrot.slane %v538, %v1840
    %v1842 = vsel %vm1432, %v1841, %v1837
    %v1843 = vlaneseq
    %v1844 = vshrl.u32 %v1843, 7
    %v1845 = vsub.s32 %v1434, %v1844
    %v1846 = vrot.slane %v541, %v1845
    %v1847 = vsel %vm1439, %v1846, %v1842
    %v1848 = vlaneseq
    %v1849 = vshrl.u32 %v1848, 7
    %v1850 = vsub.s32 %v1441, %v1849
    %v1851 = vrot.slane %v544, %v1850
    %v1852 = vsel %vm1446, %v1851, %v1847
    %v1853 = vlaneseq
    %v1854 = vshrl.u32 %v1853, 7
    %v1855 = vsub.s32 %v1448, %v1854
    %v1856 = vrot.slane %v547, %v1855
    %v1857 = vsel %vm1453, %v1856, %v1852
    %v1858 = vlaneseq
    %v1859 = vshrl.u32 %v1858, 7
    %v1860 = vsub.s32 %v1455, %v1859
    %v1861 = vrot.slane %v550, %v1860
    %v1862 = vsel %vm1460, %v1861, %v1857
    %v1863 = vlaneseq
    %v1864 = vshrl.u32 %v1863, 7
    %v1865 = vsub.s32 %v1462, %v1864
    %v1866 = vrot.slane %v553, %v1865
    %v1867 = vsel %vm1467, %v1866, %v1862
    %v1868 = vlaneseq
    %v1869 = vshrl.u32 %v1868, 7
    %v1870 = vsub.s32 %v1469, %v1869
    %v1871 = vrot.slane %v556, %v1870
    %v1872 = vsel %vm1474, %v1871, %v1867
    %v1873 = vlaneseq
    %v1874 = vshrl.u32 %v1873, 7
    %v1875 = vsub.s32 %v1476, %v1874
    %v1876 = vrot.slane %v559, %v1875
    %v1877 = vsel %vm1481, %v1876, %v1872
    %v1878 = vlaneseq
    %v1879 = vshrl.u32 %v1878, 7
    %v1880 = vsub.s32 %v1373, %v1879
    %v1881 = vrot.slane %v562, %v1880
    %v1882 = vlaneseq
    %v1883 = vshrl.u32 %v1882, 7
    %v1884 = vsub.s32 %v1378, %v1883
    %v1885 = vrot.slane %v565, %v1884
    %v1886 = vsel %vm1383, %v1885, %v1881
    %v1887 = vlaneseq
    %v1888 = vshrl.u32 %v1887, 7
    %v1889 = vsub.s32 %v1385, %v1888
    %v1890 = vrot.slane %v568, %v1889
    %v1891 = vsel %vm1390, %v1890, %v1886
    %v1892 = vlaneseq
    %v1893 = vshrl.u32 %v1892, 7
    %v1894 = vsub.s32 %v1392, %v1893
    %v1895 = vrot.slane %v571, %v1894
    %v1896 = vsel %vm1397, %v1895, %v1891
    %v1897 = vlaneseq
    %v1898 = vshrl.u32 %v1897, 7
    %v1899 = vsub.s32 %v1399, %v1898
    %v1900 = vrot.slane %v574, %v1899
    %v1901 = vsel %vm1404, %v1900, %v1896
    %v1902 = vlaneseq
    %v1903 = vshrl.u32 %v1902, 7
    %v1904 = vsub.s32 %v1406, %v1903
    %v1905 = vrot.slane %v577, %v1904
    %v1906 = vsel %vm1411, %v1905, %v1901
    %v1907 = vlaneseq
    %v1908 = vshrl.u32 %v1907, 7
    %v1909 = vsub.s32 %v1413, %v1908
    %v1910 = vrot.slane %v580, %v1909
    %v1911 = vsel %vm1418, %v1910, %v1906
    %v1912 = vlaneseq
    %v1913 = vshrl.u32 %v1912, 7
    %v1914 = vsub.s32 %v1420, %v1913
    %v1915 = vrot.slane %v583, %v1914
    %v1916 = vsel %vm1425, %v1915, %v1911
    %v1917 = vlaneseq
    %v1918 = vshrl.u32 %v1917, 7
    %v1919 = vsub.s32 %v1427, %v1918
    %v1920 = vrot.slane %v586, %v1919
    %v1921 = vsel %vm1432, %v1920, %v1916
    %v1922 = vlaneseq
    %v1923 = vshrl.u32 %v1922, 7
    %v1924 = vsub.s32 %v1434, %v1923
    %v1925 = vrot.slane %v589, %v1924
    %v1926 = vsel %vm1439, %v1925, %v1921
    %v1927 = vlaneseq
    %v1928 = vshrl.u32 %v1927, 7
    %v1929 = vsub.s32 %v1441, %v1928
    %v1930 = vrot.slane %v592, %v1929
    %v1931 = vsel %vm1446, %v1930, %v1926
    %v1932 = vlaneseq
    %v1933 = vshrl.u32 %v1932, 7
    %v1934 = vsub.s32 %v1448, %v1933
    %v1935 = vrot.slane %v595, %v1934
    %v1936 = vsel %vm1453, %v1935, %v1931
    %v1937 = vlaneseq
    %v1938 = vshrl.u32 %v1937, 7
    %v1939 = vsub.s32 %v1455, %v1938
    %v1940 = vrot.slane %v598, %v1939
    %v1941 = vsel %vm1460, %v1940, %v1936
    %v1942 = vlaneseq
    %v1943 = vshrl.u32 %v1942, 7
    %v1944 = vsub.s32 %v1462, %v1943
    %v1945 = vrot.slane %v601, %v1944
    %v1946 = vsel %vm1467, %v1945, %v1941
    %v1947 = vlaneseq
    %v1948 = vshrl.u32 %v1947, 7
    %v1949 = vsub.s32 %v1469, %v1948
    %v1950 = vrot.slane %v604, %v1949
    %v1951 = vsel %vm1474, %v1950, %v1946
    %v1952 = vlaneseq
    %v1953 = vshrl.u32 %v1952, 7
    %v1954 = vsub.s32 %v1476, %v1953
    %v1955 = vrot.slane %v607, %v1954
    %v1956 = vsel %vm1481, %v1955, %v1951
    %v1957 = vlaneseq
    %v1958 = vshrl.u32 %v1957, 7
    %v1959 = vsub.s32 %v1373, %v1958
    %v1960 = vrot.slane %v610, %v1959
    %v1961 = vlaneseq
    %v1962 = vshrl.u32 %v1961, 7
    %v1963 = vsub.s32 %v1378, %v1962
    %v1964 = vrot.slane %v613, %v1963
    %v1965 = vsel %vm1383, %v1964, %v1960
    %v1966 = vlaneseq
    %v1967 = vshrl.u32 %v1966, 7
    %v1968 = vsub.s32 %v1385, %v1967
    %v1969 = vrot.slane %v616, %v1968
    %v1970 = vsel %vm1390, %v1969, %v1965
    %v1971 = vlaneseq
    %v1972 = vshrl.u32 %v1971, 7
    %v1973 = vsub.s32 %v1392, %v1972
    %v1974 = vrot.slane %v619, %v1973
    %v1975 = vsel %vm1397, %v1974, %v1970
    %v1976 = vlaneseq
    %v1977 = vshrl.u32 %v1976, 7
    %v1978 = vsub.s32 %v1399, %v1977
    %v1979 = vrot.slane %v622, %v1978
    %v1980 = vsel %vm1404, %v1979, %v1975
    %v1981 = vlaneseq
    %v1982 = vshrl.u32 %v1981, 7
    %v1983 = vsub.s32 %v1406, %v1982
    %v1984 = vrot.slane %v625, %v1983
    %v1985 = vsel %vm1411, %v1984, %v1980
    %v1986 = vlaneseq
    %v1987 = vshrl.u32 %v1986, 7
    %v1988 = vsub.s32 %v1413, %v1987
    %v1989 = vrot.slane %v628, %v1988
    %v1990 = vsel %vm1418, %v1989, %v1985
    %v1991 = vlaneseq
    %v1992 = vshrl.u32 %v1991, 7
    %v1993 = vsub.s32 %v1420, %v1992
    %v1994 = vrot.slane %v631, %v1993
    %v1995 = vsel %vm1425, %v1994, %v1990
    %v1996 = vlaneseq
    %v1997 = vshrl.u32 %v1996, 7
    %v1998 = vsub.s32 %v1427, %v1997
    %v1999 = vrot.slane %v634, %v1998
    %v2000 = vsel %vm1432, %v1999, %v1995
    %v2001 = vlaneseq
    %v2002 = vshrl.u32 %v2001, 7
    %v2003 = vsub.s32 %v1434, %v2002
    %v2004 = vrot.slane %v637, %v2003
    %v2005 = vsel %vm1439, %v2004, %v2000
    %v2006 = vlaneseq
    %v2007 = vshrl.u32 %v2006, 7
    %v2008 = vsub.s32 %v1441, %v2007
    %v2009 = vrot.slane %v640, %v2008
    %v2010 = vsel %vm1446, %v2009, %v2005
    %v2011 = vlaneseq
    %v2012 = vshrl.u32 %v2011, 7
    %v2013 = vsub.s32 %v1448, %v2012
    %v2014 = vrot.slane %v643, %v2013
    %v2015 = vsel %vm1453, %v2014, %v2010
    %v2016 = vlaneseq
    %v2017 = vshrl.u32 %v2016, 7
    %v2018 = vsub.s32 %v1455, %v2017
    %v2019 = vrot.slane %v646, %v2018
    %v2020 = vsel %vm1460, %v2019, %v2015
    %v2021 = vlaneseq
    %v2022 = vshrl.u32 %v2021, 7
    %v2023 = vsub.s32 %v1462, %v2022
    %v2024 = vrot.slane %v649, %v2023
    %v2025 = vsel %vm1467, %v2024, %v2020
    %v2026 = vlaneseq
    %v2027 = vshrl.u32 %v2026, 7
    %v2028 = vsub.s32 %v1469, %v2027
    %v2029 = vrot.slane %v652, %v2028
    %v2030 = vsel %vm1474, %v2029, %v2025
    %v2031 = vlaneseq
    %v2032 = vshrl.u32 %v2031, 7
    %v2033 = vsub.s32 %v1476, %v2032
    %v2034 = vrot.slane %v655, %v2033
    %v2035 = vsel %vm1481, %v2034, %v2030
    %v2036 = vlaneseq
    %v2037 = vshrl.u32 %v2036, 7
    %v2038 = vsub.s32 %v1373, %v2037
    %v2039 = vrot.slane %v658, %v2038
    %v2040 = vlaneseq
    %v2041 = vshrl.u32 %v2040, 7
    %v2042 = vsub.s32 %v1378, %v2041
    %v2043 = vrot.slane %v661, %v2042
    %v2044 = vsel %vm1383, %v2043, %v2039
    %v2045 = vlaneseq
    %v2046 = vshrl.u32 %v2045, 7
    %v2047 = vsub.s32 %v1385, %v2046
    %v2048 = vrot.slane %v664, %v2047
    %v2049 = vsel %vm1390, %v2048, %v2044
    %v2050 = vlaneseq
    %v2051 = vshrl.u32 %v2050, 7
    %v2052 = vsub.s32 %v1392, %v2051
    %v2053 = vrot.slane %v667, %v2052
    %v2054 = vsel %vm1397, %v2053, %v2049
    %v2055 = vlaneseq
    %v2056 = vshrl.u32 %v2055, 7
    %v2057 = vsub.s32 %v1399, %v2056
    %v2058 = vrot.slane %v670, %v2057
    %v2059 = vsel %vm1404, %v2058, %v2054
    %v2060 = vlaneseq
    %v2061 = vshrl.u32 %v2060, 7
    %v2062 = vsub.s32 %v1406, %v2061
    %v2063 = vrot.slane %v673, %v2062
    %v2064 = vsel %vm1411, %v2063, %v2059
    %v2065 = vlaneseq
    %v2066 = vshrl.u32 %v2065, 7
    %v2067 = vsub.s32 %v1413, %v2066
    %v2068 = vrot.slane %v676, %v2067
    %v2069 = vsel %vm1418, %v2068, %v2064
    %v2070 = vlaneseq
    %v2071 = vshrl.u32 %v2070, 7
    %v2072 = vsub.s32 %v1420, %v2071
    %v2073 = vrot.slane %v679, %v2072
    %v2074 = vsel %vm1425, %v2073, %v2069
    %v2075 = vlaneseq
    %v2076 = vshrl.u32 %v2075, 7
    %v2077 = vsub.s32 %v1427, %v2076
    %v2078 = vrot.slane %v682, %v2077
    %v2079 = vsel %vm1432, %v2078, %v2074
    %v2080 = vlaneseq
    %v2081 = vshrl.u32 %v2080, 7
    %v2082 = vsub.s32 %v1434, %v2081
    %v2083 = vrot.slane %v685, %v2082
    %v2084 = vsel %vm1439, %v2083, %v2079
    %v2085 = vlaneseq
    %v2086 = vshrl.u32 %v2085, 7
    %v2087 = vsub.s32 %v1441, %v2086
    %v2088 = vrot.slane %v688, %v2087
    %v2089 = vsel %vm1446, %v2088, %v2084
    %v2090 = vlaneseq
    %v2091 = vshrl.u32 %v2090, 7
    %v2092 = vsub.s32 %v1448, %v2091
    %v2093 = vrot.slane %v691, %v2092
    %v2094 = vsel %vm1453, %v2093, %v2089
    %v2095 = vlaneseq
    %v2096 = vshrl.u32 %v2095, 7
    %v2097 = vsub.s32 %v1455, %v2096
    %v2098 = vrot.slane %v694, %v2097
    %v2099 = vsel %vm1460, %v2098, %v2094
    %v2100 = vlaneseq
    %v2101 = vshrl.u32 %v2100, 7
    %v2102 = vsub.s32 %v1462, %v2101
    %v2103 = vrot.slane %v697, %v2102
    %v2104 = vsel %vm1467, %v2103, %v2099
    %v2105 = vlaneseq
    %v2106 = vshrl.u32 %v2105, 7
    %v2107 = vsub.s32 %v1469, %v2106
    %v2108 = vrot.slane %v700, %v2107
    %v2109 = vsel %vm1474, %v2108, %v2104
    %v2110 = vlaneseq
    %v2111 = vshrl.u32 %v2110, 7
    %v2112 = vsub.s32 %v1476, %v2111
    %v2113 = vrot.slane %v703, %v2112
    %v2114 = vsel %vm1481, %v2113, %v2109
    %v2115 = vlaneseq
    %v2116 = vshrl.u32 %v2115, 7
    %v2117 = vsub.s32 %v1373, %v2116
    %v2118 = vrot.slane %v706, %v2117
    %v2119 = vlaneseq
    %v2120 = vshrl.u32 %v2119, 7
    %v2121 = vsub.s32 %v1378, %v2120
    %v2122 = vrot.slane %v709, %v2121
    %v2123 = vsel %vm1383, %v2122, %v2118
    %v2124 = vlaneseq
    %v2125 = vshrl.u32 %v2124, 7
    %v2126 = vsub.s32 %v1385, %v2125
    %v2127 = vrot.slane %v712, %v2126
    %v2128 = vsel %vm1390, %v2127, %v2123
    %v2129 = vlaneseq
    %v2130 = vshrl.u32 %v2129, 7
    %v2131 = vsub.s32 %v1392, %v2130
    %v2132 = vrot.slane %v715, %v2131
    %v2133 = vsel %vm1397, %v2132, %v2128
    %v2134 = vlaneseq
    %v2135 = vshrl.u32 %v2134, 7
    %v2136 = vsub.s32 %v1399, %v2135
    %v2137 = vrot.slane %v718, %v2136
    %v2138 = vsel %vm1404, %v2137, %v2133
    %v2139 = vlaneseq
    %v2140 = vshrl.u32 %v2139, 7
    %v2141 = vsub.s32 %v1406, %v2140
    %v2142 = vrot.slane %v721, %v2141
    %v2143 = vsel %vm1411, %v2142, %v2138
    %v2144 = vlaneseq
    %v2145 = vshrl.u32 %v2144, 7
    %v2146 = vsub.s32 %v1413, %v2145
    %v2147 = vrot.slane %v724, %v2146
    %v2148 = vsel %vm1418, %v2147, %v2143
    %v2149 = vlaneseq
    %v2150 = vshrl.u32 %v2149, 7
    %v2151 = vsub.s32 %v1420, %v2150
    %v2152 = vrot.slane %v727, %v2151
    %v2153 = vsel %vm1425, %v2152, %v2148
    %v2154 = vlaneseq
    %v2155 = vshrl.u32 %v2154, 7
    %v2156 = vsub.s32 %v1427, %v2155
    %v2157 = vrot.slane %v730, %v2156
    %v2158 = vsel %vm1432, %v2157, %v2153
    %v2159 = vlaneseq
    %v2160 = vshrl.u32 %v2159, 7
    %v2161 = vsub.s32 %v1434, %v2160
    %v2162 = vrot.slane %v733, %v2161
    %v2163 = vsel %vm1439, %v2162, %v2158
    %v2164 = vlaneseq
    %v2165 = vshrl.u32 %v2164, 7
    %v2166 = vsub.s32 %v1441, %v2165
    %v2167 = vrot.slane %v736, %v2166
    %v2168 = vsel %vm1446, %v2167, %v2163
    %v2169 = vlaneseq
    %v2170 = vshrl.u32 %v2169, 7
    %v2171 = vsub.s32 %v1448, %v2170
    %v2172 = vrot.slane %v739, %v2171
    %v2173 = vsel %vm1453, %v2172, %v2168
    %v2174 = vlaneseq
    %v2175 = vshrl.u32 %v2174, 7
    %v2176 = vsub.s32 %v1455, %v2175
    %v2177 = vrot.slane %v742, %v2176
    %v2178 = vsel %vm1460, %v2177, %v2173
    %v2179 = vlaneseq
    %v2180 = vshrl.u32 %v2179, 7
    %v2181 = vsub.s32 %v1462, %v2180
    %v2182 = vrot.slane %v745, %v2181
    %v2183 = vsel %vm1467, %v2182, %v2178
    %v2184 = vlaneseq
    %v2185 = vshrl.u32 %v2184, 7
    %v2186 = vsub.s32 %v1469, %v2185
    %v2187 = vrot.slane %v748, %v2186
    %v2188 = vsel %vm1474, %v2187, %v2183
    %v2189 = vlaneseq
    %v2190 = vshrl.u32 %v2189, 7
    %v2191 = vsub.s32 %v1476, %v2190
    %v2192 = vrot.slane %v751, %v2191
    %v2193 = vsel %vm1481, %v2192, %v2188
    %v2194 = vlaneseq
    %v2195 = vshrl.u32 %v2194, 7
    %v2196 = vsub.s32 %v1373, %v2195
    %v2197 = vrot.slane %v754, %v2196
    %v2198 = vlaneseq
    %v2199 = vshrl.u32 %v2198, 7
    %v2200 = vsub.s32 %v1378, %v2199
    %v2201 = vrot.slane %v757, %v2200
    %v2202 = vsel %vm1383, %v2201, %v2197
    %v2203 = vlaneseq
    %v2204 = vshrl.u32 %v2203, 7
    %v2205 = vsub.s32 %v1385, %v2204
    %v2206 = vrot.slane %v760, %v2205
    %v2207 = vsel %vm1390, %v2206, %v2202
    %v2208 = vlaneseq
    %v2209 = vshrl.u32 %v2208, 7
    %v2210 = vsub.s32 %v1392, %v2209
    %v2211 = vrot.slane %v763, %v2210
    %v2212 = vsel %vm1397, %v2211, %v2207
    %v2213 = vlaneseq
    %v2214 = vshrl.u32 %v2213, 7
    %v2215 = vsub.s32 %v1399, %v2214
    %v2216 = vrot.slane %v766, %v2215
    %v2217 = vsel %vm1404, %v2216, %v2212
    %v2218 = vlaneseq
    %v2219 = vshrl.u32 %v2218, 7
    %v2220 = vsub.s32 %v1406, %v2219
    %v2221 = vrot.slane %v769, %v2220
    %v2222 = vsel %vm1411, %v2221, %v2217
    %v2223 = vlaneseq
    %v2224 = vshrl.u32 %v2223, 7
    %v2225 = vsub.s32 %v1413, %v2224
    %v2226 = vrot.slane %v772, %v2225
    %v2227 = vsel %vm1418, %v2226, %v2222
    %v2228 = vlaneseq
    %v2229 = vshrl.u32 %v2228, 7
    %v2230 = vsub.s32 %v1420, %v2229
    %v2231 = vrot.slane %v775, %v2230
    %v2232 = vsel %vm1425, %v2231, %v2227
    %v2233 = vlaneseq
    %v2234 = vshrl.u32 %v2233, 7
    %v2235 = vsub.s32 %v1427, %v2234
    %v2236 = vrot.slane %v778, %v2235
    %v2237 = vsel %vm1432, %v2236, %v2232
    %v2238 = vlaneseq
    %v2239 = vshrl.u32 %v2238, 7
    %v2240 = vsub.s32 %v1434, %v2239
    %v2241 = vrot.slane %v781, %v2240
    %v2242 = vsel %vm1439, %v2241, %v2237
    %v2243 = vlaneseq
    %v2244 = vshrl.u32 %v2243, 7
    %v2245 = vsub.s32 %v1441, %v2244
    %v2246 = vrot.slane %v784, %v2245
    %v2247 = vsel %vm1446, %v2246, %v2242
    %v2248 = vlaneseq
    %v2249 = vshrl.u32 %v2248, 7
    %v2250 = vsub.s32 %v1448, %v2249
    %v2251 = vrot.slane %v787, %v2250
    %v2252 = vsel %vm1453, %v2251, %v2247
    %v2253 = vlaneseq
    %v2254 = vshrl.u32 %v2253, 7
    %v2255 = vsub.s32 %v1455, %v2254
    %v2256 = vrot.slane %v790, %v2255
    %v2257 = vsel %vm1460, %v2256, %v2252
    %v2258 = vlaneseq
    %v2259 = vshrl.u32 %v2258, 7
    %v2260 = vsub.s32 %v1462, %v2259
    %v2261 = vrot.slane %v793, %v2260
    %v2262 = vsel %vm1467, %v2261, %v2257
    %v2263 = vlaneseq
    %v2264 = vshrl.u32 %v2263, 7
    %v2265 = vsub.s32 %v1469, %v2264
    %v2266 = vrot.slane %v796, %v2265
    %v2267 = vsel %vm1474, %v2266, %v2262
    %v2268 = vlaneseq
    %v2269 = vshrl.u32 %v2268, 7
    %v2270 = vsub.s32 %v1476, %v2269
    %v2271 = vrot.slane %v799, %v2270
    %v2272 = vsel %vm1481, %v2271, %v2267
    %v2273 = vlaneseq
    %v2274 = vshrl.u32 %v2273, 7
    %v2275 = vsub.s32 %v1373, %v2274
    %v2276 = vrot.slane %v802, %v2275
    %v2277 = vlaneseq
    %v2278 = vshrl.u32 %v2277, 7
    %v2279 = vsub.s32 %v1378, %v2278
    %v2280 = vrot.slane %v805, %v2279
    %v2281 = vsel %vm1383, %v2280, %v2276
    %v2282 = vlaneseq
    %v2283 = vshrl.u32 %v2282, 7
    %v2284 = vsub.s32 %v1385, %v2283
    %v2285 = vrot.slane %v808, %v2284
    %v2286 = vsel %vm1390, %v2285, %v2281
    %v2287 = vlaneseq
    %v2288 = vshrl.u32 %v2287, 7
    %v2289 = vsub.s32 %v1392, %v2288
    %v2290 = vrot.slane %v811, %v2289
    %v2291 = vsel %vm1397, %v2290, %v2286
    %v2292 = vlaneseq
    %v2293 = vshrl.u32 %v2292, 7
    %v2294 = vsub.s32 %v1399, %v2293
    %v2295 = vrot.slane %v814, %v2294
    %v2296 = vsel %vm1404, %v2295, %v2291
    %v2297 = vlaneseq
    %v2298 = vshrl.u32 %v2297, 7
    %v2299 = vsub.s32 %v1406, %v2298
    %v2300 = vrot.slane %v817, %v2299
    %v2301 = vsel %vm1411, %v2300, %v2296
    %v2302 = vlaneseq
    %v2303 = vshrl.u32 %v2302, 7
    %v2304 = vsub.s32 %v1413, %v2303
    %v2305 = vrot.slane %v820, %v2304
    %v2306 = vsel %vm1418, %v2305, %v2301
    %v2307 = vlaneseq
    %v2308 = vshrl.u32 %v2307, 7
    %v2309 = vsub.s32 %v1420, %v2308
    %v2310 = vrot.slane %v823, %v2309
    %v2311 = vsel %vm1425, %v2310, %v2306
    %v2312 = vlaneseq
    %v2313 = vshrl.u32 %v2312, 7
    %v2314 = vsub.s32 %v1427, %v2313
    %v2315 = vrot.slane %v826, %v2314
    %v2316 = vsel %vm1432, %v2315, %v2311
    %v2317 = vlaneseq
    %v2318 = vshrl.u32 %v2317, 7
    %v2319 = vsub.s32 %v1434, %v2318
    %v2320 = vrot.slane %v829, %v2319
    %v2321 = vsel %vm1439, %v2320, %v2316
    %v2322 = vlaneseq
    %v2323 = vshrl.u32 %v2322, 7
    %v2324 = vsub.s32 %v1441, %v2323
    %v2325 = vrot.slane %v832, %v2324
    %v2326 = vsel %vm1446, %v2325, %v2321
    %v2327 = vlaneseq
    %v2328 = vshrl.u32 %v2327, 7
    %v2329 = vsub.s32 %v1448, %v2328
    %v2330 = vrot.slane %v835, %v2329
    %v2331 = vsel %vm1453, %v2330, %v2326
    %v2332 = vlaneseq
    %v2333 = vshrl.u32 %v2332, 7
    %v2334 = vsub.s32 %v1455, %v2333
    %v2335 = vrot.slane %v838, %v2334
    %v2336 = vsel %vm1460, %v2335, %v2331
    %v2337 = vlaneseq
    %v2338 = vshrl.u32 %v2337, 7
    %v2339 = vsub.s32 %v1462, %v2338
    %v2340 = vrot.slane %v841, %v2339
    %v2341 = vsel %vm1467, %v2340, %v2336
    %v2342 = vlaneseq
    %v2343 = vshrl.u32 %v2342, 7
    %v2344 = vsub.s32 %v1469, %v2343
    %v2345 = vrot.slane %v844, %v2344
    %v2346 = vsel %vm1474, %v2345, %v2341
    %v2347 = vlaneseq
    %v2348 = vshrl.u32 %v2347, 7
    %v2349 = vsub.s32 %v1476, %v2348
    %v2350 = vrot.slane %v847, %v2349
    %v2351 = vsel %vm1481, %v2350, %v2346
    %v2352 = vlaneseq
    %v2353 = vshrl.u32 %v2352, 7
    %v2354 = vsub.s32 %v1373, %v2353
    %v2355 = vrot.slane %v850, %v2354
    %v2356 = vlaneseq
    %v2357 = vshrl.u32 %v2356, 7
    %v2358 = vsub.s32 %v1378, %v2357
    %v2359 = vrot.slane %v853, %v2358
    %v2360 = vsel %vm1383, %v2359, %v2355
    %v2361 = vlaneseq
    %v2362 = vshrl.u32 %v2361, 7
    %v2363 = vsub.s32 %v1385, %v2362
    %v2364 = vrot.slane %v856, %v2363
    %v2365 = vsel %vm1390, %v2364, %v2360
    %v2366 = vlaneseq
    %v2367 = vshrl.u32 %v2366, 7
    %v2368 = vsub.s32 %v1392, %v2367
    %v2369 = vrot.slane %v859, %v2368
    %v2370 = vsel %vm1397, %v2369, %v2365
    %v2371 = vlaneseq
    %v2372 = vshrl.u32 %v2371, 7
    %v2373 = vsub.s32 %v1399, %v2372
    %v2374 = vrot.slane %v862, %v2373
    %v2375 = vsel %vm1404, %v2374, %v2370
    %v2376 = vlaneseq
    %v2377 = vshrl.u32 %v2376, 7
    %v2378 = vsub.s32 %v1406, %v2377
    %v2379 = vrot.slane %v865, %v2378
    %v2380 = vsel %vm1411, %v2379, %v2375
    %v2381 = vlaneseq
    %v2382 = vshrl.u32 %v2381, 7
    %v2383 = vsub.s32 %v1413, %v2382
    %v2384 = vrot.slane %v868, %v2383
    %v2385 = vsel %vm1418, %v2384, %v2380
    %v2386 = vlaneseq
    %v2387 = vshrl.u32 %v2386, 7
    %v2388 = vsub.s32 %v1420, %v2387
    %v2389 = vrot.slane %v871, %v2388
    %v2390 = vsel %vm1425, %v2389, %v2385
    %v2391 = vlaneseq
    %v2392 = vshrl.u32 %v2391, 7
    %v2393 = vsub.s32 %v1427, %v2392
    %v2394 = vrot.slane %v874, %v2393
    %v2395 = vsel %vm1432, %v2394, %v2390
    %v2396 = vlaneseq
    %v2397 = vshrl.u32 %v2396, 7
    %v2398 = vsub.s32 %v1434, %v2397
    %v2399 = vrot.slane %v877, %v2398
    %v2400 = vsel %vm1439, %v2399, %v2395
    %v2401 = vlaneseq
    %v2402 = vshrl.u32 %v2401, 7
    %v2403 = vsub.s32 %v1441, %v2402
    %v2404 = vrot.slane %v880, %v2403
    %v2405 = vsel %vm1446, %v2404, %v2400
    %v2406 = vlaneseq
    %v2407 = vshrl.u32 %v2406, 7
    %v2408 = vsub.s32 %v1448, %v2407
    %v2409 = vrot.slane %v883, %v2408
    %v2410 = vsel %vm1453, %v2409, %v2405
    %v2411 = vlaneseq
    %v2412 = vshrl.u32 %v2411, 7
    %v2413 = vsub.s32 %v1455, %v2412
    %v2414 = vrot.slane %v886, %v2413
    %v2415 = vsel %vm1460, %v2414, %v2410
    %v2416 = vlaneseq
    %v2417 = vshrl.u32 %v2416, 7
    %v2418 = vsub.s32 %v1462, %v2417
    %v2419 = vrot.slane %v889, %v2418
    %v2420 = vsel %vm1467, %v2419, %v2415
    %v2421 = vlaneseq
    %v2422 = vshrl.u32 %v2421, 7
    %v2423 = vsub.s32 %v1469, %v2422
    %v2424 = vrot.slane %v892, %v2423
    %v2425 = vsel %vm1474, %v2424, %v2420
    %v2426 = vlaneseq
    %v2427 = vshrl.u32 %v2426, 7
    %v2428 = vsub.s32 %v1476, %v2427
    %v2429 = vrot.slane %v895, %v2428
    %v2430 = vsel %vm1481, %v2429, %v2425
    %v2431 = vlaneseq
    %v2432 = vshrl.u32 %v2431, 7
    %v2433 = vsub.s32 %v1373, %v2432
    %v2434 = vrot.slane %v898, %v2433
    %v2435 = vlaneseq
    %v2436 = vshrl.u32 %v2435, 7
    %v2437 = vsub.s32 %v1378, %v2436
    %v2438 = vrot.slane %v901, %v2437
    %v2439 = vsel %vm1383, %v2438, %v2434
    %v2440 = vlaneseq
    %v2441 = vshrl.u32 %v2440, 7
    %v2442 = vsub.s32 %v1385, %v2441
    %v2443 = vrot.slane %v904, %v2442
    %v2444 = vsel %vm1390, %v2443, %v2439
    %v2445 = vlaneseq
    %v2446 = vshrl.u32 %v2445, 7
    %v2447 = vsub.s32 %v1392, %v2446
    %v2448 = vrot.slane %v907, %v2447
    %v2449 = vsel %vm1397, %v2448, %v2444
    %v2450 = vlaneseq
    %v2451 = vshrl.u32 %v2450, 7
    %v2452 = vsub.s32 %v1399, %v2451
    %v2453 = vrot.slane %v910, %v2452
    %v2454 = vsel %vm1404, %v2453, %v2449
    %v2455 = vlaneseq
    %v2456 = vshrl.u32 %v2455, 7
    %v2457 = vsub.s32 %v1406, %v2456
    %v2458 = vrot.slane %v913, %v2457
    %v2459 = vsel %vm1411, %v2458, %v2454
    %v2460 = vlaneseq
    %v2461 = vshrl.u32 %v2460, 7
    %v2462 = vsub.s32 %v1413, %v2461
    %v2463 = vrot.slane %v916, %v2462
    %v2464 = vsel %vm1418, %v2463, %v2459
    %v2465 = vlaneseq
    %v2466 = vshrl.u32 %v2465, 7
    %v2467 = vsub.s32 %v1420, %v2466
    %v2468 = vrot.slane %v919, %v2467
    %v2469 = vsel %vm1425, %v2468, %v2464
    %v2470 = vlaneseq
    %v2471 = vshrl.u32 %v2470, 7
    %v2472 = vsub.s32 %v1427, %v2471
    %v2473 = vrot.slane %v922, %v2472
    %v2474 = vsel %vm1432, %v2473, %v2469
    %v2475 = vlaneseq
    %v2476 = vshrl.u32 %v2475, 7
    %v2477 = vsub.s32 %v1434, %v2476
    %v2478 = vrot.slane %v925, %v2477
    %v2479 = vsel %vm1439, %v2478, %v2474
    %v2480 = vlaneseq
    %v2481 = vshrl.u32 %v2480, 7
    %v2482 = vsub.s32 %v1441, %v2481
    %v2483 = vrot.slane %v928, %v2482
    %v2484 = vsel %vm1446, %v2483, %v2479
    %v2485 = vlaneseq
    %v2486 = vshrl.u32 %v2485, 7
    %v2487 = vsub.s32 %v1448, %v2486
    %v2488 = vrot.slane %v931, %v2487
    %v2489 = vsel %vm1453, %v2488, %v2484
    %v2490 = vlaneseq
    %v2491 = vshrl.u32 %v2490, 7
    %v2492 = vsub.s32 %v1455, %v2491
    %v2493 = vrot.slane %v934, %v2492
    %v2494 = vsel %vm1460, %v2493, %v2489
    %v2495 = vlaneseq
    %v2496 = vshrl.u32 %v2495, 7
    %v2497 = vsub.s32 %v1462, %v2496
    %v2498 = vrot.slane %v937, %v2497
    %v2499 = vsel %vm1467, %v2498, %v2494
    %v2500 = vlaneseq
    %v2501 = vshrl.u32 %v2500, 7
    %v2502 = vsub.s32 %v1469, %v2501
    %v2503 = vrot.slane %v940, %v2502
    %v2504 = vsel %vm1474, %v2503, %v2499
    %v2505 = vlaneseq
    %v2506 = vshrl.u32 %v2505, 7
    %v2507 = vsub.s32 %v1476, %v2506
    %v2508 = vrot.slane %v943, %v2507
    %v2509 = vsel %vm1481, %v2508, %v2504
    %v2510 = vlaneseq
    %v2511 = vshrl.u32 %v2510, 7
    %v2512 = vsub.s32 %v1373, %v2511
    %v2513 = vrot.slane %v946, %v2512
    %v2514 = vlaneseq
    %v2515 = vshrl.u32 %v2514, 7
    %v2516 = vsub.s32 %v1378, %v2515
    %v2517 = vrot.slane %v949, %v2516
    %v2518 = vsel %vm1383, %v2517, %v2513
    %v2519 = vlaneseq
    %v2520 = vshrl.u32 %v2519, 7
    %v2521 = vsub.s32 %v1385, %v2520
    %v2522 = vrot.slane %v952, %v2521
    %v2523 = vsel %vm1390, %v2522, %v2518
    %v2524 = vlaneseq
    %v2525 = vshrl.u32 %v2524, 7
    %v2526 = vsub.s32 %v1392, %v2525
    %v2527 = vrot.slane %v955, %v2526
    %v2528 = vsel %vm1397, %v2527, %v2523
    %v2529 = vlaneseq
    %v2530 = vshrl.u32 %v2529, 7
    %v2531 = vsub.s32 %v1399, %v2530
    %v2532 = vrot.slane %v958, %v2531
    %v2533 = vsel %vm1404, %v2532, %v2528
    %v2534 = vlaneseq
    %v2535 = vshrl.u32 %v2534, 7
    %v2536 = vsub.s32 %v1406, %v2535
    %v2537 = vrot.slane %v961, %v2536
    %v2538 = vsel %vm1411, %v2537, %v2533
    %v2539 = vlaneseq
    %v2540 = vshrl.u32 %v2539, 7
    %v2541 = vsub.s32 %v1413, %v2540
    %v2542 = vrot.slane %v964, %v2541
    %v2543 = vsel %vm1418, %v2542, %v2538
    %v2544 = vlaneseq
    %v2545 = vshrl.u32 %v2544, 7
    %v2546 = vsub.s32 %v1420, %v2545
    %v2547 = vrot.slane %v967, %v2546
    %v2548 = vsel %vm1425, %v2547, %v2543
    %v2549 = vlaneseq
    %v2550 = vshrl.u32 %v2549, 7
    %v2551 = vsub.s32 %v1427, %v2550
    %v2552 = vrot.slane %v970, %v2551
    %v2553 = vsel %vm1432, %v2552, %v2548
    %v2554 = vlaneseq
    %v2555 = vshrl.u32 %v2554, 7
    %v2556 = vsub.s32 %v1434, %v2555
    %v2557 = vrot.slane %v973, %v2556
    %v2558 = vsel %vm1439, %v2557, %v2553
    %v2559 = vlaneseq
    %v2560 = vshrl.u32 %v2559, 7
    %v2561 = vsub.s32 %v1441, %v2560
    %v2562 = vrot.slane %v976, %v2561
    %v2563 = vsel %vm1446, %v2562, %v2558
    %v2564 = vlaneseq
    %v2565 = vshrl.u32 %v2564, 7
    %v2566 = vsub.s32 %v1448, %v2565
    %v2567 = vrot.slane %v979, %v2566
    %v2568 = vsel %vm1453, %v2567, %v2563
    %v2569 = vlaneseq
    %v2570 = vshrl.u32 %v2569, 7
    %v2571 = vsub.s32 %v1455, %v2570
    %v2572 = vrot.slane %v982, %v2571
    %v2573 = vsel %vm1460, %v2572, %v2568
    %v2574 = vlaneseq
    %v2575 = vshrl.u32 %v2574, 7
    %v2576 = vsub.s32 %v1462, %v2575
    %v2577 = vrot.slane %v985, %v2576
    %v2578 = vsel %vm1467, %v2577, %v2573
    %v2579 = vlaneseq
    %v2580 = vshrl.u32 %v2579, 7
    %v2581 = vsub.s32 %v1469, %v2580
    %v2582 = vrot.slane %v988, %v2581
    %v2583 = vsel %vm1474, %v2582, %v2578
    %v2584 = vlaneseq
    %v2585 = vshrl.u32 %v2584, 7
    %v2586 = vsub.s32 %v1476, %v2585
    %v2587 = vrot.slane %v991, %v2586
    %v2588 = vsel %vm1481, %v2587, %v2583
    %v2589 = vlaneseq
    %v2590 = vshrl.u32 %v2589, 7
    %v2591 = vsub.s32 %v1373, %v2590
    %v2592 = vrot.slane %v994, %v2591
    %v2593 = vlaneseq
    %v2594 = vshrl.u32 %v2593, 7
    %v2595 = vsub.s32 %v1378, %v2594
    %v2596 = vrot.slane %v997, %v2595
    %v2597 = vsel %vm1383, %v2596, %v2592
    %v2598 = vlaneseq
    %v2599 = vshrl.u32 %v2598, 7
    %v2600 = vsub.s32 %v1385, %v2599
    %v2601 = vrot.slane %v1000, %v2600
    %v2602 = vsel %vm1390, %v2601, %v2597
    %v2603 = vlaneseq
    %v2604 = vshrl.u32 %v2603, 7
    %v2605 = vsub.s32 %v1392, %v2604
    %v2606 = vrot.slane %v1003, %v2605
    %v2607 = vsel %vm1397, %v2606, %v2602
    %v2608 = vlaneseq
    %v2609 = vshrl.u32 %v2608, 7
    %v2610 = vsub.s32 %v1399, %v2609
    %v2611 = vrot.slane %v1006, %v2610
    %v2612 = vsel %vm1404, %v2611, %v2607
    %v2613 = vlaneseq
    %v2614 = vshrl.u32 %v2613, 7
    %v2615 = vsub.s32 %v1406, %v2614
    %v2616 = vrot.slane %v1009, %v2615
    %v2617 = vsel %vm1411, %v2616, %v2612
    %v2618 = vlaneseq
    %v2619 = vshrl.u32 %v2618, 7
    %v2620 = vsub.s32 %v1413, %v2619
    %v2621 = vrot.slane %v1012, %v2620
    %v2622 = vsel %vm1418, %v2621, %v2617
    %v2623 = vlaneseq
    %v2624 = vshrl.u32 %v2623, 7
    %v2625 = vsub.s32 %v1420, %v2624
    %v2626 = vrot.slane %v1015, %v2625
    %v2627 = vsel %vm1425, %v2626, %v2622
    %v2628 = vlaneseq
    %v2629 = vshrl.u32 %v2628, 7
    %v2630 = vsub.s32 %v1427, %v2629
    %v2631 = vrot.slane %v1018, %v2630
    %v2632 = vsel %vm1432, %v2631, %v2627
    %v2633 = vlaneseq
    %v2634 = vshrl.u32 %v2633, 7
    %v2635 = vsub.s32 %v1434, %v2634
    %v2636 = vrot.slane %v1021, %v2635
    %v2637 = vsel %vm1439, %v2636, %v2632
    %v2638 = vlaneseq
    %v2639 = vshrl.u32 %v2638, 7
    %v2640 = vsub.s32 %v1441, %v2639
    %v2641 = vrot.slane %v1024, %v2640
    %v2642 = vsel %vm1446, %v2641, %v2637
    %v2643 = vlaneseq
    %v2644 = vshrl.u32 %v2643, 7
    %v2645 = vsub.s32 %v1448, %v2644
    %v2646 = vrot.slane %v1027, %v2645
    %v2647 = vsel %vm1453, %v2646, %v2642
    %v2648 = vlaneseq
    %v2649 = vshrl.u32 %v2648, 7
    %v2650 = vsub.s32 %v1455, %v2649
    %v2651 = vrot.slane %v1030, %v2650
    %v2652 = vsel %vm1460, %v2651, %v2647
    %v2653 = vlaneseq
    %v2654 = vshrl.u32 %v2653, 7
    %v2655 = vsub.s32 %v1462, %v2654
    %v2656 = vrot.slane %v1033, %v2655
    %v2657 = vsel %vm1467, %v2656, %v2652
    %v2658 = vlaneseq
    %v2659 = vshrl.u32 %v2658, 7
    %v2660 = vsub.s32 %v1469, %v2659
    %v2661 = vrot.slane %v1036, %v2660
    %v2662 = vsel %vm1474, %v2661, %v2657
    %v2663 = vlaneseq
    %v2664 = vshrl.u32 %v2663, 7
    %v2665 = vsub.s32 %v1476, %v2664
    %v2666 = vrot.slane %v1039, %v2665
    %v2667 = vsel %vm1481, %v2666, %v2662
    %vm2668 = vcmask 1041409
    %v2669 = vsel %vm2668, %v1640, %v1482
    %vm2670 = vcmask 1042434
    %v2671 = vsel %vm2670, %v1798, %v2669
    %vm2672 = vcmask 1043459
    %v2673 = vsel %vm2672, %v1956, %v2671
    %vm2674 = vcmask 1044484
    %v2675 = vsel %vm2674, %v2114, %v2673
    %vm2676 = vcmask 1045509
    %v2677 = vsel %vm2676, %v2272, %v2675
    %vm2678 = vcmask 1046534
    %v2679 = vsel %vm2678, %v2430, %v2677
    %vm2680 = vcmask 1047559
    %v2681 = vsel %vm2680, %v2588, %v2679
    %v2682 = vsel %vm2668, %v1719, %v1561
    %v2683 = vsel %vm2670, %v1877, %v2682
    %v2684 = vsel %vm2672, %v2035, %v2683
    %v2685 = vsel %vm2674, %v2193, %v2684
    %v2686 = vsel %vm2676, %v2351, %v2685
    %v2687 = vsel %vm2678, %v2509, %v2686
    %v2688 = vsel %vm2680, %v2667, %v2687
    %2691 = vmatprep.subr.mxu0 %v1041
    %2692 = vmatpush1.msra.mxu0 %v1040
    %2693 = vmatprep.subr.mxu0 %v1043
    %2694 = vmatpush1.msra.mxu0 %v1042
    %2695 = vmatprep.subr.mxu0 %v1045
    %2696 = vmatpush1.msra.mxu0 %v1044
    %2697 = vmatprep.subr.mxu0 %v1047
    %2698 = vmatpush1.msra.mxu0 %v1046
    %2699 = vmatprep.subr.mxu0 %v1049
    %2700 = vmatpush1.msra.mxu0 %v1048
    %2701 = vmatprep.subr.mxu0 %v1051
    %2702 = vmatpush1.msra.mxu0 %v1050
    %2703 = vmatprep.subr.mxu0 %v1053
    %2704 = vmatpush1.msra.mxu0 %v1052
    %2705 = vmatprep.subr.mxu0 %v1055
    %2706 = vmatpush1.msra.mxu0 %v1054
    %2707 = vmatprep.subr.mxu0 %v1057
    %2708 = vmatpush1.msra.mxu0 %v1056
    %2709 = vmatprep.subr.mxu0 %v1059
    %2710 = vmatpush1.msra.mxu0 %v1058
    %2711 = vmatprep.subr.mxu0 %v1061
    %2712 = vmatpush1.msra.mxu0 %v1060
    %2713 = vmatprep.subr.mxu0 %v1063
    %2714 = vmatpush1.msra.mxu0 %v1062
    %2715 = vmatprep.subr.mxu0 %v1065
    %2716 = vmatpush1.msra.mxu0 %v1064
    %2717 = vmatprep.subr.mxu0 %v1067
    %2718 = vmatpush1.msra.mxu0 %v1066
    %2719 = vmatprep.subr.mxu0 %v1069
    %2720 = vmatpush1.msra.mxu0 %v1068
    %2721 = vmatprep.subr.mxu0 %v1071
    %2722 = vmatpush1.msra.mxu0 %v1070
    %2723 = vmatprep.subr.mxu0 %v1073
    %2724 = vmatpush1.msra.mxu0 %v1072
    %2725 = vmatprep.subr.mxu0 %v1075
    %2726 = vmatpush1.msra.mxu0 %v1074
    %2727 = vmatprep.subr.mxu0 %v1077
    %2728 = vmatpush1.msra.mxu0 %v1076
    %2729 = vmatprep.subr.mxu0 %v1079
    %2730 = vmatpush1.msra.mxu0 %v1078
    %2731 = vmatprep.subr.mxu0 %v1081
    %2732 = vmatpush1.msra.mxu0 %v1080
    %2733 = vmatprep.subr.mxu0 %v1083
    %2734 = vmatpush1.msra.mxu0 %v1082
    %2735 = vmatprep.subr.mxu0 %v1085
    %2736 = vmatpush1.msra.mxu0 %v1084
    %2737 = vmatprep.subr.mxu0 %v1087
    %2738 = vmatpush1.msra.mxu0 %v1086
    %2739 = vmatprep.subr.mxu0 %v1089
    %2740 = vmatpush1.msra.mxu0 %v1088
    %2741 = vmatprep.subr.mxu0 %v1091
    %2742 = vmatpush1.msra.mxu0 %v1090
    %2743 = vmatprep.subr.mxu0 %v1093
    %2744 = vmatpush1.msra.mxu0 %v1092
    %2745 = vmatprep.subr.mxu0 %v1095
    %2746 = vmatpush1.msra.mxu0 %v1094
    %2747 = vmatprep.subr.mxu0 %v1097
    %2748 = vmatpush1.msra.mxu0 %v1096
    %2749 = vmatprep.subr.mxu0 %v1099
    %2750 = vmatpush1.msra.mxu0 %v1098
    %2751 = vmatprep.subr.mxu0 %v1101
    %2752 = vmatpush1.msra.mxu0 %v1100
    %2753 = vmatprep.subr.mxu0 %v1103
    %2754 = vmatpush1.msra.mxu0 %v1102
    %2755 = vmatprep.mubr.f32.mxu0 %v2688
    %2756 = vmatmul.mubr.f32.gmra.mrb[0].mxu0 %v2681
    %v2757 = vpop.f32.mrb[0].mxu0
    %v2758 = vadd.f32 %v1109, %v2757
    %v2759 = vpop.f32.mrb[0].mxu0
    %v2760 = vadd.f32 %v1113, %v2759
    %2761 = vdwg.mxu0
    %v2762 = vmul.f32 %v2758, %v2758
    %v2763 = vmul.f32 %v2760, %v2760
    %v2764 = vadd.f32 %v2762, %v2763
    %2765 = vadd.xlane.f32.xlu0 %v2764
    %v2766 = vpop.xlane.xlu0 %2765
    %v2767 = vadd.f32 %v2766, 1e-10
    %v2768 = vrsqrt.pop %v2767
    %v2769 = vmul.f32 %v2758, %v2768
    %v2770 = vmul.f32 %v2760, %v2768
    %v2773 = vcombine.low %v2769, %v2770
    %v2774 = vcombine.high %v2769, %v2770
    %v2776 = vunpack.c.l.s4 1983009808
    %v2777 = vunpack.c.0.s8 %v2776
    %v2778 = vlaneseq
    %v2779 = vshrl.u32 %v2778, 7
    %v2780 = vsub.s32 %v2777, %v2779
    %v2781 = vrot.slane %v2773, %v2780
    %v2783 = vunpack.c.l.s4 1983009808
    %v2784 = vunpack.c.0.s8 %v2783
    %v2785 = vlaneseq
    %v2786 = vshrl.u32 %v2785, 7
    %v2787 = vsub.s32 %v2784, %v2786
    %v2788 = vrot.slane %v2774, %v2787
    %v2789 = vcombine.high %v2781, %v2781
    %v2790 = vcombine.high %v2788, %v2788
    %2795 = vst [vmem:[#allocation2] sm:$0xf] %v2781
    %2796 = vst [vmem:[#allocation2 + $0x4] sm:$0xf] %v2789
    %2797 = vst [vmem:[#allocation2 + $0x8] sm:$0xf] %v2788
    %2798 = vst [vmem:[#allocation2 + $0xc] sm:$0xf] %v2790
    // Predicated region
    $region14: #{tpu_custom_call.1} parent=1 // pred_check
      _
    $region15: #{tpu_custom_call.1} parent=1 // pred_check_branch
      %2800 = sbr.rel (0) target = $region17
    $region16: #{tpu_custom_call.1} parent=1 // pred_region
      %s2802 = ssub.s32 256, 64
      %2803 = vsyncadd [#allocation3], %s2802
      %s2804 = sshll.u32 [#allocation2], 4
      %s2805 = int_to_ptr.vmem [resolvable:$true] %s2804
      %2810 = dma.vmem_to_hbm [thread:$0]  %s2805, 64, %s3, [#allocation3], 64, 64, 4
    $region17: #{tpu_custom_call.1} parent=1 // pred_fallthru
      _
    // Predicated region
    $region18: #{tpu_custom_call.1} parent=1 // pred_check
      _
    $region19: #{tpu_custom_call.1} parent=1 // pred_check_branch
      %2812 = sbr.rel (0) target = $region21
    $region20: #{tpu_custom_call.1} parent=1 // pred_region
      %2813 = dma.done [#allocation3], 256
    $region21: #{tpu_custom_call.1} parent=1 // pred_fallthru
      _
    %2814 = vsyncpa [#allocation3], 1

// kernel: tpu_custom_call.1
$region0: #{tpu_custom_call.1}
  #allocation0 [shape = 'u32[]', space=smem, size = 0x4, offset = 0x4, fixed_abs, tag = 'smem constant byte address 0x4 - core index']
  #allocation1 [shape = 'u32[144,128]{1,0:T(1,128)}', space=vmem, size = 0x12000, scoped, tag = 'internal scratch']
  %s0 = inlined_call_operand.vmem [shape: f32[2,256,64], index: 0, kind: input, shape index: {}]
  %s1 = inlined_call_operand.vmem [shape: f32[256,256], index: 1, kind: input, shape index: {}]
  %s2 = inlined_call_operand.vmem [shape: f32[1,256], index: 2, kind: input, shape index: {}]
  %s3 = inlined_call_operand.hbm [shape: f32[2,256], index: 3, kind: output, shape index: {}]
  %s4 = sld [smem:[#allocation0]]
  $region22: #{tpu_custom_call.1} parent=0
    _
  %s6 = ssub.s32 1, %s4
  %s7 = scalar_select 0, %s6, %s4
  $region1: #{tpu_custom_call.1} parent=0
    #allocation2 [shape = 'u8[8192]{0}', space=vmem, size = 0x2000, scoped, tag = 'output window, operand 0, single buffered']
    #allocation3 [shape = 's32[1]{0}', space=sflag, size = 0x4, scoped, tag = 'scoped memory for tpu_custom_call.1']
    %8 = vsyncpa [#allocation3], 0
    // Predicated region
    $region2: #{tpu_custom_call.1} parent=1 // pred_check
      _
    $region3: #{tpu_custom_call.1} parent=1 // pred_check_branch
      %10 = sbr.rel (0) target = $region5
    $region4: #{tpu_custom_call.1} parent=1 // pred_region
      _
    $region5: #{tpu_custom_call.1} parent=1 // pred_fallthru
      _
    // Predicated region
    $region6: #{tpu_custom_call.1} parent=1 // pred_check
      _
    $region7: #{tpu_custom_call.1} parent=1 // pred_check_branch
      %12 = sbr.rel (0) target = $region9
    $region8: #{tpu_custom_call.1} parent=1 // pred_region
      _
    $region9: #{tpu_custom_call.1} parent=1 // pred_fallthru
      _
    // Predicated region
    $region10: #{tpu_custom_call.1} parent=1 // pred_check
      _
    $region11: #{tpu_custom_call.1} parent=1 // pred_check_branch
      %14 = sbr.rel (0) target = $region13
    $region12: #{tpu_custom_call.1} parent=1 // pred_region
      _
    $region13: #{tpu_custom_call.1} parent=1 // pred_fallthru
      _
    %v15 = vld [vmem:[%s0] sm:$0xff]
    %v16 = vld [vmem:[%s0 + $0x8] sm:$0xff]
    %v17 = vld [vmem:[%s0 + $0x10] sm:$0xff]
    %v18 = vld [vmem:[%s0 + $0x18] sm:$0xff]
    %v19 = vld [vmem:[%s0 + $0x20] sm:$0xff]
    %v20 = vld [vmem:[%s0 + $0x28] sm:$0xff]
    %v21 = vld [vmem:[%s0 + $0x30] sm:$0xff]
    %v22 = vld [vmem:[%s0 + $0x38] sm:$0xff]
    %v23 = vld [vmem:[%s0 + $0x40] sm:$0xff]
    %v24 = vld [vmem:[%s0 + $0x48] sm:$0xff]
    %v25 = vld [vmem:[%s0 + $0x50] sm:$0xff]
    %v26 = vld [vmem:[%s0 + $0x58] sm:$0xff]
    %v27 = vld [vmem:[%s0 + $0x60] sm:$0xff]
    %v28 = vld [vmem:[%s0 + $0x68] sm:$0xff]
    %v29 = vld [vmem:[%s0 + $0x70] sm:$0xff]
    %v30 = vld [vmem:[%s0 + $0x78] sm:$0xff]
    %v31 = vld [vmem:[%s0 + $0x80] sm:$0xff]
    %v32 = vld [vmem:[%s0 + $0x88] sm:$0xff]
    %v33 = vld [vmem:[%s0 + $0x90] sm:$0xff]
    %v34 = vld [vmem:[%s0 + $0x98] sm:$0xff]
    %v35 = vld [vmem:[%s0 + $0xa0] sm:$0xff]
    %v36 = vld [vmem:[%s0 + $0xa8] sm:$0xff]
    %v37 = vld [vmem:[%s0 + $0xb0] sm:$0xff]
    %v38 = vld [vmem:[%s0 + $0xb8] sm:$0xff]
    %v39 = vld [vmem:[%s0 + $0xc0] sm:$0xff]
    %v40 = vld [vmem:[%s0 + $0xc8] sm:$0xff]
    %v41 = vld [vmem:[%s0 + $0xd0] sm:$0xff]
    %v42 = vld [vmem:[%s0 + $0xd8] sm:$0xff]
    %v43 = vld [vmem:[%s0 + $0xe0] sm:$0xff]
    %v44 = vld [vmem:[%s0 + $0xe8] sm:$0xff]
    %v45 = vld [vmem:[%s0 + $0xf0] sm:$0xff]
    %v46 = vld [vmem:[%s0 + $0xf8] sm:$0xff]
    %v47 = vld [vmem:[%s0 + $0x100] sm:$0xff]
    %v48 = vld [vmem:[%s0 + $0x108] sm:$0xff]
    %v49 = vld [vmem:[%s0 + $0x110] sm:$0xff]
    %v50 = vld [vmem:[%s0 + $0x118] sm:$0xff]
    %v51 = vld [vmem:[%s0 + $0x120] sm:$0xff]
    %v52 = vld [vmem:[%s0 + $0x128] sm:$0xff]
    %v53 = vld [vmem:[%s0 + $0x130] sm:$0xff]
    %v54 = vld [vmem:[%s0 + $0x138] sm:$0xff]
    %v55 = vld [vmem:[%s0 + $0x140] sm:$0xff]
    %v56 = vld [vmem:[%s0 + $0x148] sm:$0xff]
    %v57 = vld [vmem:[%s0 + $0x150] sm:$0xff]
    %v58 = vld [vmem:[%s0 + $0x158] sm:$0xff]
    %v59 = vld [vmem:[%s0 + $0x160] sm:$0xff]
    %v60 = vld [vmem:[%s0 + $0x168] sm:$0xff]
    %v61 = vld [vmem:[%s0 + $0x170] sm:$0xff]
    %v62 = vld [vmem:[%s0 + $0x178] sm:$0xff]
    %v63 = vld [vmem:[%s0 + $0x180] sm:$0xff]
    %v64 = vld [vmem:[%s0 + $0x188] sm:$0xff]
    %v65 = vld [vmem:[%s0 + $0x190] sm:$0xff]
    %v66 = vld [vmem:[%s0 + $0x198] sm:$0xff]
    %v67 = vld [vmem:[%s0 + $0x1a0] sm:$0xff]
    %v68 = vld [vmem:[%s0 + $0x1a8] sm:$0xff]
    %v69 = vld [vmem:[%s0 + $0x1b0] sm:$0xff]
    %v70 = vld [vmem:[%s0 + $0x1b8] sm:$0xff]
    %v71 = vld [vmem:[%s0 + $0x1c0] sm:$0xff]
    %v72 = vld [vmem:[%s0 + $0x1c8] sm:$0xff]
    %v73 = vld [vmem:[%s0 + $0x1d0] sm:$0xff]
    %v74 = vld [vmem:[%s0 + $0x1d8] sm:$0xff]
    %v75 = vld [vmem:[%s0 + $0x1e0] sm:$0xff]
    %v76 = vld [vmem:[%s0 + $0x1e8] sm:$0xff]
    %v77 = vld [vmem:[%s0 + $0x1f0] sm:$0xff]
    %v78 = vld [vmem:[%s0 + $0x1f8] sm:$0xff]
    %v79 = vld [vmem:[%s0 + $0x200] sm:$0xff]
    %v80 = vld [vmem:[%s0 + $0x208] sm:$0xff]
    %v81 = vld [vmem:[%s0 + $0x210] sm:$0xff]
    %v82 = vld [vmem:[%s0 + $0x218] sm:$0xff]
    %v83 = vld [vmem:[%s0 + $0x220] sm:$0xff]
    %v84 = vld [vmem:[%s0 + $0x228] sm:$0xff]
    %v85 = vld [vmem:[%s0 + $0x230] sm:$0xff]
    %v86 = vld [vmem:[%s0 + $0x238] sm:$0xff]
    %v87 = vld [vmem:[%s0 + $0x240] sm:$0xff]
    %v88 = vld [vmem:[%s0 + $0x248] sm:$0xff]
    %v89 = vld [vmem:[%s0 + $0x250] sm:$0xff]
    %v90 = vld [vmem:[%s0 + $0x258] sm:$0xff]
    %v91 = vld [vmem:[%s0 + $0x260] sm:$0xff]
    %v92 = vld [vmem:[%s0 + $0x268] sm:$0xff]
    %v93 = vld [vmem:[%s0 + $0x270] sm:$0xff]
    %v94 = vld [vmem:[%s0 + $0x278] sm:$0xff]
    %v95 = vld [vmem:[%s0 + $0x280] sm:$0xff]
    %v96 = vld [vmem:[%s0 + $0x288] sm:$0xff]
    %v97 = vld [vmem:[%s0 + $0x290] sm:$0xff]
    %v98 = vld [vmem:[%s0 + $0x298] sm:$0xff]
    %v99 = vld [vmem:[%s0 + $0x2a0] sm:$0xff]
    %v100 = vld [vmem:[%s0 + $0x2a8] sm:$0xff]
    %v101 = vld [vmem:[%s0 + $0x2b0] sm:$0xff]
    %v102 = vld [vmem:[%s0 + $0x2b8] sm:$0xff]
    %v103 = vld [vmem:[%s0 + $0x2c0] sm:$0xff]
    %v104 = vld [vmem:[%s0 + $0x2c8] sm:$0xff]
    %v105 = vld [vmem:[%s0 + $0x2d0] sm:$0xff]
    %v106 = vld [vmem:[%s0 + $0x2d8] sm:$0xff]
    %v107 = vld [vmem:[%s0 + $0x2e0] sm:$0xff]
    %v108 = vld [vmem:[%s0 + $0x2e8] sm:$0xff]
    %v109 = vld [vmem:[%s0 + $0x2f0] sm:$0xff]
    %v110 = vld [vmem:[%s0 + $0x2f8] sm:$0xff]
    %v111 = vld [vmem:[%s0 + $0x300] sm:$0xff]
    %v112 = vld [vmem:[%s0 + $0x308] sm:$0xff]
    %v113 = vld [vmem:[%s0 + $0x310] sm:$0xff]
    %v114 = vld [vmem:[%s0 + $0x318] sm:$0xff]
    %v115 = vld [vmem:[%s0 + $0x320] sm:$0xff]
    %v116 = vld [vmem:[%s0 + $0x328] sm:$0xff]
    %v117 = vld [vmem:[%s0 + $0x330] sm:$0xff]
    %v118 = vld [vmem:[%s0 + $0x338] sm:$0xff]
    %v119 = vld [vmem:[%s0 + $0x340] sm:$0xff]
    %v120 = vld [vmem:[%s0 + $0x348] sm:$0xff]
    %v121 = vld [vmem:[%s0 + $0x350] sm:$0xff]
    %v122 = vld [vmem:[%s0 + $0x358] sm:$0xff]
    %v123 = vld [vmem:[%s0 + $0x360] sm:$0xff]
    %v124 = vld [vmem:[%s0 + $0x368] sm:$0xff]
    %v125 = vld [vmem:[%s0 + $0x370] sm:$0xff]
    %v126 = vld [vmem:[%s0 + $0x378] sm:$0xff]
    %v127 = vld [vmem:[%s0 + $0x380] sm:$0xff]
    %v128 = vld [vmem:[%s0 + $0x388] sm:$0xff]
    %v129 = vld [vmem:[%s0 + $0x390] sm:$0xff]
    %v130 = vld [vmem:[%s0 + $0x398] sm:$0xff]
    %v131 = vld [vmem:[%s0 + $0x3a0] sm:$0xff]
    %v132 = vld [vmem:[%s0 + $0x3a8] sm:$0xff]
    %v133 = vld [vmem:[%s0 + $0x3b0] sm:$0xff]
    %v134 = vld [vmem:[%s0 + $0x3b8] sm:$0xff]
    %v135 = vld [vmem:[%s0 + $0x3c0] sm:$0xff]
    %v136 = vld [vmem:[%s0 + $0x3c8] sm:$0xff]
    %v137 = vld [vmem:[%s0 + $0x3d0] sm:$0xff]
    %v138 = vld [vmem:[%s0 + $0x3d8] sm:$0xff]
    %v139 = vld [vmem:[%s0 + $0x3e0] sm:$0xff]
    %v140 = vld [vmem:[%s0 + $0x3e8] sm:$0xff]
    %v141 = vld [vmem:[%s0 + $0x3f0] sm:$0xff]
    %v142 = vld [vmem:[%s0 + $0x3f8] sm:$0xff]
    %v143 = vld [vmem:[%s0 + $0x400] sm:$0xff]
    %v144 = vld [vmem:[%s0 + $0x408] sm:$0xff]
    %v145 = vld [vmem:[%s0 + $0x410] sm:$0xff]
    %v146 = vld [vmem:[%s0 + $0x418] sm:$0xff]
    %v147 = vld [vmem:[%s0 + $0x420] sm:$0xff]
    %v148 = vld [vmem:[%s0 + $0x428] sm:$0xff]
    %v149 = vld [vmem:[%s0 + $0x430] sm:$0xff]
    %v150 = vld [vmem:[%s0 + $0x438] sm:$0xff]
    %v151 = vld [vmem:[%s0 + $0x440] sm:$0xff]
    %v152 = vld [vmem:[%s0 + $0x448] sm:$0xff]
    %v153 = vld [vmem:[%s0 + $0x450] sm:$0xff]
    %v154 = vld [vmem:[%s0 + $0x458] sm:$0xff]
    %v155 = vld [vmem:[%s0 + $0x460] sm:$0xff]
    %v156 = vld [vmem:[%s0 + $0x468] sm:$0xff]
    %v157 = vld [vmem:[%s0 + $0x470] sm:$0xff]
    %v158 = vld [vmem:[%s0 + $0x478] sm:$0xff]
    %v159 = vld [vmem:[%s0 + $0x480] sm:$0xff]
    %v160 = vld [vmem:[%s0 + $0x488] sm:$0xff]
    %v161 = vld [vmem:[%s0 + $0x490] sm:$0xff]
    %v162 = vld [vmem:[%s0 + $0x498] sm:$0xff]
    %v163 = vld [vmem:[%s0 + $0x4a0] sm:$0xff]
    %v164 = vld [vmem:[%s0 + $0x4a8] sm:$0xff]
    %v165 = vld [vmem:[%s0 + $0x4b0] sm:$0xff]
    %v166 = vld [vmem:[%s0 + $0x4b8] sm:$0xff]
    %v167 = vld [vmem:[%s0 + $0x4c0] sm:$0xff]
    %v168 = vld [vmem:[%s0 + $0x4c8] sm:$0xff]
    %v169 = vld [vmem:[%s0 + $0x4d0] sm:$0xff]
    %v170 = vld [vmem:[%s0 + $0x4d8] sm:$0xff]
    %v171 = vld [vmem:[%s0 + $0x4e0] sm:$0xff]
    %v172 = vld [vmem:[%s0 + $0x4e8] sm:$0xff]
    %v173 = vld [vmem:[%s0 + $0x4f0] sm:$0xff]
    %v174 = vld [vmem:[%s0 + $0x4f8] sm:$0xff]
    %v175 = vld [vmem:[%s0 + $0x500] sm:$0xff]
    %v176 = vld [vmem:[%s0 + $0x508] sm:$0xff]
    %v177 = vld [vmem:[%s0 + $0x510] sm:$0xff]
    %v178 = vld [vmem:[%s0 + $0x518] sm:$0xff]
    %v179 = vld [vmem:[%s0 + $0x520] sm:$0xff]
    %v180 = vld [vmem:[%s0 + $0x528] sm:$0xff]
    %v181 = vld [vmem:[%s0 + $0x530] sm:$0xff]
    %v182 = vld [vmem:[%s0 + $0x538] sm:$0xff]
    %v183 = vld [vmem:[%s0 + $0x540] sm:$0xff]
    %v184 = vld [vmem:[%s0 + $0x548] sm:$0xff]
    %v185 = vld [vmem:[%s0 + $0x550] sm:$0xff]
    %v186 = vld [vmem:[%s0 + $0x558] sm:$0xff]
    %v187 = vld [vmem:[%s0 + $0x560] sm:$0xff]
    %v188 = vld [vmem:[%s0 + $0x568] sm:$0xff]
    %v189 = vld [vmem:[%s0 + $0x570] sm:$0xff]
    %v190 = vld [vmem:[%s0 + $0x578] sm:$0xff]
    %v191 = vld [vmem:[%s0 + $0x580] sm:$0xff]
    %v192 = vld [vmem:[%s0 + $0x588] sm:$0xff]
    %v193 = vld [vmem:[%s0 + $0x590] sm:$0xff]
    %v194 = vld [vmem:[%s0 + $0x598] sm:$0xff]
    %v195 = vld [vmem:[%s0 + $0x5a0] sm:$0xff]
    %v196 = vld [vmem:[%s0 + $0x5a8] sm:$0xff]
    %v197 = vld [vmem:[%s0 + $0x5b0] sm:$0xff]
    %v198 = vld [vmem:[%s0 + $0x5b8] sm:$0xff]
    %v199 = vld [vmem:[%s0 + $0x5c0] sm:$0xff]
    %v200 = vld [vmem:[%s0 + $0x5c8] sm:$0xff]
    %v201 = vld [vmem:[%s0 + $0x5d0] sm:$0xff]
    %v202 = vld [vmem:[%s0 + $0x5d8] sm:$0xff]
    %v203 = vld [vmem:[%s0 + $0x5e0] sm:$0xff]
    %v204 = vld [vmem:[%s0 + $0x5e8] sm:$0xff]
    %v205 = vld [vmem:[%s0 + $0x5f0] sm:$0xff]
    %v206 = vld [vmem:[%s0 + $0x5f8] sm:$0xff]
    %v207 = vld [vmem:[%s0 + $0x600] sm:$0xff]
    %v208 = vld [vmem:[%s0 + $0x608] sm:$0xff]
    %v209 = vld [vmem:[%s0 + $0x610] sm:$0xff]
    %v210 = vld [vmem:[%s0 + $0x618] sm:$0xff]
    %v211 = vld [vmem:[%s0 + $0x620] sm:$0xff]
    %v212 = vld [vmem:[%s0 + $0x628] sm:$0xff]
    %v213 = vld [vmem:[%s0 + $0x630] sm:$0xff]
    %v214 = vld [vmem:[%s0 + $0x638] sm:$0xff]
    %v215 = vld [vmem:[%s0 + $0x640] sm:$0xff]
    %v216 = vld [vmem:[%s0 + $0x648] sm:$0xff]
    %v217 = vld [vmem:[%s0 + $0x650] sm:$0xff]
    %v218 = vld [vmem:[%s0 + $0x658] sm:$0xff]
    %v219 = vld [vmem:[%s0 + $0x660] sm:$0xff]
    %v220 = vld [vmem:[%s0 + $0x668] sm:$0xff]
    %v221 = vld [vmem:[%s0 + $0x670] sm:$0xff]
    %v222 = vld [vmem:[%s0 + $0x678] sm:$0xff]
    %v223 = vld [vmem:[%s0 + $0x680] sm:$0xff]
    %v224 = vld [vmem:[%s0 + $0x688] sm:$0xff]
    %v225 = vld [vmem:[%s0 + $0x690] sm:$0xff]
    %v226 = vld [vmem:[%s0 + $0x698] sm:$0xff]
    %v227 = vld [vmem:[%s0 + $0x6a0] sm:$0xff]
    %v228 = vld [vmem:[%s0 + $0x6a8] sm:$0xff]
    %v229 = vld [vmem:[%s0 + $0x6b0] sm:$0xff]
    %v230 = vld [vmem:[%s0 + $0x6b8] sm:$0xff]
    %v231 = vld [vmem:[%s0 + $0x6c0] sm:$0xff]
    %v232 = vld [vmem:[%s0 + $0x6c8] sm:$0xff]
    %v233 = vld [vmem:[%s0 + $0x6d0] sm:$0xff]
    %v234 = vld [vmem:[%s0 + $0x6d8] sm:$0xff]
    %v235 = vld [vmem:[%s0 + $0x6e0] sm:$0xff]
    %v236 = vld [vmem:[%s0 + $0x6e8] sm:$0xff]
    %v237 = vld [vmem:[%s0 + $0x6f0] sm:$0xff]
    %v238 = vld [vmem:[%s0 + $0x6f8] sm:$0xff]
    %v239 = vld [vmem:[%s0 + $0x700] sm:$0xff]
    %v240 = vld [vmem:[%s0 + $0x708] sm:$0xff]
    %v241 = vld [vmem:[%s0 + $0x710] sm:$0xff]
    %v242 = vld [vmem:[%s0 + $0x718] sm:$0xff]
    %v243 = vld [vmem:[%s0 + $0x720] sm:$0xff]
    %v244 = vld [vmem:[%s0 + $0x728] sm:$0xff]
    %v245 = vld [vmem:[%s0 + $0x730] sm:$0xff]
    %v246 = vld [vmem:[%s0 + $0x738] sm:$0xff]
    %v247 = vld [vmem:[%s0 + $0x740] sm:$0xff]
    %v248 = vld [vmem:[%s0 + $0x748] sm:$0xff]
    %v249 = vld [vmem:[%s0 + $0x750] sm:$0xff]
    %v250 = vld [vmem:[%s0 + $0x758] sm:$0xff]
    %v251 = vld [vmem:[%s0 + $0x760] sm:$0xff]
    %v252 = vld [vmem:[%s0 + $0x768] sm:$0xff]
    %v253 = vld [vmem:[%s0 + $0x770] sm:$0xff]
    %v254 = vld [vmem:[%s0 + $0x778] sm:$0xff]
    %v255 = vld [vmem:[%s0 + $0x780] sm:$0xff]
    %v256 = vld [vmem:[%s0 + $0x788] sm:$0xff]
    %v257 = vld [vmem:[%s0 + $0x790] sm:$0xff]
    %v258 = vld [vmem:[%s0 + $0x798] sm:$0xff]
    %v259 = vld [vmem:[%s0 + $0x7a0] sm:$0xff]
    %v260 = vld [vmem:[%s0 + $0x7a8] sm:$0xff]
    %v261 = vld [vmem:[%s0 + $0x7b0] sm:$0xff]
    %v262 = vld [vmem:[%s0 + $0x7b8] sm:$0xff]
    %v263 = vld [vmem:[%s0 + $0x7c0] sm:$0xff]
    %v264 = vld [vmem:[%s0 + $0x7c8] sm:$0xff]
    %v265 = vld [vmem:[%s0 + $0x7d0] sm:$0xff]
    %v266 = vld [vmem:[%s0 + $0x7d8] sm:$0xff]
    %v267 = vld [vmem:[%s0 + $0x7e0] sm:$0xff]
    %v268 = vld [vmem:[%s0 + $0x7e8] sm:$0xff]
    %v269 = vld [vmem:[%s0 + $0x7f0] sm:$0xff]
    %v270 = vld [vmem:[%s0 + $0x7f8] sm:$0xff]
    %vm271 = vcmask 523264
    %v272 = vsel %vm271, %v15, 0.0
    %273 = vadd.xlane.f32.xlu0 %v272
    %v274 = vpop.xlane.xlu0 %273
    %v275 = vsel %vm271, %v16, 0.0
    %276 = vadd.xlane.f32.xlu0 %v275
    %v277 = vpop.xlane.xlu0 %276
    %v278 = vsel %vm271, %v17, 0.0
    %279 = vadd.xlane.f32.xlu0 %v278
    %v280 = vpop.xlane.xlu0 %279
    %v281 = vsel %vm271, %v18, 0.0
    %282 = vadd.xlane.f32.xlu0 %v281
    %v283 = vpop.xlane.xlu0 %282
    %v284 = vsel %vm271, %v19, 0.0
    %285 = vadd.xlane.f32.xlu0 %v284
    %v286 = vpop.xlane.xlu0 %285
    %v287 = vsel %vm271, %v20, 0.0
    %288 = vadd.xlane.f32.xlu0 %v287
    %v289 = vpop.xlane.xlu0 %288
    %v290 = vsel %vm271, %v21, 0.0
    %291 = vadd.xlane.f32.xlu0 %v290
    %v292 = vpop.xlane.xlu0 %291
    %v293 = vsel %vm271, %v22, 0.0
    %294 = vadd.xlane.f32.xlu0 %v293
    %v295 = vpop.xlane.xlu0 %294
    %v296 = vsel %vm271, %v23, 0.0
    %297 = vadd.xlane.f32.xlu0 %v296
    %v298 = vpop.xlane.xlu0 %297
    %v299 = vsel %vm271, %v24, 0.0
    %300 = vadd.xlane.f32.xlu0 %v299
    %v301 = vpop.xlane.xlu0 %300
    %v302 = vsel %vm271, %v25, 0.0
    %303 = vadd.xlane.f32.xlu0 %v302
    %v304 = vpop.xlane.xlu0 %303
    %v305 = vsel %vm271, %v26, 0.0
    %306 = vadd.xlane.f32.xlu0 %v305
    %v307 = vpop.xlane.xlu0 %306
    %v308 = vsel %vm271, %v27, 0.0
    %309 = vadd.xlane.f32.xlu0 %v308
    %v310 = vpop.xlane.xlu0 %309
    %v311 = vsel %vm271, %v28, 0.0
    %312 = vadd.xlane.f32.xlu0 %v311
    %v313 = vpop.xlane.xlu0 %312
    %v314 = vsel %vm271, %v29, 0.0
    %315 = vadd.xlane.f32.xlu0 %v314
    %v316 = vpop.xlane.xlu0 %315
    %v317 = vsel %vm271, %v30, 0.0
    %318 = vadd.xlane.f32.xlu0 %v317
    %v319 = vpop.xlane.xlu0 %318
    %v320 = vsel %vm271, %v31, 0.0
    %321 = vadd.xlane.f32.xlu0 %v320
    %v322 = vpop.xlane.xlu0 %321
    %v323 = vsel %vm271, %v32, 0.0
    %324 = vadd.xlane.f32.xlu0 %v323
    %v325 = vpop.xlane.xlu0 %324
    %v326 = vsel %vm271, %v33, 0.0
    %327 = vadd.xlane.f32.xlu0 %v326
    %v328 = vpop.xlane.xlu0 %327
    %v329 = vsel %vm271, %v34, 0.0
    %330 = vadd.xlane.f32.xlu0 %v329
    %v331 = vpop.xlane.xlu0 %330
    %v332 = vsel %vm271, %v35, 0.0
    %333 = vadd.xlane.f32.xlu0 %v332
    %v334 = vpop.xlane.xlu0 %333
    %v335 = vsel %vm271, %v36, 0.0
    %336 = vadd.xlane.f32.xlu0 %v335
    %v337 = vpop.xlane.xlu0 %336
    %v338 = vsel %vm271, %v37, 0.0
    %339 = vadd.xlane.f32.xlu0 %v338
    %v340 = vpop.xlane.xlu0 %339
    %v341 = vsel %vm271, %v38, 0.0
    %342 = vadd.xlane.f32.xlu0 %v341
    %v343 = vpop.xlane.xlu0 %342
    %v344 = vsel %vm271, %v39, 0.0
    %345 = vadd.xlane.f32.xlu0 %v344
    %v346 = vpop.xlane.xlu0 %345
    %v347 = vsel %vm271, %v40, 0.0
    %348 = vadd.xlane.f32.xlu0 %v347
    %v349 = vpop.xlane.xlu0 %348
    %v350 = vsel %vm271, %v41, 0.0
    %351 = vadd.xlane.f32.xlu0 %v350
    %v352 = vpop.xlane.xlu0 %351
    %v353 = vsel %vm271, %v42, 0.0
    %354 = vadd.xlane.f32.xlu0 %v353
    %v355 = vpop.xlane.xlu0 %354
    %v356 = vsel %vm271, %v43, 0.0
    %357 = vadd.xlane.f32.xlu0 %v356
    %v358 = vpop.xlane.xlu0 %357
    %v359 = vsel %vm271, %v44, 0.0
    %360 = vadd.xlane.f32.xlu0 %v359
    %v361 = vpop.xlane.xlu0 %360
    %v362 = vsel %vm271, %v45, 0.0
    %363 = vadd.xlane.f32.xlu0 %v362
    %v364 = vpop.xlane.xlu0 %363
    %v365 = vsel %vm271, %v46, 0.0
    %366 = vadd.xlane.f32.xlu0 %v365
    %v367 = vpop.xlane.xlu0 %366
    %v368 = vsel %vm271, %v47, 0.0
    %369 = vadd.xlane.f32.xlu0 %v368
    %v370 = vpop.xlane.xlu0 %369
    %v371 = vsel %vm271, %v48, 0.0
    %372 = vadd.xlane.f32.xlu0 %v371
    %v373 = vpop.xlane.xlu0 %372
    %v374 = vsel %vm271, %v49, 0.0
    %375 = vadd.xlane.f32.xlu0 %v374
    %v376 = vpop.xlane.xlu0 %375
    %v377 = vsel %vm271, %v50, 0.0
    %378 = vadd.xlane.f32.xlu0 %v377
    %v379 = vpop.xlane.xlu0 %378
    %v380 = vsel %vm271, %v51, 0.0
    %381 = vadd.xlane.f32.xlu0 %v380
    %v382 = vpop.xlane.xlu0 %381
    %v383 = vsel %vm271, %v52, 0.0
    %384 = vadd.xlane.f32.xlu0 %v383
    %v385 = vpop.xlane.xlu0 %384
    %v386 = vsel %vm271, %v53, 0.0
    %387 = vadd.xlane.f32.xlu0 %v386
    %v388 = vpop.xlane.xlu0 %387
    %v389 = vsel %vm271, %v54, 0.0
    %390 = vadd.xlane.f32.xlu0 %v389
    %v391 = vpop.xlane.xlu0 %390
    %v392 = vsel %vm271, %v55, 0.0
    %393 = vadd.xlane.f32.xlu0 %v392
    %v394 = vpop.xlane.xlu0 %393
    %v395 = vsel %vm271, %v56, 0.0
    %396 = vadd.xlane.f32.xlu0 %v395
    %v397 = vpop.xlane.xlu0 %396
    %v398 = vsel %vm271, %v57, 0.0
    %399 = vadd.xlane.f32.xlu0 %v398
    %v400 = vpop.xlane.xlu0 %399
    %v401 = vsel %vm271, %v58, 0.0
    %402 = vadd.xlane.f32.xlu0 %v401
    %v403 = vpop.xlane.xlu0 %402
    %v404 = vsel %vm271, %v59, 0.0
    %405 = vadd.xlane.f32.xlu0 %v404
    %v406 = vpop.xlane.xlu0 %405
    %v407 = vsel %vm271, %v60, 0.0
    %408 = vadd.xlane.f32.xlu0 %v407
    %v409 = vpop.xlane.xlu0 %408
    %v410 = vsel %vm271, %v61, 0.0
    %411 = vadd.xlane.f32.xlu0 %v410
    %v412 = vpop.xlane.xlu0 %411
    %v413 = vsel %vm271, %v62, 0.0
    %414 = vadd.xlane.f32.xlu0 %v413
    %v415 = vpop.xlane.xlu0 %414
    %v416 = vsel %vm271, %v63, 0.0
    %417 = vadd.xlane.f32.xlu0 %v416
    %v418 = vpop.xlane.xlu0 %417
    %v419 = vsel %vm271, %v64, 0.0
    %420 = vadd.xlane.f32.xlu0 %v419
    %v421 = vpop.xlane.xlu0 %420
    %v422 = vsel %vm271, %v65, 0.0
    %423 = vadd.xlane.f32.xlu0 %v422
    %v424 = vpop.xlane.xlu0 %423
    %v425 = vsel %vm271, %v66, 0.0
    %426 = vadd.xlane.f32.xlu0 %v425
    %v427 = vpop.xlane.xlu0 %426
    %v428 = vsel %vm271, %v67, 0.0
    %429 = vadd.xlane.f32.xlu0 %v428
    %v430 = vpop.xlane.xlu0 %429
    %v431 = vsel %vm271, %v68, 0.0
    %432 = vadd.xlane.f32.xlu0 %v431
    %v433 = vpop.xlane.xlu0 %432
    %v434 = vsel %vm271, %v69, 0.0
    %435 = vadd.xlane.f32.xlu0 %v434
    %v436 = vpop.xlane.xlu0 %435
    %v437 = vsel %vm271, %v70, 0.0
    %438 = vadd.xlane.f32.xlu0 %v437
    %v439 = vpop.xlane.xlu0 %438
    %v440 = vsel %vm271, %v71, 0.0
    %441 = vadd.xlane.f32.xlu0 %v440
    %v442 = vpop.xlane.xlu0 %441
    %v443 = vsel %vm271, %v72, 0.0
    %444 = vadd.xlane.f32.xlu0 %v443
    %v445 = vpop.xlane.xlu0 %444
    %v446 = vsel %vm271, %v73, 0.0
    %447 = vadd.xlane.f32.xlu0 %v446
    %v448 = vpop.xlane.xlu0 %447
    %v449 = vsel %vm271, %v74, 0.0
    %450 = vadd.xlane.f32.xlu0 %v449
    %v451 = vpop.xlane.xlu0 %450
    %v452 = vsel %vm271, %v75, 0.0
    %453 = vadd.xlane.f32.xlu0 %v452
    %v454 = vpop.xlane.xlu0 %453
    %v455 = vsel %vm271, %v76, 0.0
    %456 = vadd.xlane.f32.xlu0 %v455
    %v457 = vpop.xlane.xlu0 %456
    %v458 = vsel %vm271, %v77, 0.0
    %459 = vadd.xlane.f32.xlu0 %v458
    %v460 = vpop.xlane.xlu0 %459
    %v461 = vsel %vm271, %v78, 0.0
    %462 = vadd.xlane.f32.xlu0 %v461
    %v463 = vpop.xlane.xlu0 %462
    %v464 = vsel %vm271, %v79, 0.0
    %465 = vadd.xlane.f32.xlu0 %v464
    %v466 = vpop.xlane.xlu0 %465
    %v467 = vsel %vm271, %v80, 0.0
    %468 = vadd.xlane.f32.xlu0 %v467
    %v469 = vpop.xlane.xlu0 %468
    %v470 = vsel %vm271, %v81, 0.0
    %471 = vadd.xlane.f32.xlu0 %v470
    %v472 = vpop.xlane.xlu0 %471
    %v473 = vsel %vm271, %v82, 0.0
    %474 = vadd.xlane.f32.xlu0 %v473
    %v475 = vpop.xlane.xlu0 %474
    %v476 = vsel %vm271, %v83, 0.0
    %477 = vadd.xlane.f32.xlu0 %v476
    %v478 = vpop.xlane.xlu0 %477
    %v479 = vsel %vm271, %v84, 0.0
    %480 = vadd.xlane.f32.xlu0 %v479
    %v481 = vpop.xlane.xlu0 %480
    %v482 = vsel %vm271, %v85, 0.0
    %483 = vadd.xlane.f32.xlu0 %v482
    %v484 = vpop.xlane.xlu0 %483
    %v485 = vsel %vm271, %v86, 0.0
    %486 = vadd.xlane.f32.xlu0 %v485
    %v487 = vpop.xlane.xlu0 %486
    %v488 = vsel %vm271, %v87, 0.0
    %489 = vadd.xlane.f32.xlu0 %v488
    %v490 = vpop.xlane.xlu0 %489
    %v491 = vsel %vm271, %v88, 0.0
    %492 = vadd.xlane.f32.xlu0 %v491
    %v493 = vpop.xlane.xlu0 %492
    %v494 = vsel %vm271, %v89, 0.0
    %495 = vadd.xlane.f32.xlu0 %v494
    %v496 = vpop.xlane.xlu0 %495
    %v497 = vsel %vm271, %v90, 0.0
    %498 = vadd.xlane.f32.xlu0 %v497
    %v499 = vpop.xlane.xlu0 %498
    %v500 = vsel %vm271, %v91, 0.0
    %501 = vadd.xlane.f32.xlu0 %v500
    %v502 = vpop.xlane.xlu0 %501
    %v503 = vsel %vm271, %v92, 0.0
    %504 = vadd.xlane.f32.xlu0 %v503
    %v505 = vpop.xlane.xlu0 %504
    %v506 = vsel %vm271, %v93, 0.0
    %507 = vadd.xlane.f32.xlu0 %v506
    %v508 = vpop.xlane.xlu0 %507
    %v509 = vsel %vm271, %v94, 0.0
    %510 = vadd.xlane.f32.xlu0 %v509
    %v511 = vpop.xlane.xlu0 %510
    %v512 = vsel %vm271, %v95, 0.0
    %513 = vadd.xlane.f32.xlu0 %v512
    %v514 = vpop.xlane.xlu0 %513
    %v515 = vsel %vm271, %v96, 0.0
    %516 = vadd.xlane.f32.xlu0 %v515
    %v517 = vpop.xlane.xlu0 %516
    %v518 = vsel %vm271, %v97, 0.0
    %519 = vadd.xlane.f32.xlu0 %v518
    %v520 = vpop.xlane.xlu0 %519
    %v521 = vsel %vm271, %v98, 0.0
    %522 = vadd.xlane.f32.xlu0 %v521
    %v523 = vpop.xlane.xlu0 %522
    %v524 = vsel %vm271, %v99, 0.0
    %525 = vadd.xlane.f32.xlu0 %v524
    %v526 = vpop.xlane.xlu0 %525
    %v527 = vsel %vm271, %v100, 0.0
    %528 = vadd.xlane.f32.xlu0 %v527
    %v529 = vpop.xlane.xlu0 %528
    %v530 = vsel %vm271, %v101, 0.0
    %531 = vadd.xlane.f32.xlu0 %v530
    %v532 = vpop.xlane.xlu0 %531
    %v533 = vsel %vm271, %v102, 0.0
    %534 = vadd.xlane.f32.xlu0 %v533
    %v535 = vpop.xlane.xlu0 %534
    %v536 = vsel %vm271, %v103, 0.0
    %537 = vadd.xlane.f32.xlu0 %v536
    %v538 = vpop.xlane.xlu0 %537
    %v539 = vsel %vm271, %v104, 0.0
    %540 = vadd.xlane.f32.xlu0 %v539
    %v541 = vpop.xlane.xlu0 %540
    %v542 = vsel %vm271, %v105, 0.0
    %543 = vadd.xlane.f32.xlu0 %v542
    %v544 = vpop.xlane.xlu0 %543
    %v545 = vsel %vm271, %v106, 0.0
    %546 = vadd.xlane.f32.xlu0 %v545
    %v547 = vpop.xlane.xlu0 %546
    %v548 = vsel %vm271, %v107, 0.0
    %549 = vadd.xlane.f32.xlu0 %v548
    %v550 = vpop.xlane.xlu0 %549
    %v551 = vsel %vm271, %v108, 0.0
    %552 = vadd.xlane.f32.xlu0 %v551
    %v553 = vpop.xlane.xlu0 %552
    %v554 = vsel %vm271, %v109, 0.0
    %555 = vadd.xlane.f32.xlu0 %v554
    %v556 = vpop.xlane.xlu0 %555
    %v557 = vsel %vm271, %v110, 0.0
    %558 = vadd.xlane.f32.xlu0 %v557
    %v559 = vpop.xlane.xlu0 %558
    %v560 = vsel %vm271, %v111, 0.0
    %561 = vadd.xlane.f32.xlu0 %v560
    %v562 = vpop.xlane.xlu0 %561
    %v563 = vsel %vm271, %v112, 0.0
    %564 = vadd.xlane.f32.xlu0 %v563
    %v565 = vpop.xlane.xlu0 %564
    %v566 = vsel %vm271, %v113, 0.0
    %567 = vadd.xlane.f32.xlu0 %v566
    %v568 = vpop.xlane.xlu0 %567
    %v569 = vsel %vm271, %v114, 0.0
    %570 = vadd.xlane.f32.xlu0 %v569
    %v571 = vpop.xlane.xlu0 %570
    %v572 = vsel %vm271, %v115, 0.0
    %573 = vadd.xlane.f32.xlu0 %v572
    %v574 = vpop.xlane.xlu0 %573
    %v575 = vsel %vm271, %v116, 0.0
    %576 = vadd.xlane.f32.xlu0 %v575
    %v577 = vpop.xlane.xlu0 %576
    %v578 = vsel %vm271, %v117, 0.0
    %579 = vadd.xlane.f32.xlu0 %v578
    %v580 = vpop.xlane.xlu0 %579
    %v581 = vsel %vm271, %v118, 0.0
    %582 = vadd.xlane.f32.xlu0 %v581
    %v583 = vpop.xlane.xlu0 %582
    %v584 = vsel %vm271, %v119, 0.0
    %585 = vadd.xlane.f32.xlu0 %v584
    %v586 = vpop.xlane.xlu0 %585
    %v587 = vsel %vm271, %v120, 0.0
    %588 = vadd.xlane.f32.xlu0 %v587
    %v589 = vpop.xlane.xlu0 %588
    %v590 = vsel %vm271, %v121, 0.0
    %591 = vadd.xlane.f32.xlu0 %v590
    %v592 = vpop.xlane.xlu0 %591
    %v593 = vsel %vm271, %v122, 0.0
    %594 = vadd.xlane.f32.xlu0 %v593
    %v595 = vpop.xlane.xlu0 %594
    %v596 = vsel %vm271, %v123, 0.0
    %597 = vadd.xlane.f32.xlu0 %v596
    %v598 = vpop.xlane.xlu0 %597
    %v599 = vsel %vm271, %v124, 0.0
    %600 = vadd.xlane.f32.xlu0 %v599
    %v601 = vpop.xlane.xlu0 %600
    %v602 = vsel %vm271, %v125, 0.0
    %603 = vadd.xlane.f32.xlu0 %v602
    %v604 = vpop.xlane.xlu0 %603
    %v605 = vsel %vm271, %v126, 0.0
    %606 = vadd.xlane.f32.xlu0 %v605
    %v607 = vpop.xlane.xlu0 %606
    %v608 = vsel %vm271, %v127, 0.0
    %609 = vadd.xlane.f32.xlu0 %v608
    %v610 = vpop.xlane.xlu0 %609
    %v611 = vsel %vm271, %v128, 0.0
    %612 = vadd.xlane.f32.xlu0 %v611
    %v613 = vpop.xlane.xlu0 %612
    %v614 = vsel %vm271, %v129, 0.0
    %615 = vadd.xlane.f32.xlu0 %v614
    %v616 = vpop.xlane.xlu0 %615
    %v617 = vsel %vm271, %v130, 0.0
    %618 = vadd.xlane.f32.xlu0 %v617
    %v619 = vpop.xlane.xlu0 %618
    %v620 = vsel %vm271, %v131, 0.0
    %621 = vadd.xlane.f32.xlu0 %v620
    %v622 = vpop.xlane.xlu0 %621
    %v623 = vsel %vm271, %v132, 0.0
    %624 = vadd.xlane.f32.xlu0 %v623
    %v625 = vpop.xlane.xlu0 %624
    %v626 = vsel %vm271, %v133, 0.0
    %627 = vadd.xlane.f32.xlu0 %v626
    %v628 = vpop.xlane.xlu0 %627
    %v629 = vsel %vm271, %v134, 0.0
    %630 = vadd.xlane.f32.xlu0 %v629
    %v631 = vpop.xlane.xlu0 %630
    %v632 = vsel %vm271, %v135, 0.0
    %633 = vadd.xlane.f32.xlu0 %v632
    %v634 = vpop.xlane.xlu0 %633
    %v635 = vsel %vm271, %v136, 0.0
    %636 = vadd.xlane.f32.xlu0 %v635
    %v637 = vpop.xlane.xlu0 %636
    %v638 = vsel %vm271, %v137, 0.0
    %639 = vadd.xlane.f32.xlu0 %v638
    %v640 = vpop.xlane.xlu0 %639
    %v641 = vsel %vm271, %v138, 0.0
    %642 = vadd.xlane.f32.xlu0 %v641
    %v643 = vpop.xlane.xlu0 %642
    %v644 = vsel %vm271, %v139, 0.0
    %645 = vadd.xlane.f32.xlu0 %v644
    %v646 = vpop.xlane.xlu0 %645
    %v647 = vsel %vm271, %v140, 0.0
    %648 = vadd.xlane.f32.xlu0 %v647
    %v649 = vpop.xlane.xlu0 %648
    %v650 = vsel %vm271, %v141, 0.0
    %651 = vadd.xlane.f32.xlu0 %v650
    %v652 = vpop.xlane.xlu0 %651
    %v653 = vsel %vm271, %v142, 0.0
    %654 = vadd.xlane.f32.xlu0 %v653
    %v655 = vpop.xlane.xlu0 %654
    %v656 = vsel %vm271, %v143, 0.0
    %657 = vadd.xlane.f32.xlu0 %v656
    %v658 = vpop.xlane.xlu0 %657
    %v659 = vsel %vm271, %v144, 0.0
    %660 = vadd.xlane.f32.xlu0 %v659
    %v661 = vpop.xlane.xlu0 %660
    %v662 = vsel %vm271, %v145, 0.0
    %663 = vadd.xlane.f32.xlu0 %v662
    %v664 = vpop.xlane.xlu0 %663
    %v665 = vsel %vm271, %v146, 0.0
    %666 = vadd.xlane.f32.xlu0 %v665
    %v667 = vpop.xlane.xlu0 %666
    %v668 = vsel %vm271, %v147, 0.0
    %669 = vadd.xlane.f32.xlu0 %v668
    %v670 = vpop.xlane.xlu0 %669
    %v671 = vsel %vm271, %v148, 0.0
    %672 = vadd.xlane.f32.xlu0 %v671
    %v673 = vpop.xlane.xlu0 %672
    %v674 = vsel %vm271, %v149, 0.0
    %675 = vadd.xlane.f32.xlu0 %v674
    %v676 = vpop.xlane.xlu0 %675
    %v677 = vsel %vm271, %v150, 0.0
    %678 = vadd.xlane.f32.xlu0 %v677
    %v679 = vpop.xlane.xlu0 %678
    %v680 = vsel %vm271, %v151, 0.0
    %681 = vadd.xlane.f32.xlu0 %v680
    %v682 = vpop.xlane.xlu0 %681
    %v683 = vsel %vm271, %v152, 0.0
    %684 = vadd.xlane.f32.xlu0 %v683
    %v685 = vpop.xlane.xlu0 %684
    %v686 = vsel %vm271, %v153, 0.0
    %687 = vadd.xlane.f32.xlu0 %v686
    %v688 = vpop.xlane.xlu0 %687
    %v689 = vsel %vm271, %v154, 0.0
    %690 = vadd.xlane.f32.xlu0 %v689
    %v691 = vpop.xlane.xlu0 %690
    %v692 = vsel %vm271, %v155, 0.0
    %693 = vadd.xlane.f32.xlu0 %v692
    %v694 = vpop.xlane.xlu0 %693
    %v695 = vsel %vm271, %v156, 0.0
    %696 = vadd.xlane.f32.xlu0 %v695
    %v697 = vpop.xlane.xlu0 %696
    %v698 = vsel %vm271, %v157, 0.0
    %699 = vadd.xlane.f32.xlu0 %v698
    %v700 = vpop.xlane.xlu0 %699
    %v701 = vsel %vm271, %v158, 0.0
    %702 = vadd.xlane.f32.xlu0 %v701
    %v703 = vpop.xlane.xlu0 %702
    %v704 = vsel %vm271, %v159, 0.0
    %705 = vadd.xlane.f32.xlu0 %v704
    %v706 = vpop.xlane.xlu0 %705
    %v707 = vsel %vm271, %v160, 0.0
    %708 = vadd.xlane.f32.xlu0 %v707
    %v709 = vpop.xlane.xlu0 %708
    %v710 = vsel %vm271, %v161, 0.0
    %711 = vadd.xlane.f32.xlu0 %v710
    %v712 = vpop.xlane.xlu0 %711
    %v713 = vsel %vm271, %v162, 0.0
    %714 = vadd.xlane.f32.xlu0 %v713
    %v715 = vpop.xlane.xlu0 %714
    %v716 = vsel %vm271, %v163, 0.0
    %717 = vadd.xlane.f32.xlu0 %v716
    %v718 = vpop.xlane.xlu0 %717
    %v719 = vsel %vm271, %v164, 0.0
    %720 = vadd.xlane.f32.xlu0 %v719
    %v721 = vpop.xlane.xlu0 %720
    %v722 = vsel %vm271, %v165, 0.0
    %723 = vadd.xlane.f32.xlu0 %v722
    %v724 = vpop.xlane.xlu0 %723
    %v725 = vsel %vm271, %v166, 0.0
    %726 = vadd.xlane.f32.xlu0 %v725
    %v727 = vpop.xlane.xlu0 %726
    %v728 = vsel %vm271, %v167, 0.0
    %729 = vadd.xlane.f32.xlu0 %v728
    %v730 = vpop.xlane.xlu0 %729
    %v731 = vsel %vm271, %v168, 0.0
    %732 = vadd.xlane.f32.xlu0 %v731
    %v733 = vpop.xlane.xlu0 %732
    %v734 = vsel %vm271, %v169, 0.0
    %735 = vadd.xlane.f32.xlu0 %v734
    %v736 = vpop.xlane.xlu0 %735
    %v737 = vsel %vm271, %v170, 0.0
    %738 = vadd.xlane.f32.xlu0 %v737
    %v739 = vpop.xlane.xlu0 %738
    %v740 = vsel %vm271, %v171, 0.0
    %741 = vadd.xlane.f32.xlu0 %v740
    %v742 = vpop.xlane.xlu0 %741
    %v743 = vsel %vm271, %v172, 0.0
    %744 = vadd.xlane.f32.xlu0 %v743
    %v745 = vpop.xlane.xlu0 %744
    %v746 = vsel %vm271, %v173, 0.0
    %747 = vadd.xlane.f32.xlu0 %v746
    %v748 = vpop.xlane.xlu0 %747
    %v749 = vsel %vm271, %v174, 0.0
    %750 = vadd.xlane.f32.xlu0 %v749
    %v751 = vpop.xlane.xlu0 %750
    %v752 = vsel %vm271, %v175, 0.0
    %753 = vadd.xlane.f32.xlu0 %v752
    %v754 = vpop.xlane.xlu0 %753
    %v755 = vsel %vm271, %v176, 0.0
    %756 = vadd.xlane.f32.xlu0 %v755
    %v757 = vpop.xlane.xlu0 %756
    %v758 = vsel %vm271, %v177, 0.0
    %759 = vadd.xlane.f32.xlu0 %v758
    %v760 = vpop.xlane.xlu0 %759
    %v761 = vsel %vm271, %v178, 0.0
    %762 = vadd.xlane.f32.xlu0 %v761
    %v763 = vpop.xlane.xlu0 %762
    %v764 = vsel %vm271, %v179, 0.0
    %765 = vadd.xlane.f32.xlu0 %v764
    %v766 = vpop.xlane.xlu0 %765
    %v767 = vsel %vm271, %v180, 0.0
    %768 = vadd.xlane.f32.xlu0 %v767
    %v769 = vpop.xlane.xlu0 %768
    %v770 = vsel %vm271, %v181, 0.0
    %771 = vadd.xlane.f32.xlu0 %v770
    %v772 = vpop.xlane.xlu0 %771
    %v773 = vsel %vm271, %v182, 0.0
    %774 = vadd.xlane.f32.xlu0 %v773
    %v775 = vpop.xlane.xlu0 %774
    %v776 = vsel %vm271, %v183, 0.0
    %777 = vadd.xlane.f32.xlu0 %v776
    %v778 = vpop.xlane.xlu0 %777
    %v779 = vsel %vm271, %v184, 0.0
    %780 = vadd.xlane.f32.xlu0 %v779
    %v781 = vpop.xlane.xlu0 %780
    %v782 = vsel %vm271, %v185, 0.0
    %783 = vadd.xlane.f32.xlu0 %v782
    %v784 = vpop.xlane.xlu0 %783
    %v785 = vsel %vm271, %v186, 0.0
    %786 = vadd.xlane.f32.xlu0 %v785
    %v787 = vpop.xlane.xlu0 %786
    %v788 = vsel %vm271, %v187, 0.0
    %789 = vadd.xlane.f32.xlu0 %v788
    %v790 = vpop.xlane.xlu0 %789
    %v791 = vsel %vm271, %v188, 0.0
    %792 = vadd.xlane.f32.xlu0 %v791
    %v793 = vpop.xlane.xlu0 %792
    %v794 = vsel %vm271, %v189, 0.0
    %795 = vadd.xlane.f32.xlu0 %v794
    %v796 = vpop.xlane.xlu0 %795
    %v797 = vsel %vm271, %v190, 0.0
    %798 = vadd.xlane.f32.xlu0 %v797
    %v799 = vpop.xlane.xlu0 %798
    %v800 = vsel %vm271, %v191, 0.0
    %801 = vadd.xlane.f32.xlu0 %v800
    %v802 = vpop.xlane.xlu0 %801
    %v803 = vsel %vm271, %v192, 0.0
    %804 = vadd.xlane.f32.xlu0 %v803
    %v805 = vpop.xlane.xlu0 %804
    %v806 = vsel %vm271, %v193, 0.0
    %807 = vadd.xlane.f32.xlu0 %v806
    %v808 = vpop.xlane.xlu0 %807
    %v809 = vsel %vm271, %v194, 0.0
    %810 = vadd.xlane.f32.xlu0 %v809
    %v811 = vpop.xlane.xlu0 %810
    %v812 = vsel %vm271, %v195, 0.0
    %813 = vadd.xlane.f32.xlu0 %v812
    %v814 = vpop.xlane.xlu0 %813
    %v815 = vsel %vm271, %v196, 0.0
    %816 = vadd.xlane.f32.xlu0 %v815
    %v817 = vpop.xlane.xlu0 %816
    %v818 = vsel %vm271, %v197, 0.0
    %819 = vadd.xlane.f32.xlu0 %v818
    %v820 = vpop.xlane.xlu0 %819
    %v821 = vsel %vm271, %v198, 0.0
    %822 = vadd.xlane.f32.xlu0 %v821
    %v823 = vpop.xlane.xlu0 %822
    %v824 = vsel %vm271, %v199, 0.0
    %825 = vadd.xlane.f32.xlu0 %v824
    %v826 = vpop.xlane.xlu0 %825
    %v827 = vsel %vm271, %v200, 0.0
    %828 = vadd.xlane.f32.xlu0 %v827
    %v829 = vpop.xlane.xlu0 %828
    %v830 = vsel %vm271, %v201, 0.0
    %831 = vadd.xlane.f32.xlu0 %v830
    %v832 = vpop.xlane.xlu0 %831
    %v833 = vsel %vm271, %v202, 0.0
    %834 = vadd.xlane.f32.xlu0 %v833
    %v835 = vpop.xlane.xlu0 %834
    %v836 = vsel %vm271, %v203, 0.0
    %837 = vadd.xlane.f32.xlu0 %v836
    %v838 = vpop.xlane.xlu0 %837
    %v839 = vsel %vm271, %v204, 0.0
    %840 = vadd.xlane.f32.xlu0 %v839
    %v841 = vpop.xlane.xlu0 %840
    %v842 = vsel %vm271, %v205, 0.0
    %843 = vadd.xlane.f32.xlu0 %v842
    %v844 = vpop.xlane.xlu0 %843
    %v845 = vsel %vm271, %v206, 0.0
    %846 = vadd.xlane.f32.xlu0 %v845
    %v847 = vpop.xlane.xlu0 %846
    %v848 = vsel %vm271, %v207, 0.0
    %849 = vadd.xlane.f32.xlu0 %v848
    %v850 = vpop.xlane.xlu0 %849
    %v851 = vsel %vm271, %v208, 0.0
    %852 = vadd.xlane.f32.xlu0 %v851
    %v853 = vpop.xlane.xlu0 %852
    %v854 = vsel %vm271, %v209, 0.0
    %855 = vadd.xlane.f32.xlu0 %v854
    %v856 = vpop.xlane.xlu0 %855
    %v857 = vsel %vm271, %v210, 0.0
    %858 = vadd.xlane.f32.xlu0 %v857
    %v859 = vpop.xlane.xlu0 %858
    %v860 = vsel %vm271, %v211, 0.0
    %861 = vadd.xlane.f32.xlu0 %v860
    %v862 = vpop.xlane.xlu0 %861
    %v863 = vsel %vm271, %v212, 0.0
    %864 = vadd.xlane.f32.xlu0 %v863
    %v865 = vpop.xlane.xlu0 %864
    %v866 = vsel %vm271, %v213, 0.0
    %867 = vadd.xlane.f32.xlu0 %v866
    %v868 = vpop.xlane.xlu0 %867
    %v869 = vsel %vm271, %v214, 0.0
    %870 = vadd.xlane.f32.xlu0 %v869
    %v871 = vpop.xlane.xlu0 %870
    %v872 = vsel %vm271, %v215, 0.0
    %873 = vadd.xlane.f32.xlu0 %v872
    %v874 = vpop.xlane.xlu0 %873
    %v875 = vsel %vm271, %v216, 0.0
    %876 = vadd.xlane.f32.xlu0 %v875
    %v877 = vpop.xlane.xlu0 %876
    %v878 = vsel %vm271, %v217, 0.0
    %879 = vadd.xlane.f32.xlu0 %v878
    %v880 = vpop.xlane.xlu0 %879
    %v881 = vsel %vm271, %v218, 0.0
    %882 = vadd.xlane.f32.xlu0 %v881
    %v883 = vpop.xlane.xlu0 %882
    %v884 = vsel %vm271, %v219, 0.0
    %885 = vadd.xlane.f32.xlu0 %v884
    %v886 = vpop.xlane.xlu0 %885
    %v887 = vsel %vm271, %v220, 0.0
    %888 = vadd.xlane.f32.xlu0 %v887
    %v889 = vpop.xlane.xlu0 %888
    %v890 = vsel %vm271, %v221, 0.0
    %891 = vadd.xlane.f32.xlu0 %v890
    %v892 = vpop.xlane.xlu0 %891
    %v893 = vsel %vm271, %v222, 0.0
    %894 = vadd.xlane.f32.xlu0 %v893
    %v895 = vpop.xlane.xlu0 %894
    %v896 = vsel %vm271, %v223, 0.0
    %897 = vadd.xlane.f32.xlu0 %v896
    %v898 = vpop.xlane.xlu0 %897
    %v899 = vsel %vm271, %v224, 0.0
    %900 = vadd.xlane.f32.xlu0 %v899
    %v901 = vpop.xlane.xlu0 %900
    %v902 = vsel %vm271, %v225, 0.0
    %903 = vadd.xlane.f32.xlu0 %v902
    %v904 = vpop.xlane.xlu0 %903
    %v905 = vsel %vm271, %v226, 0.0
    %906 = vadd.xlane.f32.xlu0 %v905
    %v907 = vpop.xlane.xlu0 %906
    %v908 = vsel %vm271, %v227, 0.0
    %909 = vadd.xlane.f32.xlu0 %v908
    %v910 = vpop.xlane.xlu0 %909
    %v911 = vsel %vm271, %v228, 0.0
    %912 = vadd.xlane.f32.xlu0 %v911
    %v913 = vpop.xlane.xlu0 %912
    %v914 = vsel %vm271, %v229, 0.0
    %915 = vadd.xlane.f32.xlu0 %v914
    %v916 = vpop.xlane.xlu0 %915
    %v917 = vsel %vm271, %v230, 0.0
    %918 = vadd.xlane.f32.xlu0 %v917
    %v919 = vpop.xlane.xlu0 %918
    %v920 = vsel %vm271, %v231, 0.0
    %921 = vadd.xlane.f32.xlu0 %v920
    %v922 = vpop.xlane.xlu0 %921
    %v923 = vsel %vm271, %v232, 0.0
    %924 = vadd.xlane.f32.xlu0 %v923
    %v925 = vpop.xlane.xlu0 %924
    %v926 = vsel %vm271, %v233, 0.0
    %927 = vadd.xlane.f32.xlu0 %v926
    %v928 = vpop.xlane.xlu0 %927
    %v929 = vsel %vm271, %v234, 0.0
    %930 = vadd.xlane.f32.xlu0 %v929
    %v931 = vpop.xlane.xlu0 %930
    %v932 = vsel %vm271, %v235, 0.0
    %933 = vadd.xlane.f32.xlu0 %v932
    %v934 = vpop.xlane.xlu0 %933
    %v935 = vsel %vm271, %v236, 0.0
    %936 = vadd.xlane.f32.xlu0 %v935
    %v937 = vpop.xlane.xlu0 %936
    %v938 = vsel %vm271, %v237, 0.0
    %939 = vadd.xlane.f32.xlu0 %v938
    %v940 = vpop.xlane.xlu0 %939
    %v941 = vsel %vm271, %v238, 0.0
    %942 = vadd.xlane.f32.xlu0 %v941
    %v943 = vpop.xlane.xlu0 %942
    %v944 = vsel %vm271, %v239, 0.0
    %945 = vadd.xlane.f32.xlu0 %v944
    %v946 = vpop.xlane.xlu0 %945
    %v947 = vsel %vm271, %v240, 0.0
    %948 = vadd.xlane.f32.xlu0 %v947
    %v949 = vpop.xlane.xlu0 %948
    %v950 = vsel %vm271, %v241, 0.0
    %951 = vadd.xlane.f32.xlu0 %v950
    %v952 = vpop.xlane.xlu0 %951
    %v953 = vsel %vm271, %v242, 0.0
    %954 = vadd.xlane.f32.xlu0 %v953
    %v955 = vpop.xlane.xlu0 %954
    %v956 = vsel %vm271, %v243, 0.0
    %957 = vadd.xlane.f32.xlu0 %v956
    %v958 = vpop.xlane.xlu0 %957
    %v959 = vsel %vm271, %v244, 0.0
    %960 = vadd.xlane.f32.xlu0 %v959
    %v961 = vpop.xlane.xlu0 %960
    %v962 = vsel %vm271, %v245, 0.0
    %963 = vadd.xlane.f32.xlu0 %v962
    %v964 = vpop.xlane.xlu0 %963
    %v965 = vsel %vm271, %v246, 0.0
    %966 = vadd.xlane.f32.xlu0 %v965
    %v967 = vpop.xlane.xlu0 %966
    %v968 = vsel %vm271, %v247, 0.0
    %969 = vadd.xlane.f32.xlu0 %v968
    %v970 = vpop.xlane.xlu0 %969
    %v971 = vsel %vm271, %v248, 0.0
    %972 = vadd.xlane.f32.xlu0 %v971
    %v973 = vpop.xlane.xlu0 %972
    %v974 = vsel %vm271, %v249, 0.0
    %975 = vadd.xlane.f32.xlu0 %v974
    %v976 = vpop.xlane.xlu0 %975
    %v977 = vsel %vm271, %v250, 0.0
    %978 = vadd.xlane.f32.xlu0 %v977
    %v979 = vpop.xlane.xlu0 %978
    %v980 = vsel %vm271, %v251, 0.0
    %981 = vadd.xlane.f32.xlu0 %v980
    %v982 = vpop.xlane.xlu0 %981
    %v983 = vsel %vm271, %v252, 0.0
    %984 = vadd.xlane.f32.xlu0 %v983
    %v985 = vpop.xlane.xlu0 %984
    %v986 = vsel %vm271, %v253, 0.0
    %987 = vadd.xlane.f32.xlu0 %v986
    %v988 = vpop.xlane.xlu0 %987
    %v989 = vsel %vm271, %v254, 0.0
    %990 = vadd.xlane.f32.xlu0 %v989
    %v991 = vpop.xlane.xlu0 %990
    %v992 = vsel %vm271, %v255, 0.0
    %993 = vadd.xlane.f32.xlu0 %v992
    %v994 = vpop.xlane.xlu0 %993
    %v995 = vsel %vm271, %v256, 0.0
    %996 = vadd.xlane.f32.xlu0 %v995
    %v997 = vpop.xlane.xlu0 %996
    %v998 = vsel %vm271, %v257, 0.0
    %999 = vadd.xlane.f32.xlu0 %v998
    %v1000 = vpop.xlane.xlu0 %999
    %v1001 = vsel %vm271, %v258, 0.0
    %1002 = vadd.xlane.f32.xlu0 %v1001
    %v1003 = vpop.xlane.xlu0 %1002
    %v1004 = vsel %vm271, %v259, 0.0
    %1005 = vadd.xlane.f32.xlu0 %v1004
    %v1006 = vpop.xlane.xlu0 %1005
    %v1007 = vsel %vm271, %v260, 0.0
    %1008 = vadd.xlane.f32.xlu0 %v1007
    %v1009 = vpop.xlane.xlu0 %1008
    %v1010 = vsel %vm271, %v261, 0.0
    %1011 = vadd.xlane.f32.xlu0 %v1010
    %v1012 = vpop.xlane.xlu0 %1011
    %v1013 = vsel %vm271, %v262, 0.0
    %1014 = vadd.xlane.f32.xlu0 %v1013
    %v1015 = vpop.xlane.xlu0 %1014
    %v1016 = vsel %vm271, %v263, 0.0
    %1017 = vadd.xlane.f32.xlu0 %v1016
    %v1018 = vpop.xlane.xlu0 %1017
    %v1019 = vsel %vm271, %v264, 0.0
    %1020 = vadd.xlane.f32.xlu0 %v1019
    %v1021 = vpop.xlane.xlu0 %1020
    %v1022 = vsel %vm271, %v265, 0.0
    %1023 = vadd.xlane.f32.xlu0 %v1022
    %v1024 = vpop.xlane.xlu0 %1023
    %v1025 = vsel %vm271, %v266, 0.0
    %1026 = vadd.xlane.f32.xlu0 %v1025
    %v1027 = vpop.xlane.xlu0 %1026
    %v1028 = vsel %vm271, %v267, 0.0
    %1029 = vadd.xlane.f32.xlu0 %v1028
    %v1030 = vpop.xlane.xlu0 %1029
    %v1031 = vsel %vm271, %v268, 0.0
    %1032 = vadd.xlane.f32.xlu0 %v1031
    %v1033 = vpop.xlane.xlu0 %1032
    %v1034 = vsel %vm271, %v269, 0.0
    %1035 = vadd.xlane.f32.xlu0 %v1034
    %v1036 = vpop.xlane.xlu0 %1035
    %v1037 = vsel %vm271, %v270, 0.0
    %1038 = vadd.xlane.f32.xlu0 %v1037
    %v1039 = vpop.xlane.xlu0 %1038
    %v1040 = vld [vmem:[%s1] sm:$0xff]
    %v1041 = vld [vmem:[%s1 + $0x8] sm:$0xff]
    %v1042 = vld [vmem:[%s1 + $0x10] sm:$0xff]
    %v1043 = vld [vmem:[%s1 + $0x18] sm:$0xff]
    %v1044 = vld [vmem:[%s1 + $0x20] sm:$0xff]
    %v1045 = vld [vmem:[%s1 + $0x28] sm:$0xff]
    %v1046 = vld [vmem:[%s1 + $0x30] sm:$0xff]
    %v1047 = vld [vmem:[%s1 + $0x38] sm:$0xff]
    %v1048 = vld [vmem:[%s1 + $0x40] sm:$0xff]
    %v1049 = vld [vmem:[%s1 + $0x48] sm:$0xff]
    %v1050 = vld [vmem:[%s1 + $0x50] sm:$0xff]
    %v1051 = vld [vmem:[%s1 + $0x58] sm:$0xff]
    %v1052 = vld [vmem:[%s1 + $0x60] sm:$0xff]
    %v1053 = vld [vmem:[%s1 + $0x68] sm:$0xff]
    %v1054 = vld [vmem:[%s1 + $0x70] sm:$0xff]
    %v1055 = vld [vmem:[%s1 + $0x78] sm:$0xff]
    %v1056 = vld [vmem:[%s1 + $0x80] sm:$0xff]
    %v1057 = vld [vmem:[%s1 + $0x88] sm:$0xff]
    %v1058 = vld [vmem:[%s1 + $0x90] sm:$0xff]
    %v1059 = vld [vmem:[%s1 + $0x98] sm:$0xff]
    %v1060 = vld [vmem:[%s1 + $0xa0] sm:$0xff]
    %v1061 = vld [vmem:[%s1 + $0xa8] sm:$0xff]
    %v1062 = vld [vmem:[%s1 + $0xb0] sm:$0xff]
    %v1063 = vld [vmem:[%s1 + $0xb8] sm:$0xff]
    %v1064 = vld [vmem:[%s1 + $0xc0] sm:$0xff]
    %v1065 = vld [vmem:[%s1 + $0xc8] sm:$0xff]
    %v1066 = vld [vmem:[%s1 + $0xd0] sm:$0xff]
    %v1067 = vld [vmem:[%s1 + $0xd8] sm:$0xff]
    %v1068 = vld [vmem:[%s1 + $0xe0] sm:$0xff]
    %v1069 = vld [vmem:[%s1 + $0xe8] sm:$0xff]
    %v1070 = vld [vmem:[%s1 + $0xf0] sm:$0xff]
    %v1071 = vld [vmem:[%s1 + $0xf8] sm:$0xff]
    %v1072 = vld [vmem:[%s1 + $0x100] sm:$0xff]
    %v1073 = vld [vmem:[%s1 + $0x108] sm:$0xff]
    %v1074 = vld [vmem:[%s1 + $0x110] sm:$0xff]
    %v1075 = vld [vmem:[%s1 + $0x118] sm:$0xff]
    %v1076 = vld [vmem:[%s1 + $0x120] sm:$0xff]
    %v1077 = vld [vmem:[%s1 + $0x128] sm:$0xff]
    %v1078 = vld [vmem:[%s1 + $0x130] sm:$0xff]
    %v1079 = vld [vmem:[%s1 + $0x138] sm:$0xff]
    %v1080 = vld [vmem:[%s1 + $0x140] sm:$0xff]
    %v1081 = vld [vmem:[%s1 + $0x148] sm:$0xff]
    %v1082 = vld [vmem:[%s1 + $0x150] sm:$0xff]
    %v1083 = vld [vmem:[%s1 + $0x158] sm:$0xff]
    %v1084 = vld [vmem:[%s1 + $0x160] sm:$0xff]
    %v1085 = vld [vmem:[%s1 + $0x168] sm:$0xff]
    %v1086 = vld [vmem:[%s1 + $0x170] sm:$0xff]
    %v1087 = vld [vmem:[%s1 + $0x178] sm:$0xff]
    %v1088 = vld [vmem:[%s1 + $0x180] sm:$0xff]
    %v1089 = vld [vmem:[%s1 + $0x188] sm:$0xff]
    %v1090 = vld [vmem:[%s1 + $0x190] sm:$0xff]
    %v1091 = vld [vmem:[%s1 + $0x198] sm:$0xff]
    %v1092 = vld [vmem:[%s1 + $0x1a0] sm:$0xff]
    %v1093 = vld [vmem:[%s1 + $0x1a8] sm:$0xff]
    %v1094 = vld [vmem:[%s1 + $0x1b0] sm:$0xff]
    %v1095 = vld [vmem:[%s1 + $0x1b8] sm:$0xff]
    %v1096 = vld [vmem:[%s1 + $0x1c0] sm:$0xff]
    %v1097 = vld [vmem:[%s1 + $0x1c8] sm:$0xff]
    %v1098 = vld [vmem:[%s1 + $0x1d0] sm:$0xff]
    %v1099 = vld [vmem:[%s1 + $0x1d8] sm:$0xff]
    %v1100 = vld [vmem:[%s1 + $0x1e0] sm:$0xff]
    %v1101 = vld [vmem:[%s1 + $0x1e8] sm:$0xff]
    %v1102 = vld [vmem:[%s1 + $0x1f0] sm:$0xff]
    %v1103 = vld [vmem:[%s1 + $0x1f8] sm:$0xff]
    %v1104 = vld [vmem:[%s2] sm:$0x3]
    %v1106 = vlaneseq
    %v1107 = vshrl.u32 %v1106, 7
    %v1108 = vsub.s32 0, %v1107
    %v1109 = vrot.slane %v1104, %v1108
    %v1110 = vlaneseq
    %v1111 = vshrl.u32 %v1110, 7
    %v1112 = vsub.s32 1, %v1111
    %v1113 = vrot.slane %v1104, %v1112
    %v1372 = vlaneseq
    %v1373 = vand.u32 %v1372, 127
    %v1374 = vlaneseq
    %v1375 = vshrl.u32 %v1374, 7
    %v1376 = vsub.s32 %v1373, %v1375
    %v1377 = vrot.slane %v274, %v1376
    %v1378 = vadd.s32 %v1373, 4294967288
    %v1379 = vlaneseq
    %v1380 = vshrl.u32 %v1379, 7
    %v1381 = vsub.s32 %v1378, %v1380
    %v1382 = vrot.slane %v277, %v1381
    %vm1383 = vcmask 130112
    %v1384 = vsel %vm1383, %v1382, %v1377
    %v1385 = vadd.s32 %v1373, 4294967280
    %v1386 = vlaneseq
    %v1387 = vshrl.u32 %v1386, 7
    %v1388 = vsub.s32 %v1385, %v1387
    %v1389 = vrot.slane %v280, %v1388
    %vm1390 = vcmask 195712
    %v1391 = vsel %vm1390, %v1389, %v1384
    %v1392 = vadd.s32 %v1373, 4294967272
    %v1393 = vlaneseq
    %v1394 = vshrl.u32 %v1393, 7
    %v1395 = vsub.s32 %v1392, %v1394
    %v1396 = vrot.slane %v283, %v1395
    %vm1397 = vcmask 261312
    %v1398 = vsel %vm1397, %v1396, %v1391
    %v1399 = vadd.s32 %v1373, 4294967264
    %v1400 = vlaneseq
    %v1401 = vshrl.u32 %v1400, 7
    %v1402 = vsub.s32 %v1399, %v1401
    %v1403 = vrot.slane %v286, %v1402
    %vm1404 = vcmask 326912
    %v1405 = vsel %vm1404, %v1403, %v1398
    %v1406 = vadd.s32 %v1373, 4294967256
    %v1407 = vlaneseq
    %v1408 = vshrl.u32 %v1407, 7
    %v1409 = vsub.s32 %v1406, %v1408
    %v1410 = vrot.slane %v289, %v1409
    %vm1411 = vcmask 392512
    %v1412 = vsel %vm1411, %v1410, %v1405
    %v1413 = vadd.s32 %v1373, 4294967248
    %v1414 = vlaneseq
    %v1415 = vshrl.u32 %v1414, 7
    %v1416 = vsub.s32 %v1413, %v1415
    %v1417 = vrot.slane %v292, %v1416
    %vm1418 = vcmask 458112
    %v1419 = vsel %vm1418, %v1417, %v1412
    %v1420 = vadd.s32 %v1373, 4294967240
    %v1421 = vlaneseq
    %v1422 = vshrl.u32 %v1421, 7
    %v1423 = vsub.s32 %v1420, %v1422
    %v1424 = vrot.slane %v295, %v1423
    %vm1425 = vcmask 523712
    %v1426 = vsel %vm1425, %v1424, %v1419
    %v1427 = vadd.s32 %v1373, 4294967232
    %v1428 = vlaneseq
    %v1429 = vshrl.u32 %v1428, 7
    %v1430 = vsub.s32 %v1427, %v1429
    %v1431 = vrot.slane %v298, %v1430
    %vm1432 = vcmask 589312
    %v1433 = vsel %vm1432, %v1431, %v1426
    %v1434 = vadd.s32 %v1373, 4294967224
    %v1435 = vlaneseq
    %v1436 = vshrl.u32 %v1435, 7
    %v1437 = vsub.s32 %v1434, %v1436
    %v1438 = vrot.slane %v301, %v1437
    %vm1439 = vcmask 654912
    %v1440 = vsel %vm1439, %v1438, %v1433
    %v1441 = vadd.s32 %v1373, 4294967216
    %v1442 = vlaneseq
    %v1443 = vshrl.u32 %v1442, 7
    %v1444 = vsub.s32 %v1441, %v1443
    %v1445 = vrot.slane %v304, %v1444
    %vm1446 = vcmask 720512
    %v1447 = vsel %vm1446, %v1445, %v1440
    %v1448 = vadd.s32 %v1373, 4294967208
    %v1449 = vlaneseq
    %v1450 = vshrl.u32 %v1449, 7
    %v1451 = vsub.s32 %v1448, %v1450
    %v1452 = vrot.slane %v307, %v1451
    %vm1453 = vcmask 786112
    %v1454 = vsel %vm1453, %v1452, %v1447
    %v1455 = vadd.s32 %v1373, 4294967200
    %v1456 = vlaneseq
    %v1457 = vshrl.u32 %v1456, 7
    %v1458 = vsub.s32 %v1455, %v1457
    %v1459 = vrot.slane %v310, %v1458
    %vm1460 = vcmask 851712
    %v1461 = vsel %vm1460, %v1459, %v1454
    %v1462 = vadd.s32 %v1373, 4294967192
    %v1463 = vlaneseq
    %v1464 = vshrl.u32 %v1463, 7
    %v1465 = vsub.s32 %v1462, %v1464
    %v1466 = vrot.slane %v313, %v1465
    %vm1467 = vcmask 917312
    %v1468 = vsel %vm1467, %v1466, %v1461
    %v1469 = vadd.s32 %v1373, 4294967184
    %v1470 = vlaneseq
    %v1471 = vshrl.u32 %v1470, 7
    %v1472 = vsub.s32 %v1469, %v1471
    %v1473 = vrot.slane %v316, %v1472
    %vm1474 = vcmask 982912
    %v1475 = vsel %vm1474, %v1473, %v1468
    %v1476 = vadd.s32 %v1373, 4294967176
    %v1477 = vlaneseq
    %v1478 = vshrl.u32 %v1477, 7
    %v1479 = vsub.s32 %v1476, %v1478
    %v1480 = vrot.slane %v319, %v1479
    %vm1481 = vcmask 1048512
    %v1482 = vsel %vm1481, %v1480, %v1475
    %v1483 = vlaneseq
    %v1484 = vshrl.u32 %v1483, 7
    %v1485 = vsub.s32 %v1373, %v1484
    %v1486 = vrot.slane %v322, %v1485
    %v1487 = vlaneseq
    %v1488 = vshrl.u32 %v1487, 7
    %v1489 = vsub.s32 %v1378, %v1488
    %v1490 = vrot.slane %v325, %v1489
    %v1491 = vsel %vm1383, %v1490, %v1486
    %v1492 = vlaneseq
    %v1493 = vshrl.u32 %v1492, 7
    %v1494 = vsub.s32 %v1385, %v1493
    %v1495 = vrot.slane %v328, %v1494
    %v1496 = vsel %vm1390, %v1495, %v1491
    %v1497 = vlaneseq
    %v1498 = vshrl.u32 %v1497, 7
    %v1499 = vsub.s32 %v1392, %v1498
    %v1500 = vrot.slane %v331, %v1499
    %v1501 = vsel %vm1397, %v1500, %v1496
    %v1502 = vlaneseq
    %v1503 = vshrl.u32 %v1502, 7
    %v1504 = vsub.s32 %v1399, %v1503
    %v1505 = vrot.slane %v334, %v1504
    %v1506 = vsel %vm1404, %v1505, %v1501
    %v1507 = vlaneseq
    %v1508 = vshrl.u32 %v1507, 7
    %v1509 = vsub.s32 %v1406, %v1508
    %v1510 = vrot.slane %v337, %v1509
    %v1511 = vsel %vm1411, %v1510, %v1506
    %v1512 = vlaneseq
    %v1513 = vshrl.u32 %v1512, 7
    %v1514 = vsub.s32 %v1413, %v1513
    %v1515 = vrot.slane %v340, %v1514
    %v1516 = vsel %vm1418, %v1515, %v1511
    %v1517 = vlaneseq
    %v1518 = vshrl.u32 %v1517, 7
    %v1519 = vsub.s32 %v1420, %v1518
    %v1520 = vrot.slane %v343, %v1519
    %v1521 = vsel %vm1425, %v1520, %v1516
    %v1522 = vlaneseq
    %v1523 = vshrl.u32 %v1522, 7
    %v1524 = vsub.s32 %v1427, %v1523
    %v1525 = vrot.slane %v346, %v1524
    %v1526 = vsel %vm1432, %v1525, %v1521
    %v1527 = vlaneseq
    %v1528 = vshrl.u32 %v1527, 7
    %v1529 = vsub.s32 %v1434, %v1528
    %v1530 = vrot.slane %v349, %v1529
    %v1531 = vsel %vm1439, %v1530, %v1526
    %v1532 = vlaneseq
    %v1533 = vshrl.u32 %v1532, 7
    %v1534 = vsub.s32 %v1441, %v1533
    %v1535 = vrot.slane %v352, %v1534
    %v1536 = vsel %vm1446, %v1535, %v1531
    %v1537 = vlaneseq
    %v1538 = vshrl.u32 %v1537, 7
    %v1539 = vsub.s32 %v1448, %v1538
    %v1540 = vrot.slane %v355, %v1539
    %v1541 = vsel %vm1453, %v1540, %v1536
    %v1542 = vlaneseq
    %v1543 = vshrl.u32 %v1542, 7
    %v1544 = vsub.s32 %v1455, %v1543
    %v1545 = vrot.slane %v358, %v1544
    %v1546 = vsel %vm1460, %v1545, %v1541
    %v1547 = vlaneseq
    %v1548 = vshrl.u32 %v1547, 7
    %v1549 = vsub.s32 %v1462, %v1548
    %v1550 = vrot.slane %v361, %v1549
    %v1551 = vsel %vm1467, %v1550, %v1546
    %v1552 = vlaneseq
    %v1553 = vshrl.u32 %v1552, 7
    %v1554 = vsub.s32 %v1469, %v1553
    %v1555 = vrot.slane %v364, %v1554
    %v1556 = vsel %vm1474, %v1555, %v1551
    %v1557 = vlaneseq
    %v1558 = vshrl.u32 %v1557, 7
    %v1559 = vsub.s32 %v1476, %v1558
    %v1560 = vrot.slane %v367, %v1559
    %v1561 = vsel %vm1481, %v1560, %v1556
    %v1562 = vlaneseq
    %v1563 = vshrl.u32 %v1562, 7
    %v1564 = vsub.s32 %v1373, %v1563
    %v1565 = vrot.slane %v370, %v1564
    %v1566 = vlaneseq
    %v1567 = vshrl.u32 %v1566, 7
    %v1568 = vsub.s32 %v1378, %v1567
    %v1569 = vrot.slane %v373, %v1568
    %v1570 = vsel %vm1383, %v1569, %v1565
    %v1571 = vlaneseq
    %v1572 = vshrl.u32 %v1571, 7
    %v1573 = vsub.s32 %v1385, %v1572
    %v1574 = vrot.slane %v376, %v1573
    %v1575 = vsel %vm1390, %v1574, %v1570
    %v1576 = vlaneseq
    %v1577 = vshrl.u32 %v1576, 7
    %v1578 = vsub.s32 %v1392, %v1577
    %v1579 = vrot.slane %v379, %v1578
    %v1580 = vsel %vm1397, %v1579, %v1575
    %v1581 = vlaneseq
    %v1582 = vshrl.u32 %v1581, 7
    %v1583 = vsub.s32 %v1399, %v1582
    %v1584 = vrot.slane %v382, %v1583
    %v1585 = vsel %vm1404, %v1584, %v1580
    %v1586 = vlaneseq
    %v1587 = vshrl.u32 %v1586, 7
    %v1588 = vsub.s32 %v1406, %v1587
    %v1589 = vrot.slane %v385, %v1588
    %v1590 = vsel %vm1411, %v1589, %v1585
    %v1591 = vlaneseq
    %v1592 = vshrl.u32 %v1591, 7
    %v1593 = vsub.s32 %v1413, %v1592
    %v1594 = vrot.slane %v388, %v1593
    %v1595 = vsel %vm1418, %v1594, %v1590
    %v1596 = vlaneseq
    %v1597 = vshrl.u32 %v1596, 7
    %v1598 = vsub.s32 %v1420, %v1597
    %v1599 = vrot.slane %v391, %v1598
    %v1600 = vsel %vm1425, %v1599, %v1595
    %v1601 = vlaneseq
    %v1602 = vshrl.u32 %v1601, 7
    %v1603 = vsub.s32 %v1427, %v1602
    %v1604 = vrot.slane %v394, %v1603
    %v1605 = vsel %vm1432, %v1604, %v1600
    %v1606 = vlaneseq
    %v1607 = vshrl.u32 %v1606, 7
    %v1608 = vsub.s32 %v1434, %v1607
    %v1609 = vrot.slane %v397, %v1608
    %v1610 = vsel %vm1439, %v1609, %v1605
    %v1611 = vlaneseq
    %v1612 = vshrl.u32 %v1611, 7
    %v1613 = vsub.s32 %v1441, %v1612
    %v1614 = vrot.slane %v400, %v1613
    %v1615 = vsel %vm1446, %v1614, %v1610
    %v1616 = vlaneseq
    %v1617 = vshrl.u32 %v1616, 7
    %v1618 = vsub.s32 %v1448, %v1617
    %v1619 = vrot.slane %v403, %v1618
    %v1620 = vsel %vm1453, %v1619, %v1615
    %v1621 = vlaneseq
    %v1622 = vshrl.u32 %v1621, 7
    %v1623 = vsub.s32 %v1455, %v1622
    %v1624 = vrot.slane %v406, %v1623
    %v1625 = vsel %vm1460, %v1624, %v1620
    %v1626 = vlaneseq
    %v1627 = vshrl.u32 %v1626, 7
    %v1628 = vsub.s32 %v1462, %v1627
    %v1629 = vrot.slane %v409, %v1628
    %v1630 = vsel %vm1467, %v1629, %v1625
    %v1631 = vlaneseq
    %v1632 = vshrl.u32 %v1631, 7
    %v1633 = vsub.s32 %v1469, %v1632
    %v1634 = vrot.slane %v412, %v1633
    %v1635 = vsel %vm1474, %v1634, %v1630
    %v1636 = vlaneseq
    %v1637 = vshrl.u32 %v1636, 7
    %v1638 = vsub.s32 %v1476, %v1637
    %v1639 = vrot.slane %v415, %v1638
    %v1640 = vsel %vm1481, %v1639, %v1635
    %v1641 = vlaneseq
    %v1642 = vshrl.u32 %v1641, 7
    %v1643 = vsub.s32 %v1373, %v1642
    %v1644 = vrot.slane %v418, %v1643
    %v1645 = vlaneseq
    %v1646 = vshrl.u32 %v1645, 7
    %v1647 = vsub.s32 %v1378, %v1646
    %v1648 = vrot.slane %v421, %v1647
    %v1649 = vsel %vm1383, %v1648, %v1644
    %v1650 = vlaneseq
    %v1651 = vshrl.u32 %v1650, 7
    %v1652 = vsub.s32 %v1385, %v1651
    %v1653 = vrot.slane %v424, %v1652
    %v1654 = vsel %vm1390, %v1653, %v1649
    %v1655 = vlaneseq
    %v1656 = vshrl.u32 %v1655, 7
    %v1657 = vsub.s32 %v1392, %v1656
    %v1658 = vrot.slane %v427, %v1657
    %v1659 = vsel %vm1397, %v1658, %v1654
    %v1660 = vlaneseq
    %v1661 = vshrl.u32 %v1660, 7
    %v1662 = vsub.s32 %v1399, %v1661
    %v1663 = vrot.slane %v430, %v1662
    %v1664 = vsel %vm1404, %v1663, %v1659
    %v1665 = vlaneseq
    %v1666 = vshrl.u32 %v1665, 7
    %v1667 = vsub.s32 %v1406, %v1666
    %v1668 = vrot.slane %v433, %v1667
    %v1669 = vsel %vm1411, %v1668, %v1664
    %v1670 = vlaneseq
    %v1671 = vshrl.u32 %v1670, 7
    %v1672 = vsub.s32 %v1413, %v1671
    %v1673 = vrot.slane %v436, %v1672
    %v1674 = vsel %vm1418, %v1673, %v1669
    %v1675 = vlaneseq
    %v1676 = vshrl.u32 %v1675, 7
    %v1677 = vsub.s32 %v1420, %v1676
    %v1678 = vrot.slane %v439, %v1677
    %v1679 = vsel %vm1425, %v1678, %v1674
    %v1680 = vlaneseq
    %v1681 = vshrl.u32 %v1680, 7
    %v1682 = vsub.s32 %v1427, %v1681
    %v1683 = vrot.slane %v442, %v1682
    %v1684 = vsel %vm1432, %v1683, %v1679
    %v1685 = vlaneseq
    %v1686 = vshrl.u32 %v1685, 7
    %v1687 = vsub.s32 %v1434, %v1686
    %v1688 = vrot.slane %v445, %v1687
    %v1689 = vsel %vm1439, %v1688, %v1684
    %v1690 = vlaneseq
    %v1691 = vshrl.u32 %v1690, 7
    %v1692 = vsub.s32 %v1441, %v1691
    %v1693 = vrot.slane %v448, %v1692
    %v1694 = vsel %vm1446, %v1693, %v1689
    %v1695 = vlaneseq
    %v1696 = vshrl.u32 %v1695, 7
    %v1697 = vsub.s32 %v1448, %v1696
    %v1698 = vrot.slane %v451, %v1697
    %v1699 = vsel %vm1453, %v1698, %v1694
    %v1700 = vlaneseq
    %v1701 = vshrl.u32 %v1700, 7
    %v1702 = vsub.s32 %v1455, %v1701
    %v1703 = vrot.slane %v454, %v1702
    %v1704 = vsel %vm1460, %v1703, %v1699
    %v1705 = vlaneseq
    %v1706 = vshrl.u32 %v1705, 7
    %v1707 = vsub.s32 %v1462, %v1706
    %v1708 = vrot.slane %v457, %v1707
    %v1709 = vsel %vm1467, %v1708, %v1704
    %v1710 = vlaneseq
    %v1711 = vshrl.u32 %v1710, 7
    %v1712 = vsub.s32 %v1469, %v1711
    %v1713 = vrot.slane %v460, %v1712
    %v1714 = vsel %vm1474, %v1713, %v1709
    %v1715 = vlaneseq
    %v1716 = vshrl.u32 %v1715, 7
    %v1717 = vsub.s32 %v1476, %v1716
    %v1718 = vrot.slane %v463, %v1717
    %v1719 = vsel %vm1481, %v1718, %v1714
    %v1720 = vlaneseq
    %v1721 = vshrl.u32 %v1720, 7
    %v1722 = vsub.s32 %v1373, %v1721
    %v1723 = vrot.slane %v466, %v1722
    %v1724 = vlaneseq
    %v1725 = vshrl.u32 %v1724, 7
    %v1726 = vsub.s32 %v1378, %v1725
    %v1727 = vrot.slane %v469, %v1726
    %v1728 = vsel %vm1383, %v1727, %v1723
    %v1729 = vlaneseq
    %v1730 = vshrl.u32 %v1729, 7
    %v1731 = vsub.s32 %v1385, %v1730
    %v1732 = vrot.slane %v472, %v1731
    %v1733 = vsel %vm1390, %v1732, %v1728
    %v1734 = vlaneseq
    %v1735 = vshrl.u32 %v1734, 7
    %v1736 = vsub.s32 %v1392, %v1735
    %v1737 = vrot.slane %v475, %v1736
    %v1738 = vsel %vm1397, %v1737, %v1733
    %v1739 = vlaneseq
    %v1740 = vshrl.u32 %v1739, 7
    %v1741 = vsub.s32 %v1399, %v1740
    %v1742 = vrot.slane %v478, %v1741
    %v1743 = vsel %vm1404, %v1742, %v1738
    %v1744 = vlaneseq
    %v1745 = vshrl.u32 %v1744, 7
    %v1746 = vsub.s32 %v1406, %v1745
    %v1747 = vrot.slane %v481, %v1746
    %v1748 = vsel %vm1411, %v1747, %v1743
    %v1749 = vlaneseq
    %v1750 = vshrl.u32 %v1749, 7
    %v1751 = vsub.s32 %v1413, %v1750
    %v1752 = vrot.slane %v484, %v1751
    %v1753 = vsel %vm1418, %v1752, %v1748
    %v1754 = vlaneseq
    %v1755 = vshrl.u32 %v1754, 7
    %v1756 = vsub.s32 %v1420, %v1755
    %v1757 = vrot.slane %v487, %v1756
    %v1758 = vsel %vm1425, %v1757, %v1753
    %v1759 = vlaneseq
    %v1760 = vshrl.u32 %v1759, 7
    %v1761 = vsub.s32 %v1427, %v1760
    %v1762 = vrot.slane %v490, %v1761
    %v1763 = vsel %vm1432, %v1762, %v1758
    %v1764 = vlaneseq
    %v1765 = vshrl.u32 %v1764, 7
    %v1766 = vsub.s32 %v1434, %v1765
    %v1767 = vrot.slane %v493, %v1766
    %v1768 = vsel %vm1439, %v1767, %v1763
    %v1769 = vlaneseq
    %v1770 = vshrl.u32 %v1769, 7
    %v1771 = vsub.s32 %v1441, %v1770
    %v1772 = vrot.slane %v496, %v1771
    %v1773 = vsel %vm1446, %v1772, %v1768
    %v1774 = vlaneseq
    %v1775 = vshrl.u32 %v1774, 7
    %v1776 = vsub.s32 %v1448, %v1775
    %v1777 = vrot.slane %v499, %v1776
    %v1778 = vsel %vm1453, %v1777, %v1773
    %v1779 = vlaneseq
    %v1780 = vshrl.u32 %v1779, 7
    %v1781 = vsub.s32 %v1455, %v1780
    %v1782 = vrot.slane %v502, %v1781
    %v1783 = vsel %vm1460, %v1782, %v1778
    %v1784 = vlaneseq
    %v1785 = vshrl.u32 %v1784, 7
    %v1786 = vsub.s32 %v1462, %v1785
    %v1787 = vrot.slane %v505, %v1786
    %v1788 = vsel %vm1467, %v1787, %v1783
    %v1789 = vlaneseq
    %v1790 = vshrl.u32 %v1789, 7
    %v1791 = vsub.s32 %v1469, %v1790
    %v1792 = vrot.slane %v508, %v1791
    %v1793 = vsel %vm1474, %v1792, %v1788
    %v1794 = vlaneseq
    %v1795 = vshrl.u32 %v1794, 7
    %v1796 = vsub.s32 %v1476, %v1795
    %v1797 = vrot.slane %v511, %v1796
    %v1798 = vsel %vm1481, %v1797, %v1793
    %v1799 = vlaneseq
    %v1800 = vshrl.u32 %v1799, 7
    %v1801 = vsub.s32 %v1373, %v1800
    %v1802 = vrot.slane %v514, %v1801
    %v1803 = vlaneseq
    %v1804 = vshrl.u32 %v1803, 7
    %v1805 = vsub.s32 %v1378, %v1804
    %v1806 = vrot.slane %v517, %v1805
    %v1807 = vsel %vm1383, %v1806, %v1802
    %v1808 = vlaneseq
    %v1809 = vshrl.u32 %v1808, 7
    %v1810 = vsub.s32 %v1385, %v1809
    %v1811 = vrot.slane %v520, %v1810
    %v1812 = vsel %vm1390, %v1811, %v1807
    %v1813 = vlaneseq
    %v1814 = vshrl.u32 %v1813, 7
    %v1815 = vsub.s32 %v1392, %v1814
    %v1816 = vrot.slane %v523, %v1815
    %v1817 = vsel %vm1397, %v1816, %v1812
    %v1818 = vlaneseq
    %v1819 = vshrl.u32 %v1818, 7
    %v1820 = vsub.s32 %v1399, %v1819
    %v1821 = vrot.slane %v526, %v1820
    %v1822 = vsel %vm1404, %v1821, %v1817
    %v1823 = vlaneseq
    %v1824 = vshrl.u32 %v1823, 7
    %v1825 = vsub.s32 %v1406, %v1824
    %v1826 = vrot.slane %v529, %v1825
    %v1827 = vsel %vm1411, %v1826, %v1822
    %v1828 = vlaneseq
    %v1829 = vshrl.u32 %v1828, 7
    %v1830 = vsub.s32 %v1413, %v1829
    %v1831 = vrot.slane %v532, %v1830
    %v1832 = vsel %vm1418, %v1831, %v1827
    %v1833 = vlaneseq
    %v1834 = vshrl.u32 %v1833, 7
    %v1835 = vsub.s32 %v1420, %v1834
    %v1836 = vrot.slane %v535, %v1835
    %v1837 = vsel %vm1425, %v1836, %v1832
    %v1838 = vlaneseq
    %v1839 = vshrl.u32 %v1838, 7
    %v1840 = vsub.s32 %v1427, %v1839
    %v1841 = vrot.slane %v538, %v1840
    %v1842 = vsel %vm1432, %v1841, %v1837
    %v1843 = vlaneseq
    %v1844 = vshrl.u32 %v1843, 7
    %v1845 = vsub.s32 %v1434, %v1844
    %v1846 = vrot.slane %v541, %v1845
    %v1847 = vsel %vm1439, %v1846, %v1842
    %v1848 = vlaneseq
    %v1849 = vshrl.u32 %v1848, 7
    %v1850 = vsub.s32 %v1441, %v1849
    %v1851 = vrot.slane %v544, %v1850
    %v1852 = vsel %vm1446, %v1851, %v1847
    %v1853 = vlaneseq
    %v1854 = vshrl.u32 %v1853, 7
    %v1855 = vsub.s32 %v1448, %v1854
    %v1856 = vrot.slane %v547, %v1855
    %v1857 = vsel %vm1453, %v1856, %v1852
    %v1858 = vlaneseq
    %v1859 = vshrl.u32 %v1858, 7
    %v1860 = vsub.s32 %v1455, %v1859
    %v1861 = vrot.slane %v550, %v1860
    %v1862 = vsel %vm1460, %v1861, %v1857
    %v1863 = vlaneseq
    %v1864 = vshrl.u32 %v1863, 7
    %v1865 = vsub.s32 %v1462, %v1864
    %v1866 = vrot.slane %v553, %v1865
    %v1867 = vsel %vm1467, %v1866, %v1862
    %v1868 = vlaneseq
    %v1869 = vshrl.u32 %v1868, 7
    %v1870 = vsub.s32 %v1469, %v1869
    %v1871 = vrot.slane %v556, %v1870
    %v1872 = vsel %vm1474, %v1871, %v1867
    %v1873 = vlaneseq
    %v1874 = vshrl.u32 %v1873, 7
    %v1875 = vsub.s32 %v1476, %v1874
    %v1876 = vrot.slane %v559, %v1875
    %v1877 = vsel %vm1481, %v1876, %v1872
    %v1878 = vlaneseq
    %v1879 = vshrl.u32 %v1878, 7
    %v1880 = vsub.s32 %v1373, %v1879
    %v1881 = vrot.slane %v562, %v1880
    %v1882 = vlaneseq
    %v1883 = vshrl.u32 %v1882, 7
    %v1884 = vsub.s32 %v1378, %v1883
    %v1885 = vrot.slane %v565, %v1884
    %v1886 = vsel %vm1383, %v1885, %v1881
    %v1887 = vlaneseq
    %v1888 = vshrl.u32 %v1887, 7
    %v1889 = vsub.s32 %v1385, %v1888
    %v1890 = vrot.slane %v568, %v1889
    %v1891 = vsel %vm1390, %v1890, %v1886
    %v1892 = vlaneseq
    %v1893 = vshrl.u32 %v1892, 7
    %v1894 = vsub.s32 %v1392, %v1893
    %v1895 = vrot.slane %v571, %v1894
    %v1896 = vsel %vm1397, %v1895, %v1891
    %v1897 = vlaneseq
    %v1898 = vshrl.u32 %v1897, 7
    %v1899 = vsub.s32 %v1399, %v1898
    %v1900 = vrot.slane %v574, %v1899
    %v1901 = vsel %vm1404, %v1900, %v1896
    %v1902 = vlaneseq
    %v1903 = vshrl.u32 %v1902, 7
    %v1904 = vsub.s32 %v1406, %v1903
    %v1905 = vrot.slane %v577, %v1904
    %v1906 = vsel %vm1411, %v1905, %v1901
    %v1907 = vlaneseq
    %v1908 = vshrl.u32 %v1907, 7
    %v1909 = vsub.s32 %v1413, %v1908
    %v1910 = vrot.slane %v580, %v1909
    %v1911 = vsel %vm1418, %v1910, %v1906
    %v1912 = vlaneseq
    %v1913 = vshrl.u32 %v1912, 7
    %v1914 = vsub.s32 %v1420, %v1913
    %v1915 = vrot.slane %v583, %v1914
    %v1916 = vsel %vm1425, %v1915, %v1911
    %v1917 = vlaneseq
    %v1918 = vshrl.u32 %v1917, 7
    %v1919 = vsub.s32 %v1427, %v1918
    %v1920 = vrot.slane %v586, %v1919
    %v1921 = vsel %vm1432, %v1920, %v1916
    %v1922 = vlaneseq
    %v1923 = vshrl.u32 %v1922, 7
    %v1924 = vsub.s32 %v1434, %v1923
    %v1925 = vrot.slane %v589, %v1924
    %v1926 = vsel %vm1439, %v1925, %v1921
    %v1927 = vlaneseq
    %v1928 = vshrl.u32 %v1927, 7
    %v1929 = vsub.s32 %v1441, %v1928
    %v1930 = vrot.slane %v592, %v1929
    %v1931 = vsel %vm1446, %v1930, %v1926
    %v1932 = vlaneseq
    %v1933 = vshrl.u32 %v1932, 7
    %v1934 = vsub.s32 %v1448, %v1933
    %v1935 = vrot.slane %v595, %v1934
    %v1936 = vsel %vm1453, %v1935, %v1931
    %v1937 = vlaneseq
    %v1938 = vshrl.u32 %v1937, 7
    %v1939 = vsub.s32 %v1455, %v1938
    %v1940 = vrot.slane %v598, %v1939
    %v1941 = vsel %vm1460, %v1940, %v1936
    %v1942 = vlaneseq
    %v1943 = vshrl.u32 %v1942, 7
    %v1944 = vsub.s32 %v1462, %v1943
    %v1945 = vrot.slane %v601, %v1944
    %v1946 = vsel %vm1467, %v1945, %v1941
    %v1947 = vlaneseq
    %v1948 = vshrl.u32 %v1947, 7
    %v1949 = vsub.s32 %v1469, %v1948
    %v1950 = vrot.slane %v604, %v1949
    %v1951 = vsel %vm1474, %v1950, %v1946
    %v1952 = vlaneseq
    %v1953 = vshrl.u32 %v1952, 7
    %v1954 = vsub.s32 %v1476, %v1953
    %v1955 = vrot.slane %v607, %v1954
    %v1956 = vsel %vm1481, %v1955, %v1951
    %v1957 = vlaneseq
    %v1958 = vshrl.u32 %v1957, 7
    %v1959 = vsub.s32 %v1373, %v1958
    %v1960 = vrot.slane %v610, %v1959
    %v1961 = vlaneseq
    %v1962 = vshrl.u32 %v1961, 7
    %v1963 = vsub.s32 %v1378, %v1962
    %v1964 = vrot.slane %v613, %v1963
    %v1965 = vsel %vm1383, %v1964, %v1960
    %v1966 = vlaneseq
    %v1967 = vshrl.u32 %v1966, 7
    %v1968 = vsub.s32 %v1385, %v1967
    %v1969 = vrot.slane %v616, %v1968
    %v1970 = vsel %vm1390, %v1969, %v1965
    %v1971 = vlaneseq
    %v1972 = vshrl.u32 %v1971, 7
    %v1973 = vsub.s32 %v1392, %v1972
    %v1974 = vrot.slane %v619, %v1973
    %v1975 = vsel %vm1397, %v1974, %v1970
    %v1976 = vlaneseq
    %v1977 = vshrl.u32 %v1976, 7
    %v1978 = vsub.s32 %v1399, %v1977
    %v1979 = vrot.slane %v622, %v1978
    %v1980 = vsel %vm1404, %v1979, %v1975
    %v1981 = vlaneseq
    %v1982 = vshrl.u32 %v1981, 7
    %v1983 = vsub.s32 %v1406, %v1982
    %v1984 = vrot.slane %v625, %v1983
    %v1985 = vsel %vm1411, %v1984, %v1980
    %v1986 = vlaneseq
    %v1987 = vshrl.u32 %v1986, 7
    %v1988 = vsub.s32 %v1413, %v1987
    %v1989 = vrot.slane %v628, %v1988
    %v1990 = vsel %vm1418, %v1989, %v1985
    %v1991 = vlaneseq
    %v1992 = vshrl.u32 %v1991, 7
    %v1993 = vsub.s32 %v1420, %v1992
    %v1994 = vrot.slane %v631, %v1993
    %v1995 = vsel %vm1425, %v1994, %v1990
    %v1996 = vlaneseq
    %v1997 = vshrl.u32 %v1996, 7
    %v1998 = vsub.s32 %v1427, %v1997
    %v1999 = vrot.slane %v634, %v1998
    %v2000 = vsel %vm1432, %v1999, %v1995
    %v2001 = vlaneseq
    %v2002 = vshrl.u32 %v2001, 7
    %v2003 = vsub.s32 %v1434, %v2002
    %v2004 = vrot.slane %v637, %v2003
    %v2005 = vsel %vm1439, %v2004, %v2000
    %v2006 = vlaneseq
    %v2007 = vshrl.u32 %v2006, 7
    %v2008 = vsub.s32 %v1441, %v2007
    %v2009 = vrot.slane %v640, %v2008
    %v2010 = vsel %vm1446, %v2009, %v2005
    %v2011 = vlaneseq
    %v2012 = vshrl.u32 %v2011, 7
    %v2013 = vsub.s32 %v1448, %v2012
    %v2014 = vrot.slane %v643, %v2013
    %v2015 = vsel %vm1453, %v2014, %v2010
    %v2016 = vlaneseq
    %v2017 = vshrl.u32 %v2016, 7
    %v2018 = vsub.s32 %v1455, %v2017
    %v2019 = vrot.slane %v646, %v2018
    %v2020 = vsel %vm1460, %v2019, %v2015
    %v2021 = vlaneseq
    %v2022 = vshrl.u32 %v2021, 7
    %v2023 = vsub.s32 %v1462, %v2022
    %v2024 = vrot.slane %v649, %v2023
    %v2025 = vsel %vm1467, %v2024, %v2020
    %v2026 = vlaneseq
    %v2027 = vshrl.u32 %v2026, 7
    %v2028 = vsub.s32 %v1469, %v2027
    %v2029 = vrot.slane %v652, %v2028
    %v2030 = vsel %vm1474, %v2029, %v2025
    %v2031 = vlaneseq
    %v2032 = vshrl.u32 %v2031, 7
    %v2033 = vsub.s32 %v1476, %v2032
    %v2034 = vrot.slane %v655, %v2033
    %v2035 = vsel %vm1481, %v2034, %v2030
    %v2036 = vlaneseq
    %v2037 = vshrl.u32 %v2036, 7
    %v2038 = vsub.s32 %v1373, %v2037
    %v2039 = vrot.slane %v658, %v2038
    %v2040 = vlaneseq
    %v2041 = vshrl.u32 %v2040, 7
    %v2042 = vsub.s32 %v1378, %v2041
    %v2043 = vrot.slane %v661, %v2042
    %v2044 = vsel %vm1383, %v2043, %v2039
    %v2045 = vlaneseq
    %v2046 = vshrl.u32 %v2045, 7
    %v2047 = vsub.s32 %v1385, %v2046
    %v2048 = vrot.slane %v664, %v2047
    %v2049 = vsel %vm1390, %v2048, %v2044
    %v2050 = vlaneseq
    %v2051 = vshrl.u32 %v2050, 7
    %v2052 = vsub.s32 %v1392, %v2051
    %v2053 = vrot.slane %v667, %v2052
    %v2054 = vsel %vm1397, %v2053, %v2049
    %v2055 = vlaneseq
    %v2056 = vshrl.u32 %v2055, 7
    %v2057 = vsub.s32 %v1399, %v2056
    %v2058 = vrot.slane %v670, %v2057
    %v2059 = vsel %vm1404, %v2058, %v2054
    %v2060 = vlaneseq
    %v2061 = vshrl.u32 %v2060, 7
    %v2062 = vsub.s32 %v1406, %v2061
    %v2063 = vrot.slane %v673, %v2062
    %v2064 = vsel %vm1411, %v2063, %v2059
    %v2065 = vlaneseq
    %v2066 = vshrl.u32 %v2065, 7
    %v2067 = vsub.s32 %v1413, %v2066
    %v2068 = vrot.slane %v676, %v2067
    %v2069 = vsel %vm1418, %v2068, %v2064
    %v2070 = vlaneseq
    %v2071 = vshrl.u32 %v2070, 7
    %v2072 = vsub.s32 %v1420, %v2071
    %v2073 = vrot.slane %v679, %v2072
    %v2074 = vsel %vm1425, %v2073, %v2069
    %v2075 = vlaneseq
    %v2076 = vshrl.u32 %v2075, 7
    %v2077 = vsub.s32 %v1427, %v2076
    %v2078 = vrot.slane %v682, %v2077
    %v2079 = vsel %vm1432, %v2078, %v2074
    %v2080 = vlaneseq
    %v2081 = vshrl.u32 %v2080, 7
    %v2082 = vsub.s32 %v1434, %v2081
    %v2083 = vrot.slane %v685, %v2082
    %v2084 = vsel %vm1439, %v2083, %v2079
    %v2085 = vlaneseq
    %v2086 = vshrl.u32 %v2085, 7
    %v2087 = vsub.s32 %v1441, %v2086
    %v2088 = vrot.slane %v688, %v2087
    %v2089 = vsel %vm1446, %v2088, %v2084
    %v2090 = vlaneseq
    %v2091 = vshrl.u32 %v2090, 7
    %v2092 = vsub.s32 %v1448, %v2091
    %v2093 = vrot.slane %v691, %v2092
    %v2094 = vsel %vm1453, %v2093, %v2089
    %v2095 = vlaneseq
    %v2096 = vshrl.u32 %v2095, 7
    %v2097 = vsub.s32 %v1455, %v2096
    %v2098 = vrot.slane %v694, %v2097
    %v2099 = vsel %vm1460, %v2098, %v2094
    %v2100 = vlaneseq
    %v2101 = vshrl.u32 %v2100, 7
    %v2102 = vsub.s32 %v1462, %v2101
    %v2103 = vrot.slane %v697, %v2102
    %v2104 = vsel %vm1467, %v2103, %v2099
    %v2105 = vlaneseq
    %v2106 = vshrl.u32 %v2105, 7
    %v2107 = vsub.s32 %v1469, %v2106
    %v2108 = vrot.slane %v700, %v2107
    %v2109 = vsel %vm1474, %v2108, %v2104
    %v2110 = vlaneseq
    %v2111 = vshrl.u32 %v2110, 7
    %v2112 = vsub.s32 %v1476, %v2111
    %v2113 = vrot.slane %v703, %v2112
    %v2114 = vsel %vm1481, %v2113, %v2109
    %v2115 = vlaneseq
    %v2116 = vshrl.u32 %v2115, 7
    %v2117 = vsub.s32 %v1373, %v2116
    %v2118 = vrot.slane %v706, %v2117
    %v2119 = vlaneseq
    %v2120 = vshrl.u32 %v2119, 7
    %v2121 = vsub.s32 %v1378, %v2120
    %v2122 = vrot.slane %v709, %v2121
    %v2123 = vsel %vm1383, %v2122, %v2118
    %v2124 = vlaneseq
    %v2125 = vshrl.u32 %v2124, 7
    %v2126 = vsub.s32 %v1385, %v2125
    %v2127 = vrot.slane %v712, %v2126
    %v2128 = vsel %vm1390, %v2127, %v2123
    %v2129 = vlaneseq
    %v2130 = vshrl.u32 %v2129, 7
    %v2131 = vsub.s32 %v1392, %v2130
    %v2132 = vrot.slane %v715, %v2131
    %v2133 = vsel %vm1397, %v2132, %v2128
    %v2134 = vlaneseq
    %v2135 = vshrl.u32 %v2134, 7
    %v2136 = vsub.s32 %v1399, %v2135
    %v2137 = vrot.slane %v718, %v2136
    %v2138 = vsel %vm1404, %v2137, %v2133
    %v2139 = vlaneseq
    %v2140 = vshrl.u32 %v2139, 7
    %v2141 = vsub.s32 %v1406, %v2140
    %v2142 = vrot.slane %v721, %v2141
    %v2143 = vsel %vm1411, %v2142, %v2138
    %v2144 = vlaneseq
    %v2145 = vshrl.u32 %v2144, 7
    %v2146 = vsub.s32 %v1413, %v2145
    %v2147 = vrot.slane %v724, %v2146
    %v2148 = vsel %vm1418, %v2147, %v2143
    %v2149 = vlaneseq
    %v2150 = vshrl.u32 %v2149, 7
    %v2151 = vsub.s32 %v1420, %v2150
    %v2152 = vrot.slane %v727, %v2151
    %v2153 = vsel %vm1425, %v2152, %v2148
    %v2154 = vlaneseq
    %v2155 = vshrl.u32 %v2154, 7
    %v2156 = vsub.s32 %v1427, %v2155
    %v2157 = vrot.slane %v730, %v2156
    %v2158 = vsel %vm1432, %v2157, %v2153
    %v2159 = vlaneseq
    %v2160 = vshrl.u32 %v2159, 7
    %v2161 = vsub.s32 %v1434, %v2160
    %v2162 = vrot.slane %v733, %v2161
    %v2163 = vsel %vm1439, %v2162, %v2158
    %v2164 = vlaneseq
    %v2165 = vshrl.u32 %v2164, 7
    %v2166 = vsub.s32 %v1441, %v2165
    %v2167 = vrot.slane %v736, %v2166
    %v2168 = vsel %vm1446, %v2167, %v2163
    %v2169 = vlaneseq
    %v2170 = vshrl.u32 %v2169, 7
    %v2171 = vsub.s32 %v1448, %v2170
    %v2172 = vrot.slane %v739, %v2171
    %v2173 = vsel %vm1453, %v2172, %v2168
    %v2174 = vlaneseq
    %v2175 = vshrl.u32 %v2174, 7
    %v2176 = vsub.s32 %v1455, %v2175
    %v2177 = vrot.slane %v742, %v2176
    %v2178 = vsel %vm1460, %v2177, %v2173
    %v2179 = vlaneseq
    %v2180 = vshrl.u32 %v2179, 7
    %v2181 = vsub.s32 %v1462, %v2180
    %v2182 = vrot.slane %v745, %v2181
    %v2183 = vsel %vm1467, %v2182, %v2178
    %v2184 = vlaneseq
    %v2185 = vshrl.u32 %v2184, 7
    %v2186 = vsub.s32 %v1469, %v2185
    %v2187 = vrot.slane %v748, %v2186
    %v2188 = vsel %vm1474, %v2187, %v2183
    %v2189 = vlaneseq
    %v2190 = vshrl.u32 %v2189, 7
    %v2191 = vsub.s32 %v1476, %v2190
    %v2192 = vrot.slane %v751, %v2191
    %v2193 = vsel %vm1481, %v2192, %v2188
    %v2194 = vlaneseq
    %v2195 = vshrl.u32 %v2194, 7
    %v2196 = vsub.s32 %v1373, %v2195
    %v2197 = vrot.slane %v754, %v2196
    %v2198 = vlaneseq
    %v2199 = vshrl.u32 %v2198, 7
    %v2200 = vsub.s32 %v1378, %v2199
    %v2201 = vrot.slane %v757, %v2200
    %v2202 = vsel %vm1383, %v2201, %v2197
    %v2203 = vlaneseq
    %v2204 = vshrl.u32 %v2203, 7
    %v2205 = vsub.s32 %v1385, %v2204
    %v2206 = vrot.slane %v760, %v2205
    %v2207 = vsel %vm1390, %v2206, %v2202
    %v2208 = vlaneseq
    %v2209 = vshrl.u32 %v2208, 7
    %v2210 = vsub.s32 %v1392, %v2209
    %v2211 = vrot.slane %v763, %v2210
    %v2212 = vsel %vm1397, %v2211, %v2207
    %v2213 = vlaneseq
    %v2214 = vshrl.u32 %v2213, 7
    %v2215 = vsub.s32 %v1399, %v2214
    %v2216 = vrot.slane %v766, %v2215
    %v2217 = vsel %vm1404, %v2216, %v2212
    %v2218 = vlaneseq
    %v2219 = vshrl.u32 %v2218, 7
    %v2220 = vsub.s32 %v1406, %v2219
    %v2221 = vrot.slane %v769, %v2220
    %v2222 = vsel %vm1411, %v2221, %v2217
    %v2223 = vlaneseq
    %v2224 = vshrl.u32 %v2223, 7
    %v2225 = vsub.s32 %v1413, %v2224
    %v2226 = vrot.slane %v772, %v2225
    %v2227 = vsel %vm1418, %v2226, %v2222
    %v2228 = vlaneseq
    %v2229 = vshrl.u32 %v2228, 7
    %v2230 = vsub.s32 %v1420, %v2229
    %v2231 = vrot.slane %v775, %v2230
    %v2232 = vsel %vm1425, %v2231, %v2227
    %v2233 = vlaneseq
    %v2234 = vshrl.u32 %v2233, 7
    %v2235 = vsub.s32 %v1427, %v2234
    %v2236 = vrot.slane %v778, %v2235
    %v2237 = vsel %vm1432, %v2236, %v2232
    %v2238 = vlaneseq
    %v2239 = vshrl.u32 %v2238, 7
    %v2240 = vsub.s32 %v1434, %v2239
    %v2241 = vrot.slane %v781, %v2240
    %v2242 = vsel %vm1439, %v2241, %v2237
    %v2243 = vlaneseq
    %v2244 = vshrl.u32 %v2243, 7
    %v2245 = vsub.s32 %v1441, %v2244
    %v2246 = vrot.slane %v784, %v2245
    %v2247 = vsel %vm1446, %v2246, %v2242
    %v2248 = vlaneseq
    %v2249 = vshrl.u32 %v2248, 7
    %v2250 = vsub.s32 %v1448, %v2249
    %v2251 = vrot.slane %v787, %v2250
    %v2252 = vsel %vm1453, %v2251, %v2247
    %v2253 = vlaneseq
    %v2254 = vshrl.u32 %v2253, 7
    %v2255 = vsub.s32 %v1455, %v2254
    %v2256 = vrot.slane %v790, %v2255
    %v2257 = vsel %vm1460, %v2256, %v2252
    %v2258 = vlaneseq
    %v2259 = vshrl.u32 %v2258, 7
    %v2260 = vsub.s32 %v1462, %v2259
    %v2261 = vrot.slane %v793, %v2260
    %v2262 = vsel %vm1467, %v2261, %v2257
    %v2263 = vlaneseq
    %v2264 = vshrl.u32 %v2263, 7
    %v2265 = vsub.s32 %v1469, %v2264
    %v2266 = vrot.slane %v796, %v2265
    %v2267 = vsel %vm1474, %v2266, %v2262
    %v2268 = vlaneseq
    %v2269 = vshrl.u32 %v2268, 7
    %v2270 = vsub.s32 %v1476, %v2269
    %v2271 = vrot.slane %v799, %v2270
    %v2272 = vsel %vm1481, %v2271, %v2267
    %v2273 = vlaneseq
    %v2274 = vshrl.u32 %v2273, 7
    %v2275 = vsub.s32 %v1373, %v2274
    %v2276 = vrot.slane %v802, %v2275
    %v2277 = vlaneseq
    %v2278 = vshrl.u32 %v2277, 7
    %v2279 = vsub.s32 %v1378, %v2278
    %v2280 = vrot.slane %v805, %v2279
    %v2281 = vsel %vm1383, %v2280, %v2276
    %v2282 = vlaneseq
    %v2283 = vshrl.u32 %v2282, 7
    %v2284 = vsub.s32 %v1385, %v2283
    %v2285 = vrot.slane %v808, %v2284
    %v2286 = vsel %vm1390, %v2285, %v2281
    %v2287 = vlaneseq
    %v2288 = vshrl.u32 %v2287, 7
    %v2289 = vsub.s32 %v1392, %v2288
    %v2290 = vrot.slane %v811, %v2289
    %v2291 = vsel %vm1397, %v2290, %v2286
    %v2292 = vlaneseq
    %v2293 = vshrl.u32 %v2292, 7
    %v2294 = vsub.s32 %v1399, %v2293
    %v2295 = vrot.slane %v814, %v2294
    %v2296 = vsel %vm1404, %v2295, %v2291
    %v2297 = vlaneseq
    %v2298 = vshrl.u32 %v2297, 7
    %v2299 = vsub.s32 %v1406, %v2298
    %v2300 = vrot.slane %v817, %v2299
    %v2301 = vsel %vm1411, %v2300, %v2296
    %v2302 = vlaneseq
    %v2303 = vshrl.u32 %v2302, 7
    %v2304 = vsub.s32 %v1413, %v2303
    %v2305 = vrot.slane %v820, %v2304
    %v2306 = vsel %vm1418, %v2305, %v2301
    %v2307 = vlaneseq
    %v2308 = vshrl.u32 %v2307, 7
    %v2309 = vsub.s32 %v1420, %v2308
    %v2310 = vrot.slane %v823, %v2309
    %v2311 = vsel %vm1425, %v2310, %v2306
    %v2312 = vlaneseq
    %v2313 = vshrl.u32 %v2312, 7
    %v2314 = vsub.s32 %v1427, %v2313
    %v2315 = vrot.slane %v826, %v2314
    %v2316 = vsel %vm1432, %v2315, %v2311
    %v2317 = vlaneseq
    %v2318 = vshrl.u32 %v2317, 7
    %v2319 = vsub.s32 %v1434, %v2318
    %v2320 = vrot.slane %v829, %v2319
    %v2321 = vsel %vm1439, %v2320, %v2316
    %v2322 = vlaneseq
    %v2323 = vshrl.u32 %v2322, 7
    %v2324 = vsub.s32 %v1441, %v2323
    %v2325 = vrot.slane %v832, %v2324
    %v2326 = vsel %vm1446, %v2325, %v2321
    %v2327 = vlaneseq
    %v2328 = vshrl.u32 %v2327, 7
    %v2329 = vsub.s32 %v1448, %v2328
    %v2330 = vrot.slane %v835, %v2329
    %v2331 = vsel %vm1453, %v2330, %v2326
    %v2332 = vlaneseq
    %v2333 = vshrl.u32 %v2332, 7
    %v2334 = vsub.s32 %v1455, %v2333
    %v2335 = vrot.slane %v838, %v2334
    %v2336 = vsel %vm1460, %v2335, %v2331
    %v2337 = vlaneseq
    %v2338 = vshrl.u32 %v2337, 7
    %v2339 = vsub.s32 %v1462, %v2338
    %v2340 = vrot.slane %v841, %v2339
    %v2341 = vsel %vm1467, %v2340, %v2336
    %v2342 = vlaneseq
    %v2343 = vshrl.u32 %v2342, 7
    %v2344 = vsub.s32 %v1469, %v2343
    %v2345 = vrot.slane %v844, %v2344
    %v2346 = vsel %vm1474, %v2345, %v2341
    %v2347 = vlaneseq
    %v2348 = vshrl.u32 %v2347, 7
    %v2349 = vsub.s32 %v1476, %v2348
    %v2350 = vrot.slane %v847, %v2349
    %v2351 = vsel %vm1481, %v2350, %v2346
    %v2352 = vlaneseq
    %v2353 = vshrl.u32 %v2352, 7
    %v2354 = vsub.s32 %v1373, %v2353
    %v2355 = vrot.slane %v850, %v2354
    %v2356 = vlaneseq
    %v2357 = vshrl.u32 %v2356, 7
    %v2358 = vsub.s32 %v1378, %v2357
    %v2359 = vrot.slane %v853, %v2358
    %v2360 = vsel %vm1383, %v2359, %v2355
    %v2361 = vlaneseq
    %v2362 = vshrl.u32 %v2361, 7
    %v2363 = vsub.s32 %v1385, %v2362
    %v2364 = vrot.slane %v856, %v2363
    %v2365 = vsel %vm1390, %v2364, %v2360
    %v2366 = vlaneseq
    %v2367 = vshrl.u32 %v2366, 7
    %v2368 = vsub.s32 %v1392, %v2367
    %v2369 = vrot.slane %v859, %v2368
    %v2370 = vsel %vm1397, %v2369, %v2365
    %v2371 = vlaneseq
    %v2372 = vshrl.u32 %v2371, 7
    %v2373 = vsub.s32 %v1399, %v2372
    %v2374 = vrot.slane %v862, %v2373
    %v2375 = vsel %vm1404, %v2374, %v2370
    %v2376 = vlaneseq
    %v2377 = vshrl.u32 %v2376, 7
    %v2378 = vsub.s32 %v1406, %v2377
    %v2379 = vrot.slane %v865, %v2378
    %v2380 = vsel %vm1411, %v2379, %v2375
    %v2381 = vlaneseq
    %v2382 = vshrl.u32 %v2381, 7
    %v2383 = vsub.s32 %v1413, %v2382
    %v2384 = vrot.slane %v868, %v2383
    %v2385 = vsel %vm1418, %v2384, %v2380
    %v2386 = vlaneseq
    %v2387 = vshrl.u32 %v2386, 7
    %v2388 = vsub.s32 %v1420, %v2387
    %v2389 = vrot.slane %v871, %v2388
    %v2390 = vsel %vm1425, %v2389, %v2385
    %v2391 = vlaneseq
    %v2392 = vshrl.u32 %v2391, 7
    %v2393 = vsub.s32 %v1427, %v2392
    %v2394 = vrot.slane %v874, %v2393
    %v2395 = vsel %vm1432, %v2394, %v2390
    %v2396 = vlaneseq
    %v2397 = vshrl.u32 %v2396, 7
    %v2398 = vsub.s32 %v1434, %v2397
    %v2399 = vrot.slane %v877, %v2398
    %v2400 = vsel %vm1439, %v2399, %v2395
    %v2401 = vlaneseq
    %v2402 = vshrl.u32 %v2401, 7
    %v2403 = vsub.s32 %v1441, %v2402
    %v2404 = vrot.slane %v880, %v2403
    %v2405 = vsel %vm1446, %v2404, %v2400
    %v2406 = vlaneseq
    %v2407 = vshrl.u32 %v2406, 7
    %v2408 = vsub.s32 %v1448, %v2407
    %v2409 = vrot.slane %v883, %v2408
    %v2410 = vsel %vm1453, %v2409, %v2405
    %v2411 = vlaneseq
    %v2412 = vshrl.u32 %v2411, 7
    %v2413 = vsub.s32 %v1455, %v2412
    %v2414 = vrot.slane %v886, %v2413
    %v2415 = vsel %vm1460, %v2414, %v2410
    %v2416 = vlaneseq
    %v2417 = vshrl.u32 %v2416, 7
    %v2418 = vsub.s32 %v1462, %v2417
    %v2419 = vrot.slane %v889, %v2418
    %v2420 = vsel %vm1467, %v2419, %v2415
    %v2421 = vlaneseq
    %v2422 = vshrl.u32 %v2421, 7
    %v2423 = vsub.s32 %v1469, %v2422
    %v2424 = vrot.slane %v892, %v2423
    %v2425 = vsel %vm1474, %v2424, %v2420
    %v2426 = vlaneseq
    %v2427 = vshrl.u32 %v2426, 7
    %v2428 = vsub.s32 %v1476, %v2427
    %v2429 = vrot.slane %v895, %v2428
    %v2430 = vsel %vm1481, %v2429, %v2425
    %v2431 = vlaneseq
    %v2432 = vshrl.u32 %v2431, 7
    %v2433 = vsub.s32 %v1373, %v2432
    %v2434 = vrot.slane %v898, %v2433
    %v2435 = vlaneseq
    %v2436 = vshrl.u32 %v2435, 7
    %v2437 = vsub.s32 %v1378, %v2436
    %v2438 = vrot.slane %v901, %v2437
    %v2439 = vsel %vm1383, %v2438, %v2434
    %v2440 = vlaneseq
    %v2441 = vshrl.u32 %v2440, 7
    %v2442 = vsub.s32 %v1385, %v2441
    %v2443 = vrot.slane %v904, %v2442
    %v2444 = vsel %vm1390, %v2443, %v2439
    %v2445 = vlaneseq
    %v2446 = vshrl.u32 %v2445, 7
    %v2447 = vsub.s32 %v1392, %v2446
    %v2448 = vrot.slane %v907, %v2447
    %v2449 = vsel %vm1397, %v2448, %v2444
    %v2450 = vlaneseq
    %v2451 = vshrl.u32 %v2450, 7
    %v2452 = vsub.s32 %v1399, %v2451
    %v2453 = vrot.slane %v910, %v2452
    %v2454 = vsel %vm1404, %v2453, %v2449
    %v2455 = vlaneseq
    %v2456 = vshrl.u32 %v2455, 7
    %v2457 = vsub.s32 %v1406, %v2456
    %v2458 = vrot.slane %v913, %v2457
    %v2459 = vsel %vm1411, %v2458, %v2454
    %v2460 = vlaneseq
    %v2461 = vshrl.u32 %v2460, 7
    %v2462 = vsub.s32 %v1413, %v2461
    %v2463 = vrot.slane %v916, %v2462
    %v2464 = vsel %vm1418, %v2463, %v2459
    %v2465 = vlaneseq
    %v2466 = vshrl.u32 %v2465, 7
    %v2467 = vsub.s32 %v1420, %v2466
    %v2468 = vrot.slane %v919, %v2467
    %v2469 = vsel %vm1425, %v2468, %v2464
    %v2470 = vlaneseq
    %v2471 = vshrl.u32 %v2470, 7
    %v2472 = vsub.s32 %v1427, %v2471
    %v2473 = vrot.slane %v922, %v2472
    %v2474 = vsel %vm1432, %v2473, %v2469
    %v2475 = vlaneseq
    %v2476 = vshrl.u32 %v2475, 7
    %v2477 = vsub.s32 %v1434, %v2476
    %v2478 = vrot.slane %v925, %v2477
    %v2479 = vsel %vm1439, %v2478, %v2474
    %v2480 = vlaneseq
    %v2481 = vshrl.u32 %v2480, 7
    %v2482 = vsub.s32 %v1441, %v2481
    %v2483 = vrot.slane %v928, %v2482
    %v2484 = vsel %vm1446, %v2483, %v2479
    %v2485 = vlaneseq
    %v2486 = vshrl.u32 %v2485, 7
    %v2487 = vsub.s32 %v1448, %v2486
    %v2488 = vrot.slane %v931, %v2487
    %v2489 = vsel %vm1453, %v2488, %v2484
    %v2490 = vlaneseq
    %v2491 = vshrl.u32 %v2490, 7
    %v2492 = vsub.s32 %v1455, %v2491
    %v2493 = vrot.slane %v934, %v2492
    %v2494 = vsel %vm1460, %v2493, %v2489
    %v2495 = vlaneseq
    %v2496 = vshrl.u32 %v2495, 7
    %v2497 = vsub.s32 %v1462, %v2496
    %v2498 = vrot.slane %v937, %v2497
    %v2499 = vsel %vm1467, %v2498, %v2494
    %v2500 = vlaneseq
    %v2501 = vshrl.u32 %v2500, 7
    %v2502 = vsub.s32 %v1469, %v2501
    %v2503 = vrot.slane %v940, %v2502
    %v2504 = vsel %vm1474, %v2503, %v2499
    %v2505 = vlaneseq
    %v2506 = vshrl.u32 %v2505, 7
    %v2507 = vsub.s32 %v1476, %v2506
    %v2508 = vrot.slane %v943, %v2507
    %v2509 = vsel %vm1481, %v2508, %v2504
    %v2510 = vlaneseq
    %v2511 = vshrl.u32 %v2510, 7
    %v2512 = vsub.s32 %v1373, %v2511
    %v2513 = vrot.slane %v946, %v2512
    %v2514 = vlaneseq
    %v2515 = vshrl.u32 %v2514, 7
    %v2516 = vsub.s32 %v1378, %v2515
    %v2517 = vrot.slane %v949, %v2516
    %v2518 = vsel %vm1383, %v2517, %v2513
    %v2519 = vlaneseq
    %v2520 = vshrl.u32 %v2519, 7
    %v2521 = vsub.s32 %v1385, %v2520
    %v2522 = vrot.slane %v952, %v2521
    %v2523 = vsel %vm1390, %v2522, %v2518
    %v2524 = vlaneseq
    %v2525 = vshrl.u32 %v2524, 7
    %v2526 = vsub.s32 %v1392, %v2525
    %v2527 = vrot.slane %v955, %v2526
    %v2528 = vsel %vm1397, %v2527, %v2523
    %v2529 = vlaneseq
    %v2530 = vshrl.u32 %v2529, 7
    %v2531 = vsub.s32 %v1399, %v2530
    %v2532 = vrot.slane %v958, %v2531
    %v2533 = vsel %vm1404, %v2532, %v2528
    %v2534 = vlaneseq
    %v2535 = vshrl.u32 %v2534, 7
    %v2536 = vsub.s32 %v1406, %v2535
    %v2537 = vrot.slane %v961, %v2536
    %v2538 = vsel %vm1411, %v2537, %v2533
    %v2539 = vlaneseq
    %v2540 = vshrl.u32 %v2539, 7
    %v2541 = vsub.s32 %v1413, %v2540
    %v2542 = vrot.slane %v964, %v2541
    %v2543 = vsel %vm1418, %v2542, %v2538
    %v2544 = vlaneseq
    %v2545 = vshrl.u32 %v2544, 7
    %v2546 = vsub.s32 %v1420, %v2545
    %v2547 = vrot.slane %v967, %v2546
    %v2548 = vsel %vm1425, %v2547, %v2543
    %v2549 = vlaneseq
    %v2550 = vshrl.u32 %v2549, 7
    %v2551 = vsub.s32 %v1427, %v2550
    %v2552 = vrot.slane %v970, %v2551
    %v2553 = vsel %vm1432, %v2552, %v2548
    %v2554 = vlaneseq
    %v2555 = vshrl.u32 %v2554, 7
    %v2556 = vsub.s32 %v1434, %v2555
    %v2557 = vrot.slane %v973, %v2556
    %v2558 = vsel %vm1439, %v2557, %v2553
    %v2559 = vlaneseq
    %v2560 = vshrl.u32 %v2559, 7
    %v2561 = vsub.s32 %v1441, %v2560
    %v2562 = vrot.slane %v976, %v2561
    %v2563 = vsel %vm1446, %v2562, %v2558
    %v2564 = vlaneseq
    %v2565 = vshrl.u32 %v2564, 7
    %v2566 = vsub.s32 %v1448, %v2565
    %v2567 = vrot.slane %v979, %v2566
    %v2568 = vsel %vm1453, %v2567, %v2563
    %v2569 = vlaneseq
    %v2570 = vshrl.u32 %v2569, 7
    %v2571 = vsub.s32 %v1455, %v2570
    %v2572 = vrot.slane %v982, %v2571
    %v2573 = vsel %vm1460, %v2572, %v2568
    %v2574 = vlaneseq
    %v2575 = vshrl.u32 %v2574, 7
    %v2576 = vsub.s32 %v1462, %v2575
    %v2577 = vrot.slane %v985, %v2576
    %v2578 = vsel %vm1467, %v2577, %v2573
    %v2579 = vlaneseq
    %v2580 = vshrl.u32 %v2579, 7
    %v2581 = vsub.s32 %v1469, %v2580
    %v2582 = vrot.slane %v988, %v2581
    %v2583 = vsel %vm1474, %v2582, %v2578
    %v2584 = vlaneseq
    %v2585 = vshrl.u32 %v2584, 7
    %v2586 = vsub.s32 %v1476, %v2585
    %v2587 = vrot.slane %v991, %v2586
    %v2588 = vsel %vm1481, %v2587, %v2583
    %v2589 = vlaneseq
    %v2590 = vshrl.u32 %v2589, 7
    %v2591 = vsub.s32 %v1373, %v2590
    %v2592 = vrot.slane %v994, %v2591
    %v2593 = vlaneseq
    %v2594 = vshrl.u32 %v2593, 7
    %v2595 = vsub.s32 %v1378, %v2594
    %v2596 = vrot.slane %v997, %v2595
    %v2597 = vsel %vm1383, %v2596, %v2592
    %v2598 = vlaneseq
    %v2599 = vshrl.u32 %v2598, 7
    %v2600 = vsub.s32 %v1385, %v2599
    %v2601 = vrot.slane %v1000, %v2600
    %v2602 = vsel %vm1390, %v2601, %v2597
    %v2603 = vlaneseq
    %v2604 = vshrl.u32 %v2603, 7
    %v2605 = vsub.s32 %v1392, %v2604
    %v2606 = vrot.slane %v1003, %v2605
    %v2607 = vsel %vm1397, %v2606, %v2602
    %v2608 = vlaneseq
    %v2609 = vshrl.u32 %v2608, 7
    %v2610 = vsub.s32 %v1399, %v2609
    %v2611 = vrot.slane %v1006, %v2610
    %v2612 = vsel %vm1404, %v2611, %v2607
    %v2613 = vlaneseq
    %v2614 = vshrl.u32 %v2613, 7
    %v2615 = vsub.s32 %v1406, %v2614
    %v2616 = vrot.slane %v1009, %v2615
    %v2617 = vsel %vm1411, %v2616, %v2612
    %v2618 = vlaneseq
    %v2619 = vshrl.u32 %v2618, 7
    %v2620 = vsub.s32 %v1413, %v2619
    %v2621 = vrot.slane %v1012, %v2620
    %v2622 = vsel %vm1418, %v2621, %v2617
    %v2623 = vlaneseq
    %v2624 = vshrl.u32 %v2623, 7
    %v2625 = vsub.s32 %v1420, %v2624
    %v2626 = vrot.slane %v1015, %v2625
    %v2627 = vsel %vm1425, %v2626, %v2622
    %v2628 = vlaneseq
    %v2629 = vshrl.u32 %v2628, 7
    %v2630 = vsub.s32 %v1427, %v2629
    %v2631 = vrot.slane %v1018, %v2630
    %v2632 = vsel %vm1432, %v2631, %v2627
    %v2633 = vlaneseq
    %v2634 = vshrl.u32 %v2633, 7
    %v2635 = vsub.s32 %v1434, %v2634
    %v2636 = vrot.slane %v1021, %v2635
    %v2637 = vsel %vm1439, %v2636, %v2632
    %v2638 = vlaneseq
    %v2639 = vshrl.u32 %v2638, 7
    %v2640 = vsub.s32 %v1441, %v2639
    %v2641 = vrot.slane %v1024, %v2640
    %v2642 = vsel %vm1446, %v2641, %v2637
    %v2643 = vlaneseq
    %v2644 = vshrl.u32 %v2643, 7
    %v2645 = vsub.s32 %v1448, %v2644
    %v2646 = vrot.slane %v1027, %v2645
    %v2647 = vsel %vm1453, %v2646, %v2642
    %v2648 = vlaneseq
    %v2649 = vshrl.u32 %v2648, 7
    %v2650 = vsub.s32 %v1455, %v2649
    %v2651 = vrot.slane %v1030, %v2650
    %v2652 = vsel %vm1460, %v2651, %v2647
    %v2653 = vlaneseq
    %v2654 = vshrl.u32 %v2653, 7
    %v2655 = vsub.s32 %v1462, %v2654
    %v2656 = vrot.slane %v1033, %v2655
    %v2657 = vsel %vm1467, %v2656, %v2652
    %v2658 = vlaneseq
    %v2659 = vshrl.u32 %v2658, 7
    %v2660 = vsub.s32 %v1469, %v2659
    %v2661 = vrot.slane %v1036, %v2660
    %v2662 = vsel %vm1474, %v2661, %v2657
    %v2663 = vlaneseq
    %v2664 = vshrl.u32 %v2663, 7
    %v2665 = vsub.s32 %v1476, %v2664
    %v2666 = vrot.slane %v1039, %v2665
    %v2667 = vsel %vm1481, %v2666, %v2662
    %vm2668 = vcmask 1041409
    %v2669 = vsel %vm2668, %v1640, %v1482
    %vm2670 = vcmask 1042434
    %v2671 = vsel %vm2670, %v1798, %v2669
    %vm2672 = vcmask 1043459
    %v2673 = vsel %vm2672, %v1956, %v2671
    %vm2674 = vcmask 1044484
    %v2675 = vsel %vm2674, %v2114, %v2673
    %vm2676 = vcmask 1045509
    %v2677 = vsel %vm2676, %v2272, %v2675
    %vm2678 = vcmask 1046534
    %v2679 = vsel %vm2678, %v2430, %v2677
    %vm2680 = vcmask 1047559
    %v2681 = vsel %vm2680, %v2588, %v2679
    %v2682 = vsel %vm2668, %v1719, %v1561
    %v2683 = vsel %vm2670, %v1877, %v2682
    %v2684 = vsel %vm2672, %v2035, %v2683
    %v2685 = vsel %vm2674, %v2193, %v2684
    %v2686 = vsel %vm2676, %v2351, %v2685
    %v2687 = vsel %vm2678, %v2509, %v2686
    %v2688 = vsel %vm2680, %v2667, %v2687
    %2691 = vmatprep.subr.mxu0 %v1041
    %2692 = vmatpush1.msra.mxu0 %v1040
    %2693 = vmatprep.subr.mxu0 %v1043
    %2694 = vmatpush1.msra.mxu0 %v1042
    %2695 = vmatprep.subr.mxu0 %v1045
    %2696 = vmatpush1.msra.mxu0 %v1044
    %2697 = vmatprep.subr.mxu0 %v1047
    %2698 = vmatpush1.msra.mxu0 %v1046
    %2699 = vmatprep.subr.mxu0 %v1049
    %2700 = vmatpush1.msra.mxu0 %v1048
    %2701 = vmatprep.subr.mxu0 %v1051
    %2702 = vmatpush1.msra.mxu0 %v1050
    %2703 = vmatprep.subr.mxu0 %v1053
    %2704 = vmatpush1.msra.mxu0 %v1052
    %2705 = vmatprep.subr.mxu0 %v1055
    %2706 = vmatpush1.msra.mxu0 %v1054
    %2707 = vmatprep.subr.mxu0 %v1057
    %2708 = vmatpush1.msra.mxu0 %v1056
    %2709 = vmatprep.subr.mxu0 %v1059
    %2710 = vmatpush1.msra.mxu0 %v1058
    %2711 = vmatprep.subr.mxu0 %v1061
    %2712 = vmatpush1.msra.mxu0 %v1060
    %2713 = vmatprep.subr.mxu0 %v1063
    %2714 = vmatpush1.msra.mxu0 %v1062
    %2715 = vmatprep.subr.mxu0 %v1065
    %2716 = vmatpush1.msra.mxu0 %v1064
    %2717 = vmatprep.subr.mxu0 %v1067
    %2718 = vmatpush1.msra.mxu0 %v1066
    %2719 = vmatprep.subr.mxu0 %v1069
    %2720 = vmatpush1.msra.mxu0 %v1068
    %2721 = vmatprep.subr.mxu0 %v1071
    %2722 = vmatpush1.msra.mxu0 %v1070
    %2723 = vmatprep.subr.mxu0 %v1073
    %2724 = vmatpush1.msra.mxu0 %v1072
    %2725 = vmatprep.subr.mxu0 %v1075
    %2726 = vmatpush1.msra.mxu0 %v1074
    %2727 = vmatprep.subr.mxu0 %v1077
    %2728 = vmatpush1.msra.mxu0 %v1076
    %2729 = vmatprep.subr.mxu0 %v1079
    %2730 = vmatpush1.msra.mxu0 %v1078
    %2731 = vmatprep.subr.mxu0 %v1081
    %2732 = vmatpush1.msra.mxu0 %v1080
    %2733 = vmatprep.subr.mxu0 %v1083
    %2734 = vmatpush1.msra.mxu0 %v1082
    %2735 = vmatprep.subr.mxu0 %v1085
    %2736 = vmatpush1.msra.mxu0 %v1084
    %2737 = vmatprep.subr.mxu0 %v1087
    %2738 = vmatpush1.msra.mxu0 %v1086
    %2739 = vmatprep.subr.mxu0 %v1089
    %2740 = vmatpush1.msra.mxu0 %v1088
    %2741 = vmatprep.subr.mxu0 %v1091
    %2742 = vmatpush1.msra.mxu0 %v1090
    %2743 = vmatprep.subr.mxu0 %v1093
    %2744 = vmatpush1.msra.mxu0 %v1092
    %2745 = vmatprep.subr.mxu0 %v1095
    %2746 = vmatpush1.msra.mxu0 %v1094
    %2747 = vmatprep.subr.mxu0 %v1097
    %2748 = vmatpush1.msra.mxu0 %v1096
    %2749 = vmatprep.subr.mxu0 %v1099
    %2750 = vmatpush1.msra.mxu0 %v1098
    %2751 = vmatprep.subr.mxu0 %v1101
    %2752 = vmatpush1.msra.mxu0 %v1100
    %2753 = vmatprep.subr.mxu0 %v1103
    %2754 = vmatpush1.msra.mxu0 %v1102
    %2755 = vmatprep.mubr.f32.mxu0 %v2688
    %2756 = vmatmul.mubr.f32.gmra.mrb[0].mxu0 %v2681
    %v2757 = vpop.f32.mrb[0].mxu0
    %v2758 = vadd.f32 %v1109, %v2757
    %v2759 = vpop.f32.mrb[0].mxu0
    %v2760 = vadd.f32 %v1113, %v2759
    %2761 = vdwg.mxu0
    %v2762 = vmul.f32 %v2758, %v2758
    %v2763 = vmul.f32 %v2760, %v2760
    %v2764 = vadd.f32 %v2762, %v2763
    %2765 = vadd.xlane.f32.xlu0 %v2764
    %v2766 = vpop.xlane.xlu0 %2765
    %v2767 = vadd.f32 %v2766, 1e-10
    %v2768 = vrsqrt.pop %v2767
    %v2769 = vmul.f32 %v2758, %v2768
    %v2770 = vmul.f32 %v2760, %v2768
    %v2773 = vcombine.low %v2769, %v2770
    %v2774 = vcombine.high %v2769, %v2770
    %v2776 = vunpack.c.l.s4 1983009808
    %v2777 = vunpack.c.0.s8 %v2776
    %v2778 = vlaneseq
    %v2779 = vshrl.u32 %v2778, 7
    %v2780 = vsub.s32 %v2777, %v2779
    %v2781 = vrot.slane %v2773, %v2780
    %v2783 = vunpack.c.l.s4 1983009808
    %v2784 = vunpack.c.0.s8 %v2783
    %v2785 = vlaneseq
    %v2786 = vshrl.u32 %v2785, 7
    %v2787 = vsub.s32 %v2784, %v2786
    %v2788 = vrot.slane %v2774, %v2787
    %v2789 = vcombine.high %v2781, %v2781
    %v2790 = vcombine.high %v2788, %v2788
    %2795 = vst [vmem:[#allocation2] sm:$0xf] %v2781
    %2796 = vst [vmem:[#allocation2 + $0x4] sm:$0xf] %v2789
    %2797 = vst [vmem:[#allocation2 + $0x8] sm:$0xf] %v2788
    %2798 = vst [vmem:[#allocation2 + $0xc] sm:$0xf] %v2790
    // Predicated region
    $region14: #{tpu_custom_call.1} parent=1 // pred_check
      _
    $region15: #{tpu_custom_call.1} parent=1 // pred_check_branch
      %2800 = sbr.rel (0) target = $region17
    $region16: #{tpu_custom_call.1} parent=1 // pred_region
      %s2802 = ssub.s32 256, 64
      %2803 = vsyncadd [#allocation3], %s2802
      %s2804 = sshll.u32 [#allocation2], 4
      %s2805 = int_to_ptr.vmem [resolvable:$true] %s2804
      %2810 = dma.vmem_to_hbm [thread:$0]  %s2805, 64, %s3, [#allocation3], 64, 64, 4
    $region17: #{tpu_custom_call.1} parent=1 // pred_fallthru
      _
    // Predicated region
    $region18: #{tpu_custom_call.1} parent=1 // pred_check
      _
    $region19: #{tpu_custom_call.1} parent=1 // pred_check_branch
      %2812 = sbr.rel (0) target = $region21
    $region20: #{tpu_custom_call.1} parent=1 // pred_region
      %2813 = dma.done [#allocation3], 256
    $region21: #{tpu_custom_call.1} parent=1 // pred_fallthru
      _
    %2814 = vsyncpa [#allocation3], 1

</llo_original>
